<compile_context>
chip_gen: v7x
topology: tpu7x:2x2x1
jax: 0.10.0
libtpu: 0.0.40
codegen_flags: <defaults>
</compile_context>

<pallas_src>
import functools

import numpy as np

import jax
import jax.numpy as jnp
from jax import lax
from jax.experimental import pallas as pl
from jax.experimental.pallas import tpu as pltpu

EPS = 1e-5


# ----------------------------------------------------------------------------
# Fused Bottleneck + CBAM kernel (B images per grid step)
# ----------------------------------------------------------------------------
def _bottleneck_kernel(x_ref, w_red_ref, b_red_ref, w_grp_ref, b_grp_ref,
                       w_exp_ref, b_exp_ref, w_sc_ref, b_sc_ref,
                       w1_ref, b1_ref, w2_ref, b2_ref, tsp_ref, sp_bn_ref,
                       o_ref,
                       sp_ref,
                       *, B, H, W, Hout, Wout, stride, Cout, has_shortcut):
    f32 = jnp.float32
    bf16 = jnp.bfloat16
    Cin_p = x_ref.shape[-1]
    Dp = w_red_ref.shape[-1]
    Cout_p = w_exp_ref.shape[-1]
    Hp2, Wp = x_ref.shape[1], x_ref.shape[2]
    HWo = Hout * Wout

    x = x_ref[...]                                    # (B, Hp2, Wp, Cin_p) bf16
    x2d = x.reshape(B * Hp2 * Wp, Cin_p)              # Wp % 8 == 0 -> trivial

    # --- conv_reduce (1x1) + folded BN + ReLU on the spatially padded grid ---
    t1 = jnp.dot(x2d, w_red_ref[...], preferred_element_type=f32)
    t1 = jnp.maximum(t1 + b_red_ref[...], 0.0)
    t1 = t1.reshape(B, Hp2, Wp, Dp)

    # Zero the spatial halo: padding of a 1x1 conv + BN bias + ReLU is not 0.
    hh = lax.broadcasted_iota(jnp.int32, (Hp2, Wp, Dp), 0)
    ww = lax.broadcasted_iota(jnp.int32, (Hp2, Wp, Dp), 1)
    interior = ((hh >= 1) & (hh <= H) & (ww >= 1) & (ww <= W)).astype(f32)
    t1 = (t1 * interior).astype(bf16)                 # (B, Hp2, Wp, Dp)

    # --- grouped 3x3 conv (+folded BN +ReLU): 9 accumulated matmuls ----------
    t2 = jnp.zeros((B * HWo, Dp), f32)
    for kh in range(3):
        for kw in range(3):
            patch = lax.slice(
                t1, (0, kh, kw, 0),
                (B, kh + (Hout - 1) * stride + 1,
                 kw + (Wout - 1) * stride + 1, Dp),
                (1, stride, stride, 1))               # (B, Hout, Wout, Dp)
            t2 = t2 + jnp.dot(patch.reshape(B * HWo, Dp),
                              w_grp_ref[kh * 3 + kw],
                              preferred_element_type=f32)
    t2 = jnp.maximum(t2 + b_grp_ref[...], 0.0)

    # --- conv_expand (1x1) + folded BN (no ReLU) ------------------------------
    t3 = jnp.dot(t2.astype(bf16), w_exp_ref[...],
                 preferred_element_type=f32) + b_exp_ref[...]
    t3 = t3.reshape(B, HWo, Cout_p)

    # --- CBAM ChannelGate: spatial avg & max pools -> shared MLP (batched) ---
    avg = jnp.sum(t3, axis=1) * (1.0 / HWo)           # (B, Cout_p), f32
    mx = jnp.max(t3, axis=1)                          # (B, Cout_p), f32

    def mlp(q):
        h = jnp.maximum(jnp.dot(q, w1_ref[...], preferred_element_type=f32)
                        + b1_ref[...], 0.0)
        return jnp.dot(h, w2_ref[...], preferred_element_type=f32) + b2_ref[...]

    att = mlp(avg) + mlp(mx)                          # (B, Cout_p)
    xg = t3 * jax.nn.sigmoid(att)[:, None, :]
    x3 = xg.reshape(B, Hout, Wout, Cout_p)

    # --- CBAM SpatialGate: channel max/mean -> 7x7 conv (Toeplitz) -> BN -----
    lane = lax.broadcasted_iota(jnp.int32, (1, Cout_p), 1)
    neg = jnp.where(lane < Cout, 0.0, -1e30).reshape(1, 1, 1, Cout_p)
    cmax = jnp.max(x3 + neg, axis=3)                  # (B, Hout, Wout), f32
    cmean = jnp.sum(x3, axis=3) * (1.0 / Cout)        # (B, Hout, Wout), f32

    # H-padded [max | mean] maps in a small scratch; W boundary handled by the
    # Toeplitz matrices.  Only the 6 halo rows are re-zeroed (interior is fully
    # overwritten every step).
    zhalo = jnp.zeros((B, 3, 2 * Wout), f32)
    sp_ref[:, pl.ds(0, 3), :] = zhalo
    sp_ref[:, pl.ds(Hout + 3, 3), :] = zhalo
    sp_ref[:, pl.ds(3, Hout), pl.ds(0, Wout)] = cmax
    sp_ref[:, pl.ds(3, Hout), pl.ds(Wout, Wout)] = cmean

    sacc = jnp.zeros((B * Hout, Wout), f32)
    for kh in range(7):
        lhs = sp_ref[:, pl.ds(kh, Hout), :].reshape(B * Hout, 2 * Wout)
        sacc = sacc + jnp.dot(lhs, tsp_ref[kh], preferred_element_type=f32)
    sconv = sacc * sp_bn_ref[0] + sp_bn_ref[1]        # folded 1-channel BN
    sscale = jax.nn.sigmoid(sconv).reshape(B, Hout, Wout)

    # --- shortcut (computed late to keep its live range short) ---------------
    if has_shortcut:
        xs = lax.slice(x, (0, 1, 1, 0),
                       (B, 1 + (Hout - 1) * stride + 1,
                        1 + (Wout - 1) * stride + 1, Cin_p),
                       (1, stride, stride, 1))        # (B, Hout, Wout, Cin_p)
        res = jnp.dot(xs.reshape(B * HWo, Cin_p), w_sc_ref[...],
                      preferred_element_type=f32) + b_sc_ref[...]
        res = res.reshape(B, Hout, Wout, Cout_p)
    else:
        # Identity shortcut (PyTorch only takes this path for Cin==Cout;
        # stride==1 is asserted host-side).
        res = lax.slice(x, (0, 1, 1, 0), (B, 1 + H, 1 + W, Cin_p)).astype(f32)

    out = x3 * sscale[..., None] + res
    o_ref[...] = jnp.maximum(out, 0.0).astype(o_ref.dtype)


# ----------------------------------------------------------------------------
# Host-side parameter folding / padding + pallas_call wrapper
# ----------------------------------------------------------------------------
def bn_fold(gamma, beta, mean, var):
    scale = gamma / jnp.sqrt(var + EPS)
    bias = beta - mean * scale
    return scale, bias


def _round_up(v, m):
    return ((v + m - 1) // m) * m


def _pad2(w, r, c):
    return jnp.pad(w, ((0, r - w.shape[0]), (0, c - w.shape[1])))


def _pad_bias(b, c):
    return jnp.pad(b, ((0, c - b.shape[0]),)).reshape(1, c).astype(jnp.float32)


def _pick_batch_block(N, HWo):
    # Smallest divisor of N that gives the MXU an M-dim of >= 256 rows.
    for b in range(1, N + 1):
        if N % b == 0 and b * HWo >= 256:
            return b
    return N


def bottleneck_pallas(x_nchw, p, *, Cin, Cout, D, stride, cardinality):
    N, _, H, W = x_nchw.shape
    Hout = (H + 2 - 3) // stride + 1
    Wout = (W + 2 - 3) // stride + 1
    Hp2 = H + 2
    Wp = _round_up(W + 2, 8)                 # sublane-aligned padded width

    Cin_p = _round_up(Cin, 128)
    Dp = _round_up(D, 128)
    Cout_p = _round_up(Cout, 128)
    Crp = _round_up(max(Cout // 16, 1), 128)

    has_shortcut = (Cin != Cout)
    if not has_shortcut:
        assert stride == 1, "identity shortcut requires stride == 1"
        assert Cin_p == Cout_p

    B = _pick_batch_block(N, Hout * Wout)

    # ---- fold BN into weights, pad each channel dim independently, cast bf16 -
    s, b = bn_fold(*p['bn_reduce'])
    w_red = _pad2(p['w_reduce'] * s[None, :], Cin_p, Dp).astype(jnp.bfloat16)
    b_red = _pad_bias(b, Dp)

    s, b = bn_fold(*p['bn_conv'])
    wd = p['w_conv_dense'] * s[None, None, None, :]                 # (3,3,D,D)
    wd = jnp.pad(wd, ((0, 0), (0, 0), (0, Dp - D), (0, Dp - D)))
    w_grp = wd.reshape(9, Dp, Dp).astype(jnp.bfloat16)              # per-tap
    b_grp = _pad_bias(b, Dp)

    s, b = bn_fold(*p['bn_expand'])
    w_exp = _pad2(p['w_expand'] * s[None, :], Dp, Cout_p).astype(jnp.bfloat16)
    b_exp = _pad_bias(b, Cout_p)

    if has_shortcut:
        s, b = bn_fold(*p['bn_sc'])
        w_sc = _pad2(p['w_sc'] * s[None, :], Cin_p, Cout_p).astype(jnp.bfloat16)
        b_sc = _pad_bias(b, Cout_p)
    else:
        w_sc = jnp.zeros((Cin_p, Cout_p), jnp.bfloat16)
        b_sc = jnp.zeros((1, Cout_p), jnp.float32)

    # Channel-gate MLP kept in f32 (tiny; preserves gate precision).
    w1 = _pad2(p['w1'], Cout_p, Crp).astype(jnp.float32)
    b1 = _pad_bias(p['b1'], Crp)
    w2 = _pad2(p['w2'], Crp, Cout_p).astype(jnp.float32)
    b2 = _pad_bias(p['b2'], Cout_p)

    # Toeplitz matrices for the 7x7 spatial conv along W, with the max/mean
    # channels stacked along K:  tsp[kh, wi, wo]        = w_sp[kh, wi-wo+3, max]
    #                            tsp[kh, Wout+wi, wo]   = w_sp[kh, wi-wo+3, mean]
    w_sp = np.asarray(p['w_sp'])                                    # (7,7,2)
    tsp_np = np.zeros((7, 2 * Wout, Wout), np.float32)
    for kh in range(7):
        for wi in range(Wout):
            for wo in range(Wout):
                kw = wi - wo + 3
                if 0 <= kw < 7:
                    tsp_np[kh, wi, wo] = w_sp[kh, kw, 0]
                    tsp_np[kh, Wout + wi, wo] = w_sp[kh, kw, 1]
    tsp = jnp.asarray(tsp_np)

    s_sp, b_sp = bn_fold(*p['bn_sp'])
    sp_bn = jnp.concatenate([s_sp.reshape(1), b_sp.reshape(1)]).astype(jnp.float32)

    # NCHW -> NHWC, spatial zero-pad (1 top/left, Wp-W-1 right, 1 bottom),
    # lane-pad channels, cast to bf16.
    x = jnp.transpose(x_nchw, (0, 2, 3, 1))
    x = jnp.pad(x, ((0, 0), (1, 1), (1, Wp - W - 1), (0, Cin_p - Cin)))
    x = x.astype(jnp.bfloat16)

    kernel = functools.partial(
        _bottleneck_kernel, B=B, H=H, W=W, Hout=Hout, Wout=Wout, stride=stride,
        Cout=Cout, has_shortcut=has_shortcut)

    out_p = pl.pallas_call(
        kernel,
        grid=(N // B,),
        in_specs=[
            pl.BlockSpec((B, Hp2, Wp, Cin_p), lambda n: (n, 0, 0, 0)),  # x
            pl.BlockSpec((Cin_p, Dp), lambda n: (0, 0)),                # w_red
            pl.BlockSpec((1, Dp), lambda n: (0, 0)),                    # b_red
            pl.BlockSpec((9, Dp, Dp), lambda n: (0, 0, 0)),             # w_grp
            pl.BlockSpec((1, Dp), lambda n: (0, 0)),                    # b_grp
            pl.BlockSpec((Dp, Cout_p), lambda n: (0, 0)),               # w_exp
            pl.BlockSpec((1, Cout_p), lambda n: (0, 0)),                # b_exp
            pl.BlockSpec((Cin_p, Cout_p), lambda n: (0, 0)),            # w_sc
            pl.BlockSpec((1, Cout_p), lambda n: (0, 0)),                # b_sc
            pl.BlockSpec((Cout_p, Crp), lambda n: (0, 0)),              # w1
            pl.BlockSpec((1, Crp), lambda n: (0, 0)),                   # b1
            pl.BlockSpec((Crp, Cout_p), lambda n: (0, 0)),              # w2
            pl.BlockSpec((1, Cout_p), lambda n: (0, 0)),                # b2
            pl.BlockSpec((7, 2 * Wout, Wout), lambda n: (0, 0, 0)),     # tsp
            pl.BlockSpec(memory_space=pltpu.MemorySpace.SMEM),          # sp_bn
        ],
        out_specs=pl.BlockSpec((B, Hout, Wout, Cout_p), lambda n: (n, 0, 0, 0)),
        out_shape=jax.ShapeDtypeStruct((N, Hout, Wout, Cout_p), jnp.float32),
        scratch_shapes=[
            pltpu.VMEM((B, Hout + 6, 2 * Wout), jnp.float32),  # spatial-gate maps
        ],
        compiler_params=pltpu.CompilerParams(dimension_semantics=("parallel",)),
    )(x, w_red, b_red, w_grp, b_grp, w_exp, b_exp, w_sc, b_sc,
      w1, b1, w2, b2, tsp, sp_bn)

    out = out_p[..., :Cout]                              # drop lane padding
    return jnp.transpose(out, (0, 3, 1, 2))              # NHWC -> NCHW


# ----------------------------------------------------------------------------
# Parameter construction (deterministic, synthetic)
# ----------------------------------------------------------------------------
def make_params(key, Cin, Cout, D, cardinality):
    ks = jax.random.split(key, 32)
    it = iter(ks)

    def nrm(shape, s=0.1):
        return jax.random.normal(next(it), shape, jnp.float32) * s

    def bn_params(C):
        return (jax.random.uniform(next(it), (C,), jnp.float32, 0.5, 1.5),  # gamma
                nrm((C,)),                                                  # beta
                nrm((C,)),                                                  # running_mean
                jax.random.uniform(next(it), (C,), jnp.float32, 0.5, 1.5))  # running_var

    Cg = D // cardinality
    Cr = Cout // 16
    p = {}
    p['w_reduce'] = nrm((Cin, D))
    p['bn_reduce'] = bn_params(D)

    w_grp = nrm((D, Cg, 3, 3))                       # torch layout (O, I/groups, kh, kw)
    p['w_conv_hwio'] = jnp.transpose(w_grp, (2, 3, 1, 0))     # (3,3,Cg,D) reference
    w_dense = jnp.zeros((3, 3, D, D), jnp.float32)            # block-diagonal expansion
    for g in range(cardinality):
        blk = jnp.transpose(w_grp[g * Cg:(g + 1) * Cg], (2, 3, 1, 0))  # (3,3,Cg,Cg)
        w_dense = w_dense.at[:, :, g * Cg:(g + 1) * Cg, g * Cg:(g + 1) * Cg].set(blk)
    p['w_conv_dense'] = w_dense
    p['bn_conv'] = bn_params(D)

    p['w_expand'] = nrm((D, Cout))
    p['bn_expand'] = bn_params(Cout)

    p['w_sc'] = nrm((Cin, Cout))
    p['bn_sc'] = bn_params(Cout)

    p['w1'] = nrm((Cout, Cr))
    p['b1'] = nrm((Cr,))
    p['w2'] = nrm((Cr, Cout))
    p['b2'] = nrm((Cout,))

    p['w_sp'] = nrm((7, 7, 2))
    p['bn_sp'] = bn_params(1)
    return p


# ----------------------------------------------------------------------------
# Pure-JAX reference (NHWC lax convs) for numerical verification
# ----------------------------------------------------------------------------
def bottleneck_reference(x_nchw, p, *, Cin, Cout, D, stride, cardinality):
    dn = ('NHWC', 'HWIO', 'NHWC')

    def bn(y, g, b, m, v):
        return (y - m) / jnp.sqrt(v + EPS) * g + b

    x = jnp.transpose(x_nchw, (0, 2, 3, 1))
    out = lax.conv_general_dilated(x, p['w_reduce'].reshape(1, 1, Cin, D),
                                   (1, 1), 'VALID', dimension_numbers=dn)
    out = jax.nn.relu(bn(out, *p['bn_reduce']))
    out = lax.conv_general_dilated(out, p['w_conv_hwio'], (stride, stride),
                                   ((1, 1), (1, 1)), dimension_numbers=dn,
                                   feature_group_count=cardinality)
    out = jax.nn.relu(bn(out, *p['bn_conv']))
    out = lax.conv_general_dilated(out, p['w_expand'].reshape(1, 1, D, Cout),
                                   (1, 1), 'VALID', dimension_numbers=dn)
    out = bn(out, *p['bn_expand'])

    if Cin != Cout:
        res = lax.conv_general_dilated(x, p['w_sc'].reshape(1, 1, Cin, Cout),
                                       (stride, stride), 'VALID', dimension_numbers=dn)
        res = bn(res, *p['bn_sc'])
    else:
        res = x

    avg = jnp.mean(out, axis=(1, 2))
    mx = jnp.max(out, axis=(1, 2))

    def mlp(q):
        return jnp.maximum(q @ p['w1'] + p['b1'], 0.0) @ p['w2'] + p['b2']

    scale_c = jax.nn.sigmoid(mlp(avg) + mlp(mx))
    out = out * scale_c[:, None, None, :]

    comp = jnp.stack([jnp.max(out, axis=3), jnp.mean(out, axis=3)], axis=-1)
    sconv = lax.conv_general_dilated(comp, p['w_sp'][..., None], (1, 1),
                                     ((3, 3), (3, 3)), dimension_numbers=dn)
    sconv = bn(sconv, *p['bn_sp'])
    out = out * jax.nn.sigmoid(sconv) + res
    out = jnp.maximum(out, 0.0)
    return jnp.transpose(out, (0, 3, 1, 2))


if __name__ == "__main__":
    # Bottleneck(in_channels=16, out_channels=32, stride=1, cardinality=4,
    #            base_width=8, expansion=1)
    N, Cin, H, W = 2, 16, 8, 8
    Cout, stride, cardinality, base_width, expansion = 32, 1, 4, 8, 1
    width_ratio = Cout / (expansion * 64.0)
    D = cardinality * int(base_width * width_ratio)      # = 16

    root = jax.random.PRNGKey(0)
    k_params, k_x = jax.random.split(root)
    params = make_params(k_params, Cin, Cout, D, cardinality)
    x_nchw = jax.random.normal(k_x, (N, Cin, H, W), jnp.float32)

    out = bottleneck_pallas(x_nchw, params, Cin=Cin, Cout=Cout, D=D,
                            stride=stride, cardinality=cardinality)
    out = jax.block_until_ready(out)

    ref = bottleneck_reference(x_nchw, params, Cin=Cin, Cout=Cout, D=D,
                               stride=stride, cardinality=cardinality)

    assert out.shape == (N, Cout, H, W), out.shape
    # bf16 MXU operands (f32 accumulation) -> slightly looser tolerance.
    if not jnp.allclose(out, ref, atol=3e-2, rtol=3e-2):
        raise AssertionError(
            f"mismatch: max abs err {float(jnp.max(jnp.abs(out - ref)))}")
    print("KERNEL_OK")
</pallas_src>

<mosaic_0001>
module attributes {stable_mosaic.version = 11 : i64} {
  func.func @_bottleneck_kernel(%arg0: i32, %arg1: memref<2x10x16x128xbf16, #tpu.memory_space<vmem>>, %arg2: memref<128x128xbf16, #tpu.memory_space<vmem>>, %arg3: memref<1x128xf32, #tpu.memory_space<vmem>>, %arg4: memref<9x128x128xbf16, #tpu.memory_space<vmem>>, %arg5: memref<1x128xf32, #tpu.memory_space<vmem>>, %arg6: memref<128x128xbf16, #tpu.memory_space<vmem>>, %arg7: memref<1x128xf32, #tpu.memory_space<vmem>>, %arg8: memref<128x128xbf16, #tpu.memory_space<vmem>>, %arg9: memref<1x128xf32, #tpu.memory_space<vmem>>, %arg10: memref<128x128xf32, #tpu.memory_space<vmem>>, %arg11: memref<1x128xf32, #tpu.memory_space<vmem>>, %arg12: memref<128x128xf32, #tpu.memory_space<vmem>>, %arg13: memref<1x128xf32, #tpu.memory_space<vmem>>, %arg14: memref<7x16x8xf32, #tpu.memory_space<vmem>>, %arg15: memref<2xf32, #tpu.memory_space<smem>>, %arg16: memref<2x8x8x128xf32, #tpu.memory_space<vmem>>, %arg17: memref<2x14x16xf32, #tpu.memory_space<vmem>>) attributes {dimension_semantics = [#tpu.dimension_semantics<parallel>], iteration_bounds = array<i64: 1>, scalar_prefetch = 0 : i64, scratch_operands = 1 : i64, tpu.core_type = #tpu.core_type<tc>, window_params = [{transform_indices = @transform_0, window_bounds = array<i64: 2, 10, 16, 128>}, {pipeline_mode = #tpu.pipeline_mode<synchronous>, transform_indices = @transform_1, window_bounds = array<i64: 128, 128>}, {pipeline_mode = #tpu.pipeline_mode<synchronous>, transform_indices = @transform_2, window_bounds = array<i64: 1, 128>}, {pipeline_mode = #tpu.pipeline_mode<synchronous>, transform_indices = @transform_3, window_bounds = array<i64: 9, 128, 128>}, {pipeline_mode = #tpu.pipeline_mode<synchronous>, transform_indices = @transform_4, window_bounds = array<i64: 1, 128>}, {pipeline_mode = #tpu.pipeline_mode<synchronous>, transform_indices = @transform_5, window_bounds = array<i64: 128, 128>}, {pipeline_mode = #tpu.pipeline_mode<synchronous>, transform_indices = @transform_6, window_bounds = array<i64: 1, 128>}, {pipeline_mode = #tpu.pipeline_mode<synchronous>, transform_indices = @transform_7, window_bounds = array<i64: 128, 128>}, {pipeline_mode = #tpu.pipeline_mode<synchronous>, transform_indices = @transform_8, window_bounds = array<i64: 1, 128>}, {pipeline_mode = #tpu.pipeline_mode<synchronous>, transform_indices = @transform_9, window_bounds = array<i64: 128, 128>}, {pipeline_mode = #tpu.pipeline_mode<synchronous>, transform_indices = @transform_10, window_bounds = array<i64: 1, 128>}, {pipeline_mode = #tpu.pipeline_mode<synchronous>, transform_indices = @transform_11, window_bounds = array<i64: 128, 128>}, {pipeline_mode = #tpu.pipeline_mode<synchronous>, transform_indices = @transform_12, window_bounds = array<i64: 1, 128>}, {pipeline_mode = #tpu.pipeline_mode<synchronous>, transform_indices = @transform_13, window_bounds = array<i64: 7, 16, 8>}, {transform_indices = @transform_14, window_bounds = array<i64: 2>}, {transform_indices = @transform_15, window_bounds = array<i64: 2, 8, 8, 128>}]} {
    %c0 = arith.constant 0 : index
    %c0_0 = arith.constant 0 : index
    %c0_1 = arith.constant 0 : index
    %c0_2 = arith.constant 0 : index
    %0 = vector.load %arg1[%c0, %c0_0, %c0_1, %c0_2] : memref<2x10x16x128xbf16, #tpu.memory_space<vmem>>, vector<2x10x16x128xbf16>
    %1 = vector.shape_cast %0 : vector<2x10x16x128xbf16> to vector<320x128xbf16>
    %c0_3 = arith.constant 0 : index
    %c0_4 = arith.constant 0 : index
    %2 = vector.load %arg2[%c0_3, %c0_4] : memref<128x128xbf16, #tpu.memory_space<vmem>>, vector<128x128xbf16>
    %cst = arith.constant dense<0.000000e+00> : vector<320x128xf32>
    %3 = tpu.matmul %1, %2, %cst {dimension_numbers = #tpu.dot_dimension_numbers<[1], [0], [0], [1], [0, 0, 1, 1], [], []>} : vector<320x128xbf16>, vector<128x128xbf16>, vector<320x128xf32> -> vector<320x128xf32>
    %c0_5 = arith.constant 0 : index
    %c0_6 = arith.constant 0 : index
    %4 = vector.load %arg3[%c0_5, %c0_6] : memref<1x128xf32, #tpu.memory_space<vmem>>, vector<1x128xf32>
    %5 = vector.broadcast %4 : vector<1x128xf32> to vector<320x128xf32>
    %6 = arith.addf %3, %5 : vector<320x128xf32>
    %cst_7 = arith.constant 0.000000e+00 : f32
    %7 = vector.broadcast %cst_7 : f32 to vector<320x128xf32>
    %8 = arith.maximumf %6, %7 : vector<320x128xf32>
    %9 = vector.shape_cast %8 : vector<320x128xf32> to vector<2x10x16x128xf32>
    %10 = tpu.iota {dimensions = array<i32: 0>} : vector<10x16x128xi32>
    %11 = tpu.iota {dimensions = array<i32: 1>} : vector<10x16x128xi32>
    %c1_i32 = arith.constant 1 : i32
    %12 = vector.broadcast %c1_i32 : i32 to vector<10x16x128xi32>
    %13 = arith.cmpi sge, %10, %12 : vector<10x16x128xi32>
    %c8_i32 = arith.constant 8 : i32
    %14 = vector.broadcast %c8_i32 : i32 to vector<10x16x128xi32>
    %15 = arith.cmpi sle, %10, %14 : vector<10x16x128xi32>
    %16 = arith.andi %13, %15 : vector<10x16x128xi1>
    %c1_i32_8 = arith.constant 1 : i32
    %17 = vector.broadcast %c1_i32_8 : i32 to vector<10x16x128xi32>
    %18 = arith.cmpi sge, %11, %17 : vector<10x16x128xi32>
    %19 = arith.andi %16, %18 : vector<10x16x128xi1>
    %c8_i32_9 = arith.constant 8 : i32
    %20 = vector.broadcast %c8_i32_9 : i32 to vector<10x16x128xi32>
    %21 = arith.cmpi sle, %11, %20 : vector<10x16x128xi32>
    %22 = arith.andi %19, %21 : vector<10x16x128xi1>
    %23 = arith.extui %22 : vector<10x16x128xi1> to vector<10x16x128xi32>
    %24 = arith.sitofp %23 : vector<10x16x128xi32> to vector<10x16x128xf32>
    %25 = vector.shape_cast %24 : vector<10x16x128xf32> to vector<1x10x16x128xf32>
    %26 = vector.broadcast %25 : vector<1x10x16x128xf32> to vector<2x10x16x128xf32>
    %27 = arith.mulf %9, %26 : vector<2x10x16x128xf32>
    %28 = arith.truncf %27 : vector<2x10x16x128xf32> to vector<2x10x16x128xbf16>
    %cst_10 = arith.constant 0.000000e+00 : f32
    %29 = vector.broadcast %cst_10 : f32 to vector<128x128xf32>
    %30 = vector.extract_strided_slice %28 {offsets = [0, 0, 0, 0], sizes = [2, 8, 8, 128], strides = [1, 1, 1, 1]} : vector<2x10x16x128xbf16> to vector<2x8x8x128xbf16>
    %31 = vector.shape_cast %30 : vector<2x8x8x128xbf16> to vector<128x128xbf16>
    %c0_11 = arith.constant 0 : index
    %c0_12 = arith.constant 0 : index
    %c0_13 = arith.constant 0 : index
    %32 = vector.load %arg4[%c0_11, %c0_12, %c0_13] : memref<9x128x128xbf16, #tpu.memory_space<vmem>>, vector<1x128x128xbf16>
    %33 = vector.shape_cast %32 : vector<1x128x128xbf16> to vector<128x128xbf16>
    %cst_14 = arith.constant dense<0.000000e+00> : vector<128x128xf32>
    %34 = tpu.matmul %31, %33, %cst_14 {dimension_numbers = #tpu.dot_dimension_numbers<[1], [0], [0], [1], [0, 0, 1, 1], [], []>} : vector<128x128xbf16>, vector<128x128xbf16>, vector<128x128xf32> -> vector<128x128xf32>
    %35 = arith.addf %29, %34 : vector<128x128xf32>
    %36 = vector.extract_strided_slice %28 {offsets = [0, 0, 1, 0], sizes = [2, 8, 8, 128], strides = [1, 1, 1, 1]} : vector<2x10x16x128xbf16> to vector<2x8x8x128xbf16>
    %37 = vector.shape_cast %36 : vector<2x8x8x128xbf16> to vector<128x128xbf16>
    %c1 = arith.constant 1 : index
    %c0_15 = arith.constant 0 : index
    %c0_16 = arith.constant 0 : index
    %38 = vector.load %arg4[%c1, %c0_15, %c0_16] : memref<9x128x128xbf16, #tpu.memory_space<vmem>>, vector<1x128x128xbf16>
    %39 = vector.shape_cast %38 : vector<1x128x128xbf16> to vector<128x128xbf16>
    %cst_17 = arith.constant dense<0.000000e+00> : vector<128x128xf32>
    %40 = tpu.matmul %37, %39, %cst_17 {dimension_numbers = #tpu.dot_dimension_numbers<[1], [0], [0], [1], [0, 0, 1, 1], [], []>} : vector<128x128xbf16>, vector<128x128xbf16>, vector<128x128xf32> -> vector<128x128xf32>
    %41 = arith.addf %35, %40 : vector<128x128xf32>
    %42 = vector.extract_strided_slice %28 {offsets = [0, 0, 2, 0], sizes = [2, 8, 8, 128], strides = [1, 1, 1, 1]} : vector<2x10x16x128xbf16> to vector<2x8x8x128xbf16>
    %43 = vector.shape_cast %42 : vector<2x8x8x128xbf16> to vector<128x128xbf16>
    %c2 = arith.constant 2 : index
    %c0_18 = arith.constant 0 : index
    %c0_19 = arith.constant 0 : index
    %44 = vector.load %arg4[%c2, %c0_18, %c0_19] : memref<9x128x128xbf16, #tpu.memory_space<vmem>>, vector<1x128x128xbf16>
    %45 = vector.shape_cast %44 : vector<1x128x128xbf16> to vector<128x128xbf16>
    %cst_20 = arith.constant dense<0.000000e+00> : vector<128x128xf32>
    %46 = tpu.matmul %43, %45, %cst_20 {dimension_numbers = #tpu.dot_dimension_numbers<[1], [0], [0], [1], [0, 0, 1, 1], [], []>} : vector<128x128xbf16>, vector<128x128xbf16>, vector<128x128xf32> -> vector<128x128xf32>
    %47 = arith.addf %41, %46 : vector<128x128xf32>
    %48 = vector.extract_strided_slice %28 {offsets = [0, 1, 0, 0], sizes = [2, 8, 8, 128], strides = [1, 1, 1, 1]} : vector<2x10x16x128xbf16> to vector<2x8x8x128xbf16>
    %49 = vector.shape_cast %48 : vector<2x8x8x128xbf16> to vector<128x128xbf16>
    %c3 = arith.constant 3 : index
    %c0_21 = arith.constant 0 : index
    %c0_22 = arith.constant 0 : index
    %50 = vector.load %arg4[%c3, %c0_21, %c0_22] : memref<9x128x128xbf16, #tpu.memory_space<vmem>>, vector<1x128x128xbf16>
    %51 = vector.shape_cast %50 : vector<1x128x128xbf16> to vector<128x128xbf16>
    %cst_23 = arith.constant dense<0.000000e+00> : vector<128x128xf32>
    %52 = tpu.matmul %49, %51, %cst_23 {dimension_numbers = #tpu.dot_dimension_numbers<[1], [0], [0], [1], [0, 0, 1, 1], [], []>} : vector<128x128xbf16>, vector<128x128xbf16>, vector<128x128xf32> -> vector<128x128xf32>
    %53 = arith.addf %47, %52 : vector<128x128xf32>
    %54 = vector.extract_strided_slice %28 {offsets = [0, 1, 1, 0], sizes = [2, 8, 8, 128], strides = [1, 1, 1, 1]} : vector<2x10x16x128xbf16> to vector<2x8x8x128xbf16>
    %55 = vector.shape_cast %54 : vector<2x8x8x128xbf16> to vector<128x128xbf16>
    %c4 = arith.constant 4 : index
    %c0_24 = arith.constant 0 : index
    %c0_25 = arith.constant 0 : index
    %56 = vector.load %arg4[%c4, %c0_24, %c0_25] : memref<9x128x128xbf16, #tpu.memory_space<vmem>>, vector<1x128x128xbf16>
    %57 = vector.shape_cast %56 : vector<1x128x128xbf16> to vector<128x128xbf16>
    %cst_26 = arith.constant dense<0.000000e+00> : vector<128x128xf32>
    %58 = tpu.matmul %55, %57, %cst_26 {dimension_numbers = #tpu.dot_dimension_numbers<[1], [0], [0], [1], [0, 0, 1, 1], [], []>} : vector<128x128xbf16>, vector<128x128xbf16>, vector<128x128xf32> -> vector<128x128xf32>
    %59 = arith.addf %53, %58 : vector<128x128xf32>
    %60 = vector.extract_strided_slice %28 {offsets = [0, 1, 2, 0], sizes = [2, 8, 8, 128], strides = [1, 1, 1, 1]} : vector<2x10x16x128xbf16> to vector<2x8x8x128xbf16>
    %61 = vector.shape_cast %60 : vector<2x8x8x128xbf16> to vector<128x128xbf16>
    %c5 = arith.constant 5 : index
    %c0_27 = arith.constant 0 : index
    %c0_28 = arith.constant 0 : index
    %62 = vector.load %arg4[%c5, %c0_27, %c0_28] : memref<9x128x128xbf16, #tpu.memory_space<vmem>>, vector<1x128x128xbf16>
    %63 = vector.shape_cast %62 : vector<1x128x128xbf16> to vector<128x128xbf16>
    %cst_29 = arith.constant dense<0.000000e+00> : vector<128x128xf32>
    %64 = tpu.matmul %61, %63, %cst_29 {dimension_numbers = #tpu.dot_dimension_numbers<[1], [0], [0], [1], [0, 0, 1, 1], [], []>} : vector<128x128xbf16>, vector<128x128xbf16>, vector<128x128xf32> -> vector<128x128xf32>
    %65 = arith.addf %59, %64 : vector<128x128xf32>
    %66 = vector.extract_strided_slice %28 {offsets = [0, 2, 0, 0], sizes = [2, 8, 8, 128], strides = [1, 1, 1, 1]} : vector<2x10x16x128xbf16> to vector<2x8x8x128xbf16>
    %67 = vector.shape_cast %66 : vector<2x8x8x128xbf16> to vector<128x128xbf16>
    %c6 = arith.constant 6 : index
    %c0_30 = arith.constant 0 : index
    %c0_31 = arith.constant 0 : index
    %68 = vector.load %arg4[%c6, %c0_30, %c0_31] : memref<9x128x128xbf16, #tpu.memory_space<vmem>>, vector<1x128x128xbf16>
    %69 = vector.shape_cast %68 : vector<1x128x128xbf16> to vector<128x128xbf16>
    %cst_32 = arith.constant dense<0.000000e+00> : vector<128x128xf32>
    %70 = tpu.matmul %67, %69, %cst_32 {dimension_numbers = #tpu.dot_dimension_numbers<[1], [0], [0], [1], [0, 0, 1, 1], [], []>} : vector<128x128xbf16>, vector<128x128xbf16>, vector<128x128xf32> -> vector<128x128xf32>
    %71 = arith.addf %65, %70 : vector<128x128xf32>
    %72 = vector.extract_strided_slice %28 {offsets = [0, 2, 1, 0], sizes = [2, 8, 8, 128], strides = [1, 1, 1, 1]} : vector<2x10x16x128xbf16> to vector<2x8x8x128xbf16>
    %73 = vector.shape_cast %72 : vector<2x8x8x128xbf16> to vector<128x128xbf16>
    %c7 = arith.constant 7 : index
    %c0_33 = arith.constant 0 : index
    %c0_34 = arith.constant 0 : index
    %74 = vector.load %arg4[%c7, %c0_33, %c0_34] : memref<9x128x128xbf16, #tpu.memory_space<vmem>>, vector<1x128x128xbf16>
    %75 = vector.shape_cast %74 : vector<1x128x128xbf16> to vector<128x128xbf16>
    %cst_35 = arith.constant dense<0.000000e+00> : vector<128x128xf32>
    %76 = tpu.matmul %73, %75, %cst_35 {dimension_numbers = #tpu.dot_dimension_numbers<[1], [0], [0], [1], [0, 0, 1, 1], [], []>} : vector<128x128xbf16>, vector<128x128xbf16>, vector<128x128xf32> -> vector<128x128xf32>
    %77 = arith.addf %71, %76 : vector<128x128xf32>
    %78 = vector.extract_strided_slice %28 {offsets = [0, 2, 2, 0], sizes = [2, 8, 8, 128], strides = [1, 1, 1, 1]} : vector<2x10x16x128xbf16> to vector<2x8x8x128xbf16>
    %79 = vector.shape_cast %78 : vector<2x8x8x128xbf16> to vector<128x128xbf16>
    %c8 = arith.constant 8 : index
    %c0_36 = arith.constant 0 : index
    %c0_37 = arith.constant 0 : index
    %80 = vector.load %arg4[%c8, %c0_36, %c0_37] : memref<9x128x128xbf16, #tpu.memory_space<vmem>>, vector<1x128x128xbf16>
    %81 = vector.shape_cast %80 : vector<1x128x128xbf16> to vector<128x128xbf16>
    %cst_38 = arith.constant dense<0.000000e+00> : vector<128x128xf32>
    %82 = tpu.matmul %79, %81, %cst_38 {dimension_numbers = #tpu.dot_dimension_numbers<[1], [0], [0], [1], [0, 0, 1, 1], [], []>} : vector<128x128xbf16>, vector<128x128xbf16>, vector<128x128xf32> -> vector<128x128xf32>
    %83 = arith.addf %77, %82 : vector<128x128xf32>
    %c0_39 = arith.constant 0 : index
    %c0_40 = arith.constant 0 : index
    %84 = vector.load %arg5[%c0_39, %c0_40] : memref<1x128xf32, #tpu.memory_space<vmem>>, vector<1x128xf32>
    %85 = vector.broadcast %84 : vector<1x128xf32> to vector<128x128xf32>
    %86 = arith.addf %83, %85 : vector<128x128xf32>
    %cst_41 = arith.constant 0.000000e+00 : f32
    %87 = vector.broadcast %cst_41 : f32 to vector<128x128xf32>
    %88 = arith.maximumf %86, %87 : vector<128x128xf32>
    %89 = arith.truncf %88 : vector<128x128xf32> to vector<128x128xbf16>
    %c0_42 = arith.constant 0 : index
    %c0_43 = arith.constant 0 : index
    %90 = vector.load %arg6[%c0_42, %c0_43] : memref<128x128xbf16, #tpu.memory_space<vmem>>, vector<128x128xbf16>
    %cst_44 = arith.constant dense<0.000000e+00> : vector<128x128xf32>
    %91 = tpu.matmul %89, %90, %cst_44 {dimension_numbers = #tpu.dot_dimension_numbers<[1], [0], [0], [1], [0, 0, 1, 1], [], []>} : vector<128x128xbf16>, vector<128x128xbf16>, vector<128x128xf32> -> vector<128x128xf32>
    %c0_45 = arith.constant 0 : index
    %c0_46 = arith.constant 0 : index
    %92 = vector.load %arg7[%c0_45, %c0_46] : memref<1x128xf32, #tpu.memory_space<vmem>>, vector<1x128xf32>
    %93 = vector.broadcast %92 : vector<1x128xf32> to vector<128x128xf32>
    %94 = arith.addf %91, %93 : vector<128x128xf32>
    %95 = vector.shape_cast %94 : vector<128x128xf32> to vector<2x64x128xf32>
    %cst_47 = arith.constant dense<0.000000e+00> : vector<2x128xf32>
    %96 = vector.multi_reduction <add>, %95, %cst_47 [1] : vector<2x64x128xf32> to vector<2x128xf32>
    %cst_48 = arith.constant 1.562500e-02 : f32
    %97 = vector.broadcast %cst_48 : f32 to vector<2x128xf32>
    %98 = arith.mulf %96, %97 : vector<2x128xf32>
    %cst_49 = arith.constant dense<0xFF800000> : vector<2x128xf32>
    %99 = vector.multi_reduction <maximumf>, %95, %cst_49 [1] : vector<2x64x128xf32> to vector<2x128xf32>
    %c0_50 = arith.constant 0 : index
    %c0_51 = arith.constant 0 : index
    %100 = vector.load %arg10[%c0_50, %c0_51] : memref<128x128xf32, #tpu.memory_space<vmem>>, vector<128x128xf32>
    %cst_52 = arith.constant dense<0.000000e+00> : vector<2x128xf32>
    %101 = tpu.matmul %98, %100, %cst_52 {dimension_numbers = #tpu.dot_dimension_numbers<[1], [0], [0], [1], [0, 0, 1, 1], [], []>} : vector<2x128xf32>, vector<128x128xf32>, vector<2x128xf32> -> vector<2x128xf32>
    %c0_53 = arith.constant 0 : index
    %c0_54 = arith.constant 0 : index
    %102 = vector.load %arg11[%c0_53, %c0_54] : memref<1x128xf32, #tpu.memory_space<vmem>>, vector<1x128xf32>
    %103 = vector.broadcast %102 : vector<1x128xf32> to vector<2x128xf32>
    %104 = arith.addf %101, %103 : vector<2x128xf32>
    %cst_55 = arith.constant 0.000000e+00 : f32
    %105 = vector.broadcast %cst_55 : f32 to vector<2x128xf32>
    %106 = arith.maximumf %104, %105 : vector<2x128xf32>
    %c0_56 = arith.constant 0 : index
    %c0_57 = arith.constant 0 : index
    %107 = vector.load %arg12[%c0_56, %c0_57] : memref<128x128xf32, #tpu.memory_space<vmem>>, vector<128x128xf32>
    %cst_58 = arith.constant dense<0.000000e+00> : vector<2x128xf32>
    %108 = tpu.matmul %106, %107, %cst_58 {dimension_numbers = #tpu.dot_dimension_numbers<[1], [0], [0], [1], [0, 0, 1, 1], [], []>} : vector<2x128xf32>, vector<128x128xf32>, vector<2x128xf32> -> vector<2x128xf32>
    %c0_59 = arith.constant 0 : index
    %c0_60 = arith.constant 0 : index
    %109 = vector.load %arg13[%c0_59, %c0_60] : memref<1x128xf32, #tpu.memory_space<vmem>>, vector<1x128xf32>
    %110 = vector.broadcast %109 : vector<1x128xf32> to vector<2x128xf32>
    %111 = arith.addf %108, %110 : vector<2x128xf32>
    %c0_61 = arith.constant 0 : index
    %c0_62 = arith.constant 0 : index
    %112 = vector.load %arg10[%c0_61, %c0_62] : memref<128x128xf32, #tpu.memory_space<vmem>>, vector<128x128xf32>
    %cst_63 = arith.constant dense<0.000000e+00> : vector<2x128xf32>
    %113 = tpu.matmul %99, %112, %cst_63 {dimension_numbers = #tpu.dot_dimension_numbers<[1], [0], [0], [1], [0, 0, 1, 1], [], []>} : vector<2x128xf32>, vector<128x128xf32>, vector<2x128xf32> -> vector<2x128xf32>
    %c0_64 = arith.constant 0 : index
    %c0_65 = arith.constant 0 : index
    %114 = vector.load %arg11[%c0_64, %c0_65] : memref<1x128xf32, #tpu.memory_space<vmem>>, vector<1x128xf32>
    %115 = vector.broadcast %114 : vector<1x128xf32> to vector<2x128xf32>
    %116 = arith.addf %113, %115 : vector<2x128xf32>
    %cst_66 = arith.constant 0.000000e+00 : f32
    %117 = vector.broadcast %cst_66 : f32 to vector<2x128xf32>
    %118 = arith.maximumf %116, %117 : vector<2x128xf32>
    %c0_67 = arith.constant 0 : index
    %c0_68 = arith.constant 0 : index
    %119 = vector.load %arg12[%c0_67, %c0_68] : memref<128x128xf32, #tpu.memory_space<vmem>>, vector<128x128xf32>
    %cst_69 = arith.constant dense<0.000000e+00> : vector<2x128xf32>
    %120 = tpu.matmul %118, %119, %cst_69 {dimension_numbers = #tpu.dot_dimension_numbers<[1], [0], [0], [1], [0, 0, 1, 1], [], []>} : vector<2x128xf32>, vector<128x128xf32>, vector<2x128xf32> -> vector<2x128xf32>
    %c0_70 = arith.constant 0 : index
    %c0_71 = arith.constant 0 : index
    %121 = vector.load %arg13[%c0_70, %c0_71] : memref<1x128xf32, #tpu.memory_space<vmem>>, vector<1x128xf32>
    %122 = vector.broadcast %121 : vector<1x128xf32> to vector<2x128xf32>
    %123 = arith.addf %120, %122 : vector<2x128xf32>
    %124 = arith.addf %111, %123 : vector<2x128xf32>
    %125 = arith.negf %124 : vector<2x128xf32>
    %126 = math.exp %125 : vector<2x128xf32>
    %cst_72 = arith.constant 1.000000e+00 : f32
    %127 = vector.broadcast %cst_72 : f32 to vector<2x128xf32>
    %128 = arith.addf %127, %126 : vector<2x128xf32>
    %129 = arith.divf %127, %128 : vector<2x128xf32>
    %130 = vector.shape_cast %129 : vector<2x128xf32> to vector<2x1x128xf32>
    %131 = vector.broadcast %130 : vector<2x1x128xf32> to vector<2x64x128xf32>
    %132 = arith.mulf %95, %131 : vector<2x64x128xf32>
    %133 = vector.shape_cast %132 : vector<2x64x128xf32> to vector<2x8x8x128xf32>
    %134 = tpu.iota {dimensions = array<i32: 1>} : vector<1x128xi32>
    %c32_i32 = arith.constant 32 : i32
    %135 = vector.broadcast %c32_i32 : i32 to vector<1x128xi32>
    %136 = arith.cmpi slt, %134, %135 : vector<1x128xi32>
    %cst_73 = arith.constant 0.000000e+00 : f32
    %cst_74 = arith.constant -1.000000e+30 : f32
    %137 = vector.broadcast %cst_73 : f32 to vector<1x128xf32>
    %138 = vector.broadcast %cst_74 : f32 to vector<1x128xf32>
    %139 = arith.select %136, %137, %138 : vector<1x128xi1>, vector<1x128xf32>
    %140 = vector.shape_cast %139 : vector<1x128xf32> to vector<1x1x1x128xf32>
    %141 = vector.broadcast %140 : vector<1x1x1x128xf32> to vector<2x8x8x128xf32>
    %142 = arith.addf %133, %141 : vector<2x8x8x128xf32>
    %cst_75 = arith.constant dense<0xFF800000> : vector<2x8x8xf32>
    %143 = vector.multi_reduction <maximumf>, %142, %cst_75 [3] : vector<2x8x8x128xf32> to vector<2x8x8xf32>
    %cst_76 = arith.constant dense<0.000000e+00> : vector<2x8x8xf32>
    %144 = vector.multi_reduction <add>, %133, %cst_76 [3] : vector<2x8x8x128xf32> to vector<2x8x8xf32>
    %cst_77 = arith.constant 3.125000e-02 : f32
    %145 = vector.broadcast %cst_77 : f32 to vector<2x8x8xf32>
    %146 = arith.mulf %144, %145 : vector<2x8x8xf32>
    %cst_78 = arith.constant 0.000000e+00 : f32
    %147 = vector.broadcast %cst_78 : f32 to vector<2x3x16xf32>
    %c0_79 = arith.constant 0 : index
    %c0_80 = arith.constant 0 : index
    %c0_81 = arith.constant 0 : index
    %148 = vector.load %arg17[%c0_79, %c0_80, %c0_81] : memref<2x14x16xf32, #tpu.memory_space<vmem>>, vector<2x3x16xf32>
    tpu.vector_store %arg17[%c0_79, %c0_80, %c0_81], %147 {strides = array<i32>} : memref<2x14x16xf32, #tpu.memory_space<vmem>>, vector<2x3x16xf32>,
    %c0_82 = arith.constant 0 : index
    %c11 = arith.constant 11 : index
    %c0_83 = arith.constant 0 : index
    %149 = vector.load %arg17[%c0_82, %c11, %c0_83] : memref<2x14x16xf32, #tpu.memory_space<vmem>>, vector<2x3x16xf32>
    tpu.vector_store %arg17[%c0_82, %c11, %c0_83], %147 {strides = array<i32>} : memref<2x14x16xf32, #tpu.memory_space<vmem>>, vector<2x3x16xf32>,
    %c0_84 = arith.constant 0 : index
    %c3_85 = arith.constant 3 : index
    %c0_86 = arith.constant 0 : index
    %150 = vector.load %arg17[%c0_84, %c3_85, %c0_86] : memref<2x14x16xf32, #tpu.memory_space<vmem>>, vector<2x8x8xf32>
    tpu.vector_store %arg17[%c0_84, %c3_85, %c0_86], %143 {strides = array<i32>} : memref<2x14x16xf32, #tpu.memory_space<vmem>>, vector<2x8x8xf32>,
    %c0_87 = arith.constant 0 : index
    %c3_88 = arith.constant 3 : index
    %c8_89 = arith.constant 8 : index
    %151 = vector.load %arg17[%c0_87, %c3_88, %c8_89] : memref<2x14x16xf32, #tpu.memory_space<vmem>>, vector<2x8x8xf32>
    tpu.vector_store %arg17[%c0_87, %c3_88, %c8_89], %146 {strides = array<i32>} : memref<2x14x16xf32, #tpu.memory_space<vmem>>, vector<2x8x8xf32>,
    %cst_90 = arith.constant 0.000000e+00 : f32
    %152 = vector.broadcast %cst_90 : f32 to vector<16x8xf32>
    %c0_91 = arith.constant 0 : index
    %c0_92 = arith.constant 0 : index
    %c0_93 = arith.constant 0 : index
    %153 = vector.load %arg17[%c0_91, %c0_92, %c0_93] : memref<2x14x16xf32, #tpu.memory_space<vmem>>, vector<2x8x16xf32>
    %154 = vector.shape_cast %153 : vector<2x8x16xf32> to vector<16x16xf32>
    %c0_94 = arith.constant 0 : index
    %c0_95 = arith.constant 0 : index
    %c0_96 = arith.constant 0 : index
    %155 = vector.load %arg14[%c0_94, %c0_95, %c0_96] : memref<7x16x8xf32, #tpu.memory_space<vmem>>, vector<1x16x8xf32>
    %156 = vector.shape_cast %155 : vector<1x16x8xf32> to vector<16x8xf32>
    %cst_97 = arith.constant dense<0.000000e+00> : vector<16x8xf32>
    %157 = tpu.matmul %154, %156, %cst_97 {dimension_numbers = #tpu.dot_dimension_numbers<[1], [0], [0], [1], [0, 0, 1, 1], [], []>} : vector<16x16xf32>, vector<16x8xf32>, vector<16x8xf32> -> vector<16x8xf32>
    %158 = arith.addf %152, %157 : vector<16x8xf32>
    %c0_98 = arith.constant 0 : index
    %c1_99 = arith.constant 1 : index
    %c0_100 = arith.constant 0 : index
    %159 = vector.load %arg17[%c0_98, %c1_99, %c0_100] : memref<2x14x16xf32, #tpu.memory_space<vmem>>, vector<2x8x16xf32>
    %160 = vector.shape_cast %159 : vector<2x8x16xf32> to vector<16x16xf32>
    %c1_101 = arith.constant 1 : index
    %c0_102 = arith.constant 0 : index
    %c0_103 = arith.constant 0 : index
    %161 = vector.load %arg14[%c1_101, %c0_102, %c0_103] : memref<7x16x8xf32, #tpu.memory_space<vmem>>, vector<1x16x8xf32>
    %162 = vector.shape_cast %161 : vector<1x16x8xf32> to vector<16x8xf32>
    %cst_104 = arith.constant dense<0.000000e+00> : vector<16x8xf32>
    %163 = tpu.matmul %160, %162, %cst_104 {dimension_numbers = #tpu.dot_dimension_numbers<[1], [0], [0], [1], [0, 0, 1, 1], [], []>} : vector<16x16xf32>, vector<16x8xf32>, vector<16x8xf32> -> vector<16x8xf32>
    %164 = arith.addf %158, %163 : vector<16x8xf32>
    %c0_105 = arith.constant 0 : index
    %c2_106 = arith.constant 2 : index
    %c0_107 = arith.constant 0 : index
    %165 = vector.load %arg17[%c0_105, %c2_106, %c0_107] : memref<2x14x16xf32, #tpu.memory_space<vmem>>, vector<2x8x16xf32>
    %166 = vector.shape_cast %165 : vector<2x8x16xf32> to vector<16x16xf32>
    %c2_108 = arith.constant 2 : index
    %c0_109 = arith.constant 0 : index
    %c0_110 = arith.constant 0 : index
    %167 = vector.load %arg14[%c2_108, %c0_109, %c0_110] : memref<7x16x8xf32, #tpu.memory_space<vmem>>, vector<1x16x8xf32>
    %168 = vector.shape_cast %167 : vector<1x16x8xf32> to vector<16x8xf32>
    %cst_111 = arith.constant dense<0.000000e+00> : vector<16x8xf32>
    %169 = tpu.matmul %166, %168, %cst_111 {dimension_numbers = #tpu.dot_dimension_numbers<[1], [0], [0], [1], [0, 0, 1, 1], [], []>} : vector<16x16xf32>, vector<16x8xf32>, vector<16x8xf32> -> vector<16x8xf32>
    %170 = arith.addf %164, %169 : vector<16x8xf32>
    %c0_112 = arith.constant 0 : index
    %c3_113 = arith.constant 3 : index
    %c0_114 = arith.constant 0 : index
    %171 = vector.load %arg17[%c0_112, %c3_113, %c0_114] : memref<2x14x16xf32, #tpu.memory_space<vmem>>, vector<2x8x16xf32>
    %172 = vector.shape_cast %171 : vector<2x8x16xf32> to vector<16x16xf32>
    %c3_115 = arith.constant 3 : index
    %c0_116 = arith.constant 0 : index
    %c0_117 = arith.constant 0 : index
    %173 = vector.load %arg14[%c3_115, %c0_116, %c0_117] : memref<7x16x8xf32, #tpu.memory_space<vmem>>, vector<1x16x8xf32>
    %174 = vector.shape_cast %173 : vector<1x16x8xf32> to vector<16x8xf32>
    %cst_118 = arith.constant dense<0.000000e+00> : vector<16x8xf32>
    %175 = tpu.matmul %172, %174, %cst_118 {dimension_numbers = #tpu.dot_dimension_numbers<[1], [0], [0], [1], [0, 0, 1, 1], [], []>} : vector<16x16xf32>, vector<16x8xf32>, vector<16x8xf32> -> vector<16x8xf32>
    %176 = arith.addf %170, %175 : vector<16x8xf32>
    %c0_119 = arith.constant 0 : index
    %c4_120 = arith.constant 4 : index
    %c0_121 = arith.constant 0 : index
    %177 = vector.load %arg17[%c0_119, %c4_120, %c0_121] : memref<2x14x16xf32, #tpu.memory_space<vmem>>, vector<2x8x16xf32>
    %178 = vector.shape_cast %177 : vector<2x8x16xf32> to vector<16x16xf32>
    %c4_122 = arith.constant 4 : index
    %c0_123 = arith.constant 0 : index
    %c0_124 = arith.constant 0 : index
    %179 = vector.load %arg14[%c4_122, %c0_123, %c0_124] : memref<7x16x8xf32, #tpu.memory_space<vmem>>, vector<1x16x8xf32>
    %180 = vector.shape_cast %179 : vector<1x16x8xf32> to vector<16x8xf32>
    %cst_125 = arith.constant dense<0.000000e+00> : vector<16x8xf32>
    %181 = tpu.matmul %178, %180, %cst_125 {dimension_numbers = #tpu.dot_dimension_numbers<[1], [0], [0], [1], [0, 0, 1, 1], [], []>} : vector<16x16xf32>, vector<16x8xf32>, vector<16x8xf32> -> vector<16x8xf32>
    %182 = arith.addf %176, %181 : vector<16x8xf32>
    %c0_126 = arith.constant 0 : index
    %c5_127 = arith.constant 5 : index
    %c0_128 = arith.constant 0 : index
    %183 = vector.load %arg17[%c0_126, %c5_127, %c0_128] : memref<2x14x16xf32, #tpu.memory_space<vmem>>, vector<2x8x16xf32>
    %184 = vector.shape_cast %183 : vector<2x8x16xf32> to vector<16x16xf32>
    %c5_129 = arith.constant 5 : index
    %c0_130 = arith.constant 0 : index
    %c0_131 = arith.constant 0 : index
    %185 = vector.load %arg14[%c5_129, %c0_130, %c0_131] : memref<7x16x8xf32, #tpu.memory_space<vmem>>, vector<1x16x8xf32>
    %186 = vector.shape_cast %185 : vector<1x16x8xf32> to vector<16x8xf32>
    %cst_132 = arith.constant dense<0.000000e+00> : vector<16x8xf32>
    %187 = tpu.matmul %184, %186, %cst_132 {dimension_numbers = #tpu.dot_dimension_numbers<[1], [0], [0], [1], [0, 0, 1, 1], [], []>} : vector<16x16xf32>, vector<16x8xf32>, vector<16x8xf32> -> vector<16x8xf32>
    %188 = arith.addf %182, %187 : vector<16x8xf32>
    %c0_133 = arith.constant 0 : index
    %c6_134 = arith.constant 6 : index
    %c0_135 = arith.constant 0 : index
    %189 = vector.load %arg17[%c0_133, %c6_134, %c0_135] : memref<2x14x16xf32, #tpu.memory_space<vmem>>, vector<2x8x16xf32>
    %190 = vector.shape_cast %189 : vector<2x8x16xf32> to vector<16x16xf32>
    %c6_136 = arith.constant 6 : index
    %c0_137 = arith.constant 0 : index
    %c0_138 = arith.constant 0 : index
    %191 = vector.load %arg14[%c6_136, %c0_137, %c0_138] : memref<7x16x8xf32, #tpu.memory_space<vmem>>, vector<1x16x8xf32>
    %192 = vector.shape_cast %191 : vector<1x16x8xf32> to vector<16x8xf32>
    %cst_139 = arith.constant dense<0.000000e+00> : vector<16x8xf32>
    %193 = tpu.matmul %190, %192, %cst_139 {dimension_numbers = #tpu.dot_dimension_numbers<[1], [0], [0], [1], [0, 0, 1, 1], [], []>} : vector<16x16xf32>, vector<16x8xf32>, vector<16x8xf32> -> vector<16x8xf32>
    %194 = arith.addf %188, %193 : vector<16x8xf32>
    %c0_140 = arith.constant 0 : index
    %195 = memref.load %arg15[%c0_140] : memref<2xf32, #tpu.memory_space<smem>>
    %196 = vector.broadcast %195 : f32 to vector<16x8xf32>
    %197 = arith.mulf %194, %196 : vector<16x8xf32>
    %c1_141 = arith.constant 1 : index
    %198 = memref.load %arg15[%c1_141] : memref<2xf32, #tpu.memory_space<smem>>
    %199 = vector.broadcast %198 : f32 to vector<16x8xf32>
    %200 = arith.addf %197, %199 : vector<16x8xf32>
    %201 = arith.negf %200 : vector<16x8xf32>
    %202 = math.exp %201 : vector<16x8xf32>
    %cst_142 = arith.constant 1.000000e+00 : f32
    %203 = vector.broadcast %cst_142 : f32 to vector<16x8xf32>
    %204 = arith.addf %203, %202 : vector<16x8xf32>
    %205 = arith.divf %203, %204 : vector<16x8xf32>
    %206 = vector.shape_cast %205 : vector<16x8xf32> to vector<2x8x8xf32>
    %207 = vector.extract_strided_slice %0 {offsets = [0, 1, 1, 0], sizes = [2, 8, 8, 128], strides = [1, 1, 1, 1]} : vector<2x10x16x128xbf16> to vector<2x8x8x128xbf16>
    %208 = vector.shape_cast %207 : vector<2x8x8x128xbf16> to vector<128x128xbf16>
    %c0_143 = arith.constant 0 : index
    %c0_144 = arith.constant 0 : index
    %209 = vector.load %arg8[%c0_143, %c0_144] : memref<128x128xbf16, #tpu.memory_space<vmem>>, vector<128x128xbf16>
    %cst_145 = arith.constant dense<0.000000e+00> : vector<128x128xf32>
    %210 = tpu.matmul %208, %209, %cst_145 {dimension_numbers = #tpu.dot_dimension_numbers<[1], [0], [0], [1], [0, 0, 1, 1], [], []>} : vector<128x128xbf16>, vector<128x128xbf16>, vector<128x128xf32> -> vector<128x128xf32>
    %c0_146 = arith.constant 0 : index
    %c0_147 = arith.constant 0 : index
    %211 = vector.load %arg9[%c0_146, %c0_147] : memref<1x128xf32, #tpu.memory_space<vmem>>, vector<1x128xf32>
    %212 = vector.broadcast %211 : vector<1x128xf32> to vector<128x128xf32>
    %213 = arith.addf %210, %212 : vector<128x128xf32>
    %214 = vector.shape_cast %213 : vector<128x128xf32> to vector<2x8x8x128xf32>
    %215 = vector.shape_cast %206 : vector<2x8x8xf32> to vector<2x8x8x1xf32>
    %216 = vector.broadcast %215 : vector<2x8x8x1xf32> to vector<2x8x8x128xf32>
    %217 = arith.mulf %133, %216 : vector<2x8x8x128xf32>
    %218 = arith.addf %217, %214 : vector<2x8x8x128xf32>
    %cst_148 = arith.constant 0.000000e+00 : f32
    %219 = vector.broadcast %cst_148 : f32 to vector<2x8x8x128xf32>
    %220 = arith.maximumf %218, %219 : vector<2x8x8x128xf32>
    %c0_149 = arith.constant 0 : index
    %c0_150 = arith.constant 0 : index
    %c0_151 = arith.constant 0 : index
    %c0_152 = arith.constant 0 : index
    %221 = vector.load %arg16[%c0_149, %c0_150, %c0_151, %c0_152] : memref<2x8x8x128xf32, #tpu.memory_space<vmem>>, vector<2x8x8x128xf32>
    tpu.vector_store %arg16[%c0_149, %c0_150, %c0_151, %c0_152], %220 {strides = array<i32>} : memref<2x8x8x128xf32, #tpu.memory_space<vmem>>, vector<2x8x8x128xf32>,
    return
  }
  func.func @transform_0(%arg0: i32) -> (i32, i32, i32, i32) {
    %c0_i32 = arith.constant 0 : i32
    %c0_i32_0 = arith.constant 0 : i32
    %c0_i32_1 = arith.constant 0 : i32
    %c0_i32_2 = arith.constant 0 : i32
    return %arg0, %c0_i32, %c0_i32_0, %c0_i32_1 : i32, i32, i32, i32
  }
  func.func @transform_1(%arg0: i32) -> (i32, i32) {
    %c0_i32 = arith.constant 0 : i32
    %c0_i32_0 = arith.constant 0 : i32
    %c0_i32_1 = arith.constant 0 : i32
    return %c0_i32, %c0_i32_0 : i32, i32
  }
  func.func @transform_2(%arg0: i32) -> (i32, i32) {
    %c0_i32 = arith.constant 0 : i32
    %c0_i32_0 = arith.constant 0 : i32
    %c0_i32_1 = arith.constant 0 : i32
    return %c0_i32, %c0_i32_0 : i32, i32
  }
  func.func @transform_3(%arg0: i32) -> (i32, i32, i32) {
    %c0_i32 = arith.constant 0 : i32
    %c0_i32_0 = arith.constant 0 : i32
    %c0_i32_1 = arith.constant 0 : i32
    %c0_i32_2 = arith.constant 0 : i32
    return %c0_i32, %c0_i32_0, %c0_i32_1 : i32, i32, i32
  }
  func.func @transform_4(%arg0: i32) -> (i32, i32) {
    %c0_i32 = arith.constant 0 : i32
    %c0_i32_0 = arith.constant 0 : i32
    %c0_i32_1 = arith.constant 0 : i32
    return %c0_i32, %c0_i32_0 : i32, i32
  }
  func.func @transform_5(%arg0: i32) -> (i32, i32) {
    %c0_i32 = arith.constant 0 : i32
    %c0_i32_0 = arith.constant 0 : i32
    %c0_i32_1 = arith.constant 0 : i32
    return %c0_i32, %c0_i32_0 : i32, i32
  }
  func.func @transform_6(%arg0: i32) -> (i32, i32) {
    %c0_i32 = arith.constant 0 : i32
    %c0_i32_0 = arith.constant 0 : i32
    %c0_i32_1 = arith.constant 0 : i32
    return %c0_i32, %c0_i32_0 : i32, i32
  }
  func.func @transform_7(%arg0: i32) -> (i32, i32) {
    %c0_i32 = arith.constant 0 : i32
    %c0_i32_0 = arith.constant 0 : i32
    %c0_i32_1 = arith.constant 0 : i32
    return %c0_i32, %c0_i32_0 : i32, i32
  }
  func.func @transform_8(%arg0: i32) -> (i32, i32) {
    %c0_i32 = arith.constant 0 : i32
    %c0_i32_0 = arith.constant 0 : i32
    %c0_i32_1 = arith.constant 0 : i32
    return %c0_i32, %c0_i32_0 : i32, i32
  }
  func.func @transform_9(%arg0: i32) -> (i32, i32) {
    %c0_i32 = arith.constant 0 : i32
    %c0_i32_0 = arith.constant 0 : i32
    %c0_i32_1 = arith.constant 0 : i32
    return %c0_i32, %c0_i32_0 : i32, i32
  }
  func.func @transform_10(%arg0: i32) -> (i32, i32) {
    %c0_i32 = arith.constant 0 : i32
    %c0_i32_0 = arith.constant 0 : i32
    %c0_i32_1 = arith.constant 0 : i32
    return %c0_i32, %c0_i32_0 : i32, i32
  }
  func.func @transform_11(%arg0: i32) -> (i32, i32) {
    %c0_i32 = arith.constant 0 : i32
    %c0_i32_0 = arith.constant 0 : i32
    %c0_i32_1 = arith.constant 0 : i32
    return %c0_i32, %c0_i32_0 : i32, i32
  }
  func.func @transform_12(%arg0: i32) -> (i32, i32) {
    %c0_i32 = arith.constant 0 : i32
    %c0_i32_0 = arith.constant 0 : i32
    %c0_i32_1 = arith.constant 0 : i32
    return %c0_i32, %c0_i32_0 : i32, i32
  }
  func.func @transform_13(%arg0: i32) -> (i32, i32, i32) {
    %c0_i32 = arith.constant 0 : i32
    %c0_i32_0 = arith.constant 0 : i32
    %c0_i32_1 = arith.constant 0 : i32
    %c0_i32_2 = arith.constant 0 : i32
    return %c0_i32, %c0_i32_0, %c0_i32_1 : i32, i32, i32
  }
  func.func @transform_14(%arg0: i32) -> i32 {
    %c0_i32 = arith.constant 0 : i32
    %c0_i32_0 = arith.constant 0 : i32
    return %c0_i32 : i32
  }
  func.func @transform_15(%arg0: i32) -> (i32, i32, i32, i32) {
    %c0_i32 = arith.constant 0 : i32
    %c0_i32_0 = arith.constant 0 : i32
    %c0_i32_1 = arith.constant 0 : i32
    %c0_i32_2 = arith.constant 0 : i32
    return %arg0, %c0_i32, %c0_i32_0, %c0_i32_1 : i32, i32, i32, i32
  }
}

</mosaic_0001>

<llo_original>
// kernel: tpu_custom_call.1
$region0: #{tpu_custom_call.1}
  #allocation0 [shape = 'u32[]', space=smem, size = 0x4, offset = 0x4, fixed_abs, tag = 'smem constant byte address 0x4 - core index']
  #allocation1 [shape = 'u32[144,128]{1,0:T(1,128)}', space=vmem, size = 0x12000, scoped, tag = 'internal scratch']
  #allocation2 [shape = 'f32[2,14,16]{2,1,0:T(8,128)}', space=vmem, size = 0x4000, scoped, tag = 'scratch operand']
  %s0 = inlined_call_operand.vmem [shape: bf16[2,10,16,128], index: 0, kind: input, shape index: {}]
  %s1 = inlined_call_operand.hbm [shape: bf16[128,128], index: 1, kind: input, shape index: {}]
  %s2 = inlined_call_operand.vmem [shape: f32[1,128], index: 2, kind: input, shape index: {}]
  %s3 = inlined_call_operand.hbm [shape: bf16[9,128,128], index: 3, kind: input, shape index: {}]
  %s4 = inlined_call_operand.vmem [shape: f32[1,128], index: 4, kind: input, shape index: {}]
  %s5 = inlined_call_operand.hbm [shape: bf16[128,128], index: 5, kind: input, shape index: {}]
  %s6 = inlined_call_operand.vmem [shape: f32[1,128], index: 6, kind: input, shape index: {}]
  %s7 = inlined_call_operand.hbm [shape: bf16[128,128], index: 7, kind: input, shape index: {}]
  %s8 = inlined_call_operand.vmem [shape: f32[1,128], index: 8, kind: input, shape index: {}]
  %s9 = inlined_call_operand.hbm [shape: f32[128,128], index: 9, kind: input, shape index: {}]
  %s10 = inlined_call_operand.vmem [shape: f32[1,128], index: 10, kind: input, shape index: {}]
  %s11 = inlined_call_operand.hbm [shape: f32[128,128], index: 11, kind: input, shape index: {}]
  %s12 = inlined_call_operand.vmem [shape: f32[1,128], index: 12, kind: input, shape index: {}]
  %s13 = inlined_call_operand.vmem [shape: f32[7,16,8], index: 13, kind: input, shape index: {}]
  %s14 = inlined_call_operand.vmem [shape: f32[2], index: 14, kind: input, shape index: {}]
  %s15 = inlined_call_operand.hbm [shape: f32[2,8,8,128], index: 15, kind: output, shape index: {}]
  %s16 = sld [smem:[#allocation0]]
  $region98: #{tpu_custom_call.1} parent=0
    _
  %s18 = ssub.s32 1, %s16
  %s19 = scalar_select 0, %s18, %s16
  $region1: #{tpu_custom_call.1} parent=0
    #allocation3 [shape = 'u8[32768]{0}', space=vmem, size = 0x8000, scoped, tag = 'input window, operand 1, single buffered']
    #allocation4 [shape = 's32[1]{0}', space=sflag, size = 0x4, scoped, tag = 'scoped memory for tpu_custom_call.1']
    #allocation5 [shape = 's32[1]{0}', space=sflag, size = 0x4, scoped, tag = 'scoped memory for tpu_custom_call.1']
    #allocation6 [shape = 's32[1]{0}', space=sflag, size = 0x4, scoped, tag = 'scoped memory for tpu_custom_call.1']
    #allocation7 [shape = 'u8[294912]{0}', space=vmem, size = 0x48000, scoped, tag = 'input window, operand 3, single buffered']
    #allocation8 [shape = 's32[1]{0}', space=sflag, size = 0x4, scoped, tag = 'scoped memory for tpu_custom_call.1']
    #allocation9 [shape = 'u8[32768]{0}', space=vmem, size = 0x8000, scoped, tag = 'input window, operand 5, single buffered']
    #allocation10 [shape = 'u8[32768]{0}', space=vmem, size = 0x8000, scoped, tag = 'input window, operand 7, single buffered']
    #allocation11 [shape = 's32[1]{0}', space=sflag, size = 0x4, scoped, tag = 'scoped memory for tpu_custom_call.1']
    #allocation12 [shape = 'u8[65536]{0}', space=vmem, size = 0x10000, scoped, tag = 'input window, operand 9, single buffered']
    #allocation13 [shape = 'u8[65536]{0}', space=vmem, size = 0x10000, scoped, tag = 'input window, operand 11, single buffered']
    #allocation14 [shape = 's32[1]{0}', space=sflag, size = 0x4, scoped, tag = 'scoped memory for tpu_custom_call.1']
    #allocation15 [shape = 'u8[512]{0}', space=smem, size = 0x200, scoped, tag = 'input window, operand 14, single buffered']
    #allocation16 [shape = 'u8[65536]{0}', space=vmem, size = 0x10000, scoped, tag = 'output window, operand 0, single buffered']
    %20 = vsyncpa [#allocation4], 0
    %21 = vsyncpa [#allocation8], 0
    %22 = vsyncpa [#allocation11], 0
    %23 = vsyncpa [#allocation14], 0
    %24 = vsyncpa [#allocation6], 0
    %25 = vsyncpa [#allocation5], 0
    // Predicated region
    $region2: #{tpu_custom_call.1} parent=1 // pred_check
      _
    $region3: #{tpu_custom_call.1} parent=1 // pred_check_branch
      %27 = sbr.rel (0) target = $region5
    $region4: #{tpu_custom_call.1} parent=1 // pred_region
      _
    $region5: #{tpu_custom_call.1} parent=1 // pred_fallthru
      _
    // Predicated region
    $region6: #{tpu_custom_call.1} parent=1 // pred_check
      _
    $region7: #{tpu_custom_call.1} parent=1 // pred_check_branch
      %29 = sbr.rel (0) target = $region9
    $region8: #{tpu_custom_call.1} parent=1 // pred_region
      %s31 = ssub.s32 1024, 1024
      %32 = vsyncadd [#allocation4], %s31
      %s33 = sshll.u32 [#allocation3], 4
      %s34 = int_to_ptr.vmem [resolvable:$true] %s33
      %39 = dma.hbm_to_vmem [thread:$0]  %s1, 1024, %s34, [#allocation4], 64, 64, 4
    $region9: #{tpu_custom_call.1} parent=1 // pred_fallthru
      _
    // Predicated region
    $region10: #{tpu_custom_call.1} parent=1 // pred_check
      _
    $region11: #{tpu_custom_call.1} parent=1 // pred_check_branch
      %41 = sbr.rel (0) target = $region13
    $region12: #{tpu_custom_call.1} parent=1 // pred_region
      _
    $region13: #{tpu_custom_call.1} parent=1 // pred_fallthru
      _
    // Predicated region
    $region14: #{tpu_custom_call.1} parent=1 // pred_check
      _
    $region15: #{tpu_custom_call.1} parent=1 // pred_check_branch
      %43 = sbr.rel (0) target = $region17
    $region16: #{tpu_custom_call.1} parent=1 // pred_region
      %s45 = ssub.s32 9216, 9216
      %46 = vsyncadd [#allocation8], %s45
      %s47 = sshll.u32 [#allocation7], 4
      %s48 = int_to_ptr.vmem [resolvable:$true] %s47
      %53 = dma.hbm_to_vmem [thread:$0]  %s3, 9216, %s48, [#allocation8], 64, 64, 4
    $region17: #{tpu_custom_call.1} parent=1 // pred_fallthru
      _
    // Predicated region
    $region18: #{tpu_custom_call.1} parent=1 // pred_check
      _
    $region19: #{tpu_custom_call.1} parent=1 // pred_check_branch
      %55 = sbr.rel (0) target = $region21
    $region20: #{tpu_custom_call.1} parent=1 // pred_region
      _
    $region21: #{tpu_custom_call.1} parent=1 // pred_fallthru
      _
    // Predicated region
    $region22: #{tpu_custom_call.1} parent=1 // pred_check
      _
    $region23: #{tpu_custom_call.1} parent=1 // pred_check_branch
      %57 = sbr.rel (0) target = $region25
    $region24: #{tpu_custom_call.1} parent=1 // pred_region
      %s59 = ssub.s32 1024, 1024
      %60 = vsyncadd [#allocation8], %s59
      %s61 = sshll.u32 [#allocation9], 4
      %s62 = int_to_ptr.vmem [resolvable:$true] %s61
      %67 = dma.hbm_to_vmem [thread:$0]  %s5, 1024, %s62, [#allocation8], 64, 64, 4
    $region25: #{tpu_custom_call.1} parent=1 // pred_fallthru
      _
    // Predicated region
    $region26: #{tpu_custom_call.1} parent=1 // pred_check
      _
    $region27: #{tpu_custom_call.1} parent=1 // pred_check_branch
      %69 = sbr.rel (0) target = $region29
    $region28: #{tpu_custom_call.1} parent=1 // pred_region
      _
    $region29: #{tpu_custom_call.1} parent=1 // pred_fallthru
      _
    // Predicated region
    $region30: #{tpu_custom_call.1} parent=1 // pred_check
      _
    $region31: #{tpu_custom_call.1} parent=1 // pred_check_branch
      %71 = sbr.rel (0) target = $region33
    $region32: #{tpu_custom_call.1} parent=1 // pred_region
      %s73 = ssub.s32 1024, 1024
      %74 = vsyncadd [#allocation11], %s73
      %s75 = sshll.u32 [#allocation10], 4
      %s76 = int_to_ptr.vmem [resolvable:$true] %s75
      %81 = dma.hbm_to_vmem [thread:$0]  %s7, 1024, %s76, [#allocation11], 64, 64, 4
    $region33: #{tpu_custom_call.1} parent=1 // pred_fallthru
      _
    // Predicated region
    $region34: #{tpu_custom_call.1} parent=1 // pred_check
      _
    $region35: #{tpu_custom_call.1} parent=1 // pred_check_branch
      %83 = sbr.rel (0) target = $region37
    $region36: #{tpu_custom_call.1} parent=1 // pred_region
      _
    $region37: #{tpu_custom_call.1} parent=1 // pred_fallthru
      _
    // Predicated region
    $region38: #{tpu_custom_call.1} parent=1 // pred_check
      _
    $region39: #{tpu_custom_call.1} parent=1 // pred_check_branch
      %85 = sbr.rel (0) target = $region41
    $region40: #{tpu_custom_call.1} parent=1 // pred_region
      %s87 = ssub.s32 2048, 2048
      %88 = vsyncadd [#allocation11], %s87
      %s89 = sshll.u32 [#allocation12], 4
      %s90 = int_to_ptr.vmem [resolvable:$true] %s89
      %95 = dma.hbm_to_vmem [thread:$0]  %s9, 2048, %s90, [#allocation11], 128, 128, 8
    $region41: #{tpu_custom_call.1} parent=1 // pred_fallthru
      _
    // Predicated region
    $region42: #{tpu_custom_call.1} parent=1 // pred_check
      _
    $region43: #{tpu_custom_call.1} parent=1 // pred_check_branch
      %97 = sbr.rel (0) target = $region45
    $region44: #{tpu_custom_call.1} parent=1 // pred_region
      _
    $region45: #{tpu_custom_call.1} parent=1 // pred_fallthru
      _
    // Predicated region
    $region46: #{tpu_custom_call.1} parent=1 // pred_check
      _
    $region47: #{tpu_custom_call.1} parent=1 // pred_check_branch
      %99 = sbr.rel (0) target = $region49
    $region48: #{tpu_custom_call.1} parent=1 // pred_region
      %s101 = ssub.s32 2048, 2048
      %102 = vsyncadd [#allocation14], %s101
      %s103 = sshll.u32 [#allocation13], 4
      %s104 = int_to_ptr.vmem [resolvable:$true] %s103
      %109 = dma.hbm_to_vmem [thread:$0]  %s11, 2048, %s104, [#allocation14], 128, 128, 8
    $region49: #{tpu_custom_call.1} parent=1 // pred_fallthru
      _
    // Predicated region
    $region50: #{tpu_custom_call.1} parent=1 // pred_check
      _
    $region51: #{tpu_custom_call.1} parent=1 // pred_check_branch
      %111 = sbr.rel (0) target = $region53
    $region52: #{tpu_custom_call.1} parent=1 // pred_region
      _
    $region53: #{tpu_custom_call.1} parent=1 // pred_fallthru
      _
    // Predicated region
    $region54: #{tpu_custom_call.1} parent=1 // pred_check
      _
    $region55: #{tpu_custom_call.1} parent=1 // pred_check_branch
      %113 = sbr.rel (0) target = $region57
    $region56: #{tpu_custom_call.1} parent=1 // pred_region
      _
    $region57: #{tpu_custom_call.1} parent=1 // pred_fallthru
      _
    // Predicated region
    $region58: #{tpu_custom_call.1} parent=1 // pred_check
      _
    $region59: #{tpu_custom_call.1} parent=1 // pred_check_branch
      %115 = sbr.rel (0) target = $region61
    $region60: #{tpu_custom_call.1} parent=1 // pred_region
      %s117 = ssub.s32 16, 16
      %118 = vsyncadd [#allocation6], %s117
      %s120 = sshll.u32 %s14, 4
      %s121 = int_to_ptr.vmem [resolvable:$true] %s120
      %123 = dma.vmem_to_smem %s121, 16, [#allocation15], [#allocation6]
    $region61: #{tpu_custom_call.1} parent=1 // pred_fallthru
      _
    // Predicated region
    $region62: #{tpu_custom_call.1} parent=1 // pred_check
      _
    $region63: #{tpu_custom_call.1} parent=1 // pred_check_branch
      %125 = sbr.rel (0) target = $region65
    $region64: #{tpu_custom_call.1} parent=1 // pred_region
      %126 = dma.done [#allocation4], 1024
    $region65: #{tpu_custom_call.1} parent=1 // pred_fallthru
      _
    // Predicated region
    $region66: #{tpu_custom_call.1} parent=1 // pred_check
      _
    $region67: #{tpu_custom_call.1} parent=1 // pred_check_branch
      %128 = sbr.rel (0) target = $region69
    $region68: #{tpu_custom_call.1} parent=1 // pred_region
      %129 = dma.done [#allocation8], 9216
    $region69: #{tpu_custom_call.1} parent=1 // pred_fallthru
      _
    // Predicated region
    $region70: #{tpu_custom_call.1} parent=1 // pred_check
      _
    $region71: #{tpu_custom_call.1} parent=1 // pred_check_branch
      %131 = sbr.rel (0) target = $region73
    $region72: #{tpu_custom_call.1} parent=1 // pred_region
      %132 = dma.done [#allocation8], 1024
    $region73: #{tpu_custom_call.1} parent=1 // pred_fallthru
      _
    // Predicated region
    $region74: #{tpu_custom_call.1} parent=1 // pred_check
      _
    $region75: #{tpu_custom_call.1} parent=1 // pred_check_branch
      %134 = sbr.rel (0) target = $region77
    $region76: #{tpu_custom_call.1} parent=1 // pred_region
      %135 = dma.done [#allocation11], 1024
    $region77: #{tpu_custom_call.1} parent=1 // pred_fallthru
      _
    // Predicated region
    $region78: #{tpu_custom_call.1} parent=1 // pred_check
      _
    $region79: #{tpu_custom_call.1} parent=1 // pred_check_branch
      %137 = sbr.rel (0) target = $region81
    $region80: #{tpu_custom_call.1} parent=1 // pred_region
      %138 = dma.done [#allocation11], 2048
    $region81: #{tpu_custom_call.1} parent=1 // pred_fallthru
      _
    // Predicated region
    $region82: #{tpu_custom_call.1} parent=1 // pred_check
      _
    $region83: #{tpu_custom_call.1} parent=1 // pred_check_branch
      %140 = sbr.rel (0) target = $region85
    $region84: #{tpu_custom_call.1} parent=1 // pred_region
      %141 = dma.done [#allocation14], 2048
    $region85: #{tpu_custom_call.1} parent=1 // pred_fallthru
      _
    // Predicated region
    $region86: #{tpu_custom_call.1} parent=1 // pred_check
      _
    $region87: #{tpu_custom_call.1} parent=1 // pred_check_branch
      %143 = sbr.rel (0) target = $region89
    $region88: #{tpu_custom_call.1} parent=1 // pred_region
      %144 = dma.done [#allocation6], 16
    $region89: #{tpu_custom_call.1} parent=1 // pred_fallthru
      _
    %145 = sfence
    %v147 = vld [vmem:[%s0] sm:$0xf]
    %v148 = vld [vmem:[%s0 + $0x4] sm:$0xf]
    %v149 = vld [vmem:[%s0 + $0x8] sm:$0xf]
    %v150 = vld [vmem:[%s0 + $0xc] sm:$0xf]
    %v151 = vld [vmem:[%s0 + $0x10] sm:$0xf]
    %v152 = vld [vmem:[%s0 + $0x14] sm:$0xf]
    %v153 = vld [vmem:[%s0 + $0x18] sm:$0xf]
    %v154 = vld [vmem:[%s0 + $0x1c] sm:$0xf]
    %v155 = vld [vmem:[%s0 + $0x20] sm:$0xf]
    %v156 = vld [vmem:[%s0 + $0x24] sm:$0xf]
    %v157 = vld [vmem:[%s0 + $0x28] sm:$0xf]
    %v158 = vld [vmem:[%s0 + $0x2c] sm:$0xf]
    %v159 = vld [vmem:[%s0 + $0x30] sm:$0xf]
    %v160 = vld [vmem:[%s0 + $0x34] sm:$0xf]
    %v161 = vld [vmem:[%s0 + $0x38] sm:$0xf]
    %v162 = vld [vmem:[%s0 + $0x3c] sm:$0xf]
    %v163 = vld [vmem:[%s0 + $0x40] sm:$0xf]
    %v164 = vld [vmem:[%s0 + $0x44] sm:$0xf]
    %v165 = vld [vmem:[%s0 + $0x48] sm:$0xf]
    %v166 = vld [vmem:[%s0 + $0x4c] sm:$0xf]
    %v167 = vld [vmem:[%s0 + $0x50] sm:$0xf]
    %v168 = vld [vmem:[%s0 + $0x54] sm:$0xf]
    %v169 = vld [vmem:[%s0 + $0x58] sm:$0xf]
    %v170 = vld [vmem:[%s0 + $0x5c] sm:$0xf]
    %v171 = vld [vmem:[%s0 + $0x60] sm:$0xf]
    %v172 = vld [vmem:[%s0 + $0x64] sm:$0xf]
    %v173 = vld [vmem:[%s0 + $0x68] sm:$0xf]
    %v174 = vld [vmem:[%s0 + $0x6c] sm:$0xf]
    %v175 = vld [vmem:[%s0 + $0x70] sm:$0xf]
    %v176 = vld [vmem:[%s0 + $0x74] sm:$0xf]
    %v177 = vld [vmem:[%s0 + $0x78] sm:$0xf]
    %v178 = vld [vmem:[%s0 + $0x7c] sm:$0xf]
    %v179 = vld [vmem:[%s0 + $0x80] sm:$0xf]
    %v180 = vld [vmem:[%s0 + $0x84] sm:$0xf]
    %v181 = vld [vmem:[%s0 + $0x88] sm:$0xf]
    %v182 = vld [vmem:[%s0 + $0x8c] sm:$0xf]
    %v183 = vld [vmem:[%s0 + $0x90] sm:$0xf]
    %v184 = vld [vmem:[%s0 + $0x94] sm:$0xf]
    %v185 = vld [vmem:[%s0 + $0x98] sm:$0xf]
    %v186 = vld [vmem:[%s0 + $0x9c] sm:$0xf]
    %v187 = vld [vmem:[#allocation3] sm:$0xf]
    %v188 = vld [vmem:[#allocation3 + $0x4] sm:$0xf]
    %v189 = vld [vmem:[#allocation3 + $0x8] sm:$0xf]
    %v190 = vld [vmem:[#allocation3 + $0xc] sm:$0xf]
    %v191 = vld [vmem:[#allocation3 + $0x10] sm:$0xf]
    %v192 = vld [vmem:[#allocation3 + $0x14] sm:$0xf]
    %v193 = vld [vmem:[#allocation3 + $0x18] sm:$0xf]
    %v194 = vld [vmem:[#allocation3 + $0x1c] sm:$0xf]
    %v195 = vld [vmem:[#allocation3 + $0x20] sm:$0xf]
    %v196 = vld [vmem:[#allocation3 + $0x24] sm:$0xf]
    %v197 = vld [vmem:[#allocation3 + $0x28] sm:$0xf]
    %v198 = vld [vmem:[#allocation3 + $0x2c] sm:$0xf]
    %v199 = vld [vmem:[#allocation3 + $0x30] sm:$0xf]
    %v200 = vld [vmem:[#allocation3 + $0x34] sm:$0xf]
    %v201 = vld [vmem:[#allocation3 + $0x38] sm:$0xf]
    %v202 = vld [vmem:[#allocation3 + $0x3c] sm:$0xf]
    %v203 = vld [vmem:[%s2] sm:$0x1]
    %v205 = vlaneseq
    %v206 = vshrl.u32 %v205, 7
    %v207 = vsub.s32 0, %v206
    %v208 = vrot.slane %v203, %v207
    %v250 = vunpack.c.l.b16 %v147
    %v251 = vunpack.c.l.b16 %v148
    %v252 = vunpack.c.l.b16 %v149
    %v253 = vunpack.c.l.b16 %v150
    %v254 = vunpack.c.l.b16 %v151
    %v255 = vunpack.c.l.b16 %v152
    %v256 = vunpack.c.l.b16 %v153
    %v257 = vunpack.c.l.b16 %v154
    %v258 = vunpack.c.l.b16 %v155
    %v259 = vunpack.c.l.b16 %v156
    %v260 = vunpack.c.l.b16 %v157
    %v261 = vunpack.c.l.b16 %v158
    %v262 = vunpack.c.l.b16 %v159
    %v263 = vunpack.c.l.b16 %v160
    %v264 = vunpack.c.l.b16 %v161
    %v265 = vunpack.c.l.b16 %v162
    %v266 = vunpack.c.l.b16 %v163
    %v267 = vunpack.c.l.b16 %v164
    %v268 = vunpack.c.l.b16 %v165
    %v269 = vunpack.c.l.b16 %v166
    %v270 = vunpack.c.l.b16 %v167
    %v271 = vunpack.c.l.b16 %v168
    %v272 = vunpack.c.l.b16 %v169
    %v273 = vunpack.c.l.b16 %v170
    %v274 = vunpack.c.l.b16 %v171
    %v275 = vunpack.c.l.b16 %v172
    %v276 = vunpack.c.l.b16 %v173
    %v277 = vunpack.c.l.b16 %v174
    %v278 = vunpack.c.l.b16 %v175
    %v279 = vunpack.c.l.b16 %v176
    %v280 = vunpack.c.l.b16 %v177
    %v281 = vunpack.c.l.b16 %v178
    %v282 = vunpack.c.l.b16 %v179
    %v283 = vunpack.c.l.b16 %v180
    %v284 = vunpack.c.l.b16 %v181
    %v285 = vunpack.c.l.b16 %v182
    %v286 = vunpack.c.l.b16 %v183
    %v287 = vunpack.c.l.b16 %v184
    %v288 = vunpack.c.l.b16 %v185
    %v289 = vunpack.c.l.b16 %v186
    %v290 = vpack.c.b16 %v251, %v250
    %v291 = vpack.c.b16 %v253, %v252
    %v292 = vpack.c.b16 %v255, %v254
    %v293 = vpack.c.b16 %v257, %v256
    %v294 = vpack.c.b16 %v259, %v258
    %v295 = vpack.c.b16 %v261, %v260
    %v296 = vpack.c.b16 %v263, %v262
    %v297 = vpack.c.b16 %v265, %v264
    %v298 = vpack.c.b16 %v267, %v266
    %v299 = vpack.c.b16 %v269, %v268
    %v300 = vpack.c.b16 %v271, %v270
    %v301 = vpack.c.b16 %v273, %v272
    %v302 = vpack.c.b16 %v275, %v274
    %v303 = vpack.c.b16 %v277, %v276
    %v304 = vpack.c.b16 %v279, %v278
    %v305 = vpack.c.b16 %v281, %v280
    %v306 = vpack.c.b16 %v283, %v282
    %v307 = vpack.c.b16 %v285, %v284
    %v308 = vpack.c.b16 %v287, %v286
    %v309 = vpack.c.b16 %v289, %v288
    %v346 = vunpack.c.l.b16 %v187
    %v347 = vunpack.c.l.b16 %v188
    %v348 = vunpack.c.l.b16 %v189
    %v349 = vunpack.c.l.b16 %v190
    %v350 = vunpack.c.l.b16 %v191
    %v351 = vunpack.c.l.b16 %v192
    %v352 = vunpack.c.l.b16 %v193
    %v353 = vunpack.c.l.b16 %v194
    %v354 = vunpack.c.l.b16 %v195
    %v355 = vunpack.c.l.b16 %v196
    %v356 = vunpack.c.l.b16 %v197
    %v357 = vunpack.c.l.b16 %v198
    %v358 = vunpack.c.l.b16 %v199
    %v359 = vunpack.c.l.b16 %v200
    %v360 = vunpack.c.l.b16 %v201
    %v361 = vunpack.c.l.b16 %v202
    %v362 = vpack.c.b16 %v347, %v346
    %v363 = vpack.c.b16 %v349, %v348
    %v364 = vpack.c.b16 %v351, %v350
    %v365 = vpack.c.b16 %v353, %v352
    %v366 = vpack.c.b16 %v355, %v354
    %v367 = vpack.c.b16 %v357, %v356
    %v368 = vpack.c.b16 %v359, %v358
    %v369 = vpack.c.b16 %v361, %v360
    %378 = vmatprep.subr.bf16.mxu0 0
    %379 = vmatpush1.bf16.msra.mxu0 %v362
    %380 = vmatprep.subr.bf16.mxu0 0
    %381 = vmatpush1.bf16.msra.mxu0 %v363
    %382 = vmatprep.subr.bf16.mxu0 0
    %383 = vmatpush1.bf16.msra.mxu0 %v364
    %384 = vmatprep.subr.bf16.mxu0 0
    %385 = vmatpush1.bf16.msra.mxu0 %v365
    %386 = vmatprep.subr.bf16.mxu0 0
    %387 = vmatpush1.bf16.msra.mxu0 %v366
    %388 = vmatprep.subr.bf16.mxu0 0
    %389 = vmatpush1.bf16.msra.mxu0 %v367
    %390 = vmatprep.subr.bf16.mxu0 0
    %391 = vmatpush1.bf16.msra.mxu0 %v368
    %392 = vmatprep.subr.bf16.mxu0 0
    %393 = vmatpush1.bf16.msra.mxu0 %v369
    %394 = vmatprep.subr.bf16.mxu0 0
    %395 = vmatpush1.bf16.msra.mxu0 0
    %396 = vmatprep.subr.bf16.mxu0 0
    %397 = vmatpush1.bf16.msra.mxu0 0
    %398 = vmatprep.subr.bf16.mxu0 0
    %399 = vmatpush1.bf16.msra.mxu0 0
    %400 = vmatprep.subr.bf16.mxu0 0
    %401 = vmatpush1.bf16.msra.mxu0 0
    %402 = vmatprep.subr.bf16.mxu0 0
    %403 = vmatpush1.bf16.msra.mxu0 0
    %404 = vmatprep.subr.bf16.mxu0 0
    %405 = vmatpush1.bf16.msra.mxu0 0
    %406 = vmatprep.subr.bf16.mxu0 0
    %407 = vmatpush1.bf16.msra.mxu0 0
    %408 = vmatprep.subr.bf16.mxu0 0
    %409 = vmatpush1.bf16.msra.mxu0 0
    %410 = vmatprep.mubr.bf16.mxu0 0
    %411 = vmatmul.mubr.bf16.gmra.mrb[0].mxu0 %v290
    %v412 = vpop.f32.mrb[0].mxu0
    %v413 = vadd.f32 %v208, %v412
    %v414 = vpop.f32.mrb[0].mxu0
    %v415 = vpop.f32.mrb[0].mxu0
    %v416 = vadd.f32 %v208, %v415
    %v417 = vpop.f32.mrb[0].mxu0
    %418 = vmatprep.mubr.bf16.mxu0 0
    %419 = vmatmul.mubr.bf16.gmra.mrb[0].mxu0 %v291
    %v420 = vpop.f32.mrb[0].mxu0
    %v421 = vadd.f32 %v208, %v420
    %v422 = vpop.f32.mrb[0].mxu0
    %v423 = vpop.f32.mrb[0].mxu0
    %v424 = vadd.f32 %v208, %v423
    %v425 = vpop.f32.mrb[0].mxu0
    %426 = vmatprep.mubr.bf16.mxu0 0
    %427 = vmatmul.mubr.bf16.gmra.mrb[0].mxu0 %v292
    %v428 = vpop.f32.mrb[0].mxu0
    %v429 = vadd.f32 %v208, %v428
    %v430 = vpop.f32.mrb[0].mxu0
    %v431 = vpop.f32.mrb[0].mxu0
    %v432 = vadd.f32 %v208, %v431
    %v433 = vpop.f32.mrb[0].mxu0
    %434 = vmatprep.mubr.bf16.mxu0 0
    %435 = vmatmul.mubr.bf16.gmra.mrb[0].mxu0 %v293
    %v436 = vpop.f32.mrb[0].mxu0
    %v437 = vadd.f32 %v208, %v436
    %v438 = vpop.f32.mrb[0].mxu0
    %v439 = vpop.f32.mrb[0].mxu0
    %v440 = vadd.f32 %v208, %v439
    %v441 = vpop.f32.mrb[0].mxu0
    %442 = vmatprep.mubr.bf16.mxu0 0
    %443 = vmatmul.mubr.bf16.gmra.mrb[0].mxu0 %v294
    %v444 = vpop.f32.mrb[0].mxu0
    %v445 = vadd.f32 %v208, %v444
    %v446 = vpop.f32.mrb[0].mxu0
    %v447 = vpop.f32.mrb[0].mxu0
    %v448 = vadd.f32 %v208, %v447
    %v449 = vpop.f32.mrb[0].mxu0
    %450 = vmatprep.mubr.bf16.mxu0 0
    %451 = vmatmul.mubr.bf16.gmra.mrb[0].mxu0 %v295
    %v452 = vpop.f32.mrb[0].mxu0
    %v453 = vadd.f32 %v208, %v452
    %v454 = vpop.f32.mrb[0].mxu0
    %v455 = vpop.f32.mrb[0].mxu0
    %v456 = vadd.f32 %v208, %v455
    %v457 = vpop.f32.mrb[0].mxu0
    %458 = vmatprep.mubr.bf16.mxu0 0
    %459 = vmatmul.mubr.bf16.gmra.mrb[0].mxu0 %v296
    %v460 = vpop.f32.mrb[0].mxu0
    %v461 = vadd.f32 %v208, %v460
    %v462 = vpop.f32.mrb[0].mxu0
    %v463 = vpop.f32.mrb[0].mxu0
    %v464 = vadd.f32 %v208, %v463
    %v465 = vpop.f32.mrb[0].mxu0
    %466 = vmatprep.mubr.bf16.mxu0 0
    %467 = vmatmul.mubr.bf16.gmra.mrb[0].mxu0 %v297
    %v468 = vpop.f32.mrb[0].mxu0
    %v469 = vadd.f32 %v208, %v468
    %v470 = vpop.f32.mrb[0].mxu0
    %v471 = vpop.f32.mrb[0].mxu0
    %v472 = vadd.f32 %v208, %v471
    %v473 = vpop.f32.mrb[0].mxu0
    %474 = vmatprep.mubr.bf16.mxu0 0
    %475 = vmatmul.mubr.bf16.gmra.mrb[0].mxu0 %v298
    %v476 = vpop.f32.mrb[0].mxu0
    %v477 = vadd.f32 %v208, %v476
    %v478 = vpop.f32.mrb[0].mxu0
    %v479 = vpop.f32.mrb[0].mxu0
    %v480 = vadd.f32 %v208, %v479
    %v481 = vpop.f32.mrb[0].mxu0
    %482 = vmatprep.mubr.bf16.mxu0 0
    %483 = vmatmul.mubr.bf16.gmra.mrb[0].mxu0 %v299
    %v484 = vpop.f32.mrb[0].mxu0
    %v485 = vadd.f32 %v208, %v484
    %v486 = vpop.f32.mrb[0].mxu0
    %v487 = vpop.f32.mrb[0].mxu0
    %v488 = vadd.f32 %v208, %v487
    %v489 = vpop.f32.mrb[0].mxu0
    %490 = vmatprep.mubr.bf16.mxu0 0
    %491 = vmatmul.mubr.bf16.gmra.mrb[0].mxu0 %v300
    %v492 = vpop.f32.mrb[0].mxu0
    %v493 = vadd.f32 %v208, %v492
    %v494 = vpop.f32.mrb[0].mxu0
    %v495 = vpop.f32.mrb[0].mxu0
    %v496 = vadd.f32 %v208, %v495
    %v497 = vpop.f32.mrb[0].mxu0
    %498 = vmatprep.mubr.bf16.mxu0 0
    %499 = vmatmul.mubr.bf16.gmra.mrb[0].mxu0 %v301
    %v500 = vpop.f32.mrb[0].mxu0
    %v501 = vadd.f32 %v208, %v500
    %v502 = vpop.f32.mrb[0].mxu0
    %v503 = vpop.f32.mrb[0].mxu0
    %v504 = vadd.f32 %v208, %v503
    %v505 = vpop.f32.mrb[0].mxu0
    %506 = vmatprep.mubr.bf16.mxu0 0
    %507 = vmatmul.mubr.bf16.gmra.mrb[0].mxu0 %v302
    %v508 = vpop.f32.mrb[0].mxu0
    %v509 = vadd.f32 %v208, %v508
    %v510 = vpop.f32.mrb[0].mxu0
    %v511 = vpop.f32.mrb[0].mxu0
    %v512 = vadd.f32 %v208, %v511
    %v513 = vpop.f32.mrb[0].mxu0
    %514 = vmatprep.mubr.bf16.mxu0 0
    %515 = vmatmul.mubr.bf16.gmra.mrb[0].mxu0 %v303
    %v516 = vpop.f32.mrb[0].mxu0
    %v517 = vadd.f32 %v208, %v516
    %v518 = vpop.f32.mrb[0].mxu0
    %v519 = vpop.f32.mrb[0].mxu0
    %v520 = vadd.f32 %v208, %v519
    %v521 = vpop.f32.mrb[0].mxu0
    %522 = vmatprep.mubr.bf16.mxu0 0
    %523 = vmatmul.mubr.bf16.gmra.mrb[0].mxu0 %v304
    %v524 = vpop.f32.mrb[0].mxu0
    %v525 = vadd.f32 %v208, %v524
    %v526 = vpop.f32.mrb[0].mxu0
    %v527 = vpop.f32.mrb[0].mxu0
    %v528 = vadd.f32 %v208, %v527
    %v529 = vpop.f32.mrb[0].mxu0
    %530 = vmatprep.mubr.bf16.mxu0 0
    %531 = vmatmul.mubr.bf16.gmra.mrb[0].mxu0 %v305
    %v532 = vpop.f32.mrb[0].mxu0
    %v533 = vadd.f32 %v208, %v532
    %v534 = vpop.f32.mrb[0].mxu0
    %v535 = vpop.f32.mrb[0].mxu0
    %v536 = vadd.f32 %v208, %v535
    %v537 = vpop.f32.mrb[0].mxu0
    %538 = vmatprep.mubr.bf16.mxu0 0
    %539 = vmatmul.mubr.bf16.gmra.mrb[0].mxu0 %v306
    %v540 = vpop.f32.mrb[0].mxu0
    %v541 = vadd.f32 %v208, %v540
    %v542 = vpop.f32.mrb[0].mxu0
    %v543 = vpop.f32.mrb[0].mxu0
    %v544 = vadd.f32 %v208, %v543
    %v545 = vpop.f32.mrb[0].mxu0
    %546 = vmatprep.mubr.bf16.mxu0 0
    %547 = vmatmul.mubr.bf16.gmra.mrb[0].mxu0 %v307
    %v548 = vpop.f32.mrb[0].mxu0
    %v549 = vadd.f32 %v208, %v548
    %v550 = vpop.f32.mrb[0].mxu0
    %v551 = vpop.f32.mrb[0].mxu0
    %v552 = vadd.f32 %v208, %v551
    %v553 = vpop.f32.mrb[0].mxu0
    %554 = vmatprep.mubr.bf16.mxu0 0
    %555 = vmatmul.mubr.bf16.gmra.mrb[0].mxu0 %v308
    %v556 = vpop.f32.mrb[0].mxu0
    %v557 = vadd.f32 %v208, %v556
    %v558 = vpop.f32.mrb[0].mxu0
    %v559 = vpop.f32.mrb[0].mxu0
    %v560 = vadd.f32 %v208, %v559
    %v561 = vpop.f32.mrb[0].mxu0
    %562 = vmatprep.mubr.bf16.mxu0 0
    %563 = vmatmul.mubr.bf16.gmra.mrb[0].mxu0 %v309
    %v564 = vpop.f32.mrb[0].mxu0
    %v565 = vadd.f32 %v208, %v564
    %v566 = vpop.f32.mrb[0].mxu0
    %v567 = vpop.f32.mrb[0].mxu0
    %v568 = vadd.f32 %v208, %v567
    %v569 = vpop.f32.mrb[0].mxu0
    %570 = vdwg.mxu0
    %v571 = vmax.f32 %v413, 0.0
    %v572 = vmax.f32 %v416, 0.0
    %v573 = vmax.f32 %v421, 0.0
    %v574 = vmax.f32 %v424, 0.0
    %v575 = vmax.f32 %v429, 0.0
    %v576 = vmax.f32 %v432, 0.0
    %v577 = vmax.f32 %v437, 0.0
    %v578 = vmax.f32 %v440, 0.0
    %v579 = vmax.f32 %v445, 0.0
    %v580 = vmax.f32 %v448, 0.0
    %v581 = vmax.f32 %v453, 0.0
    %v582 = vmax.f32 %v456, 0.0
    %v583 = vmax.f32 %v461, 0.0
    %v584 = vmax.f32 %v464, 0.0
    %v585 = vmax.f32 %v469, 0.0
    %v586 = vmax.f32 %v472, 0.0
    %v587 = vmax.f32 %v477, 0.0
    %v588 = vmax.f32 %v480, 0.0
    %v589 = vmax.f32 %v485, 0.0
    %v590 = vmax.f32 %v488, 0.0
    %v591 = vmax.f32 %v493, 0.0
    %v592 = vmax.f32 %v496, 0.0
    %v593 = vmax.f32 %v501, 0.0
    %v594 = vmax.f32 %v504, 0.0
    %v595 = vmax.f32 %v509, 0.0
    %v596 = vmax.f32 %v512, 0.0
    %v597 = vmax.f32 %v517, 0.0
    %v598 = vmax.f32 %v520, 0.0
    %v599 = vmax.f32 %v525, 0.0
    %v600 = vmax.f32 %v528, 0.0
    %v601 = vmax.f32 %v533, 0.0
    %v602 = vmax.f32 %v536, 0.0
    %v603 = vmax.f32 %v541, 0.0
    %v604 = vmax.f32 %v544, 0.0
    %v605 = vmax.f32 %v549, 0.0
    %v606 = vmax.f32 %v552, 0.0
    %v607 = vmax.f32 %v557, 0.0
    %v608 = vmax.f32 %v560, 0.0
    %v609 = vmax.f32 %v565, 0.0
    %v610 = vmax.f32 %v568, 0.0
    %v611 = vlaneseq
    %v612 = vshrl.u32 %v611, 7
    %v613 = vadd.s32 %v612, 8
    %vm614 = vcmp.ge.s32.totalorder %v612, 1
    %vm615 = vcmp.ge.s32.totalorder %v613, 1
    %vm616 = vmand 0, %vm614
    %vm617 = vmand 0, %vm615
    %vm618 = vmand 1, %vm614
    %vm619 = vmand 1, %vm615
    %vm620 = vcmp.le.s32.totalorder %v612, 8
    %vm621 = vcmp.le.s32.totalorder %v613, 8
    %vm622 = vmand %vm616, %vm620
    %vm623 = vmand %vm617, %vm621
    %vm624 = vmand %vm618, %vm620
    %vm625 = vmand %vm619, %vm621
    %v626 = vsel %vm622, 1, 0
    %v627 = vsel %vm623, 1, 0
    %v628 = vsel %vm624, 1, 0
    %v629 = vsel %vm625, 1, 0
    %v630 = vcvt.s32.f32 %v626
    %v631 = vcvt.s32.f32 %v627
    %v632 = vcvt.s32.f32 %v628
    %v633 = vcvt.s32.f32 %v629
    %v634 = vmul.f32 %v571, %v630
    %v635 = vmul.f32 %v572, %v631
    %v636 = vmul.f32 %v573, %v632
    %v637 = vmul.f32 %v574, %v633
    %v638 = vmul.f32 %v575, %v632
    %v639 = vmul.f32 %v576, %v633
    %v640 = vmul.f32 %v577, %v632
    %v641 = vmul.f32 %v578, %v633
    %v642 = vmul.f32 %v579, %v632
    %v643 = vmul.f32 %v580, %v633
    %v644 = vmul.f32 %v581, %v632
    %v645 = vmul.f32 %v582, %v633
    %v646 = vmul.f32 %v583, %v632
    %v647 = vmul.f32 %v584, %v633
    %v648 = vmul.f32 %v585, %v632
    %v649 = vmul.f32 %v586, %v633
    %v650 = vmul.f32 %v587, %v632
    %v651 = vmul.f32 %v588, %v633
    %v652 = vmul.f32 %v589, %v630
    %v653 = vmul.f32 %v590, %v631
    %v654 = vmul.f32 %v591, %v630
    %v655 = vmul.f32 %v592, %v631
    %v656 = vmul.f32 %v593, %v632
    %v657 = vmul.f32 %v594, %v633
    %v658 = vmul.f32 %v595, %v632
    %v659 = vmul.f32 %v596, %v633
    %v660 = vmul.f32 %v597, %v632
    %v661 = vmul.f32 %v598, %v633
    %v662 = vmul.f32 %v599, %v632
    %v663 = vmul.f32 %v600, %v633
    %v664 = vmul.f32 %v601, %v632
    %v665 = vmul.f32 %v602, %v633
    %v666 = vmul.f32 %v603, %v632
    %v667 = vmul.f32 %v604, %v633
    %v668 = vmul.f32 %v605, %v632
    %v669 = vmul.f32 %v606, %v633
    %v670 = vmul.f32 %v607, %v632
    %v671 = vmul.f32 %v608, %v633
    %v672 = vmul.f32 %v609, %v630
    %v673 = vmul.f32 %v610, %v631
    %v674 = vpack.c.bf16 %v635, %v634
    %v675 = vpack.c.bf16 %v637, %v636
    %v676 = vpack.c.bf16 %v639, %v638
    %v677 = vpack.c.bf16 %v641, %v640
    %v678 = vpack.c.bf16 %v643, %v642
    %v679 = vpack.c.bf16 %v645, %v644
    %v680 = vpack.c.bf16 %v647, %v646
    %v681 = vpack.c.bf16 %v649, %v648
    %v682 = vpack.c.bf16 %v651, %v650
    %v683 = vpack.c.bf16 %v653, %v652
    %v684 = vpack.c.bf16 %v655, %v654
    %v685 = vpack.c.bf16 %v657, %v656
    %v686 = vpack.c.bf16 %v659, %v658
    %v687 = vpack.c.bf16 %v661, %v660
    %v688 = vpack.c.bf16 %v663, %v662
    %v689 = vpack.c.bf16 %v665, %v664
    %v690 = vpack.c.bf16 %v667, %v666
    %v691 = vpack.c.bf16 %v669, %v668
    %v692 = vpack.c.bf16 %v671, %v670
    %v693 = vpack.c.bf16 %v673, %v672
    %v694 = vld [vmem:[#allocation7] sm:$0xf]
    %v695 = vld [vmem:[#allocation7 + $0x4] sm:$0xf]
    %v696 = vld [vmem:[#allocation7 + $0x8] sm:$0xf]
    %v697 = vld [vmem:[#allocation7 + $0xc] sm:$0xf]
    %v698 = vld [vmem:[#allocation7 + $0x10] sm:$0xf]
    %v699 = vld [vmem:[#allocation7 + $0x14] sm:$0xf]
    %v700 = vld [vmem:[#allocation7 + $0x18] sm:$0xf]
    %v701 = vld [vmem:[#allocation7 + $0x1c] sm:$0xf]
    %v702 = vld [vmem:[#allocation7 + $0x20] sm:$0xf]
    %v703 = vld [vmem:[#allocation7 + $0x24] sm:$0xf]
    %v704 = vld [vmem:[#allocation7 + $0x28] sm:$0xf]
    %v705 = vld [vmem:[#allocation7 + $0x2c] sm:$0xf]
    %v706 = vld [vmem:[#allocation7 + $0x30] sm:$0xf]
    %v707 = vld [vmem:[#allocation7 + $0x34] sm:$0xf]
    %v708 = vld [vmem:[#allocation7 + $0x38] sm:$0xf]
    %v709 = vld [vmem:[#allocation7 + $0x3c] sm:$0xf]
    %v726 = vunpack.c.l.b16 %v674
    %v727 = vunpack.c.h.b16 %v674
    %v728 = vunpack.c.l.b16 %v675
    %v729 = vunpack.c.h.b16 %v675
    %v730 = vunpack.c.l.b16 %v676
    %v731 = vunpack.c.h.b16 %v676
    %v732 = vunpack.c.l.b16 %v677
    %v733 = vunpack.c.h.b16 %v677
    %v734 = vunpack.c.l.b16 %v678
    %v735 = vunpack.c.h.b16 %v678
    %v736 = vunpack.c.l.b16 %v679
    %v737 = vunpack.c.h.b16 %v679
    %v738 = vunpack.c.l.b16 %v680
    %v739 = vunpack.c.h.b16 %v680
    %v740 = vunpack.c.l.b16 %v681
    %v741 = vunpack.c.h.b16 %v681
    %v742 = vunpack.c.l.b16 %v684
    %v743 = vunpack.c.h.b16 %v684
    %v744 = vunpack.c.l.b16 %v685
    %v745 = vunpack.c.h.b16 %v685
    %v746 = vunpack.c.l.b16 %v686
    %v747 = vunpack.c.h.b16 %v686
    %v748 = vunpack.c.l.b16 %v687
    %v749 = vunpack.c.h.b16 %v687
    %v750 = vunpack.c.l.b16 %v688
    %v751 = vunpack.c.h.b16 %v688
    %v752 = vunpack.c.l.b16 %v689
    %v753 = vunpack.c.h.b16 %v689
    %v754 = vunpack.c.l.b16 %v690
    %v755 = vunpack.c.h.b16 %v690
    %v756 = vunpack.c.l.b16 %v691
    %v757 = vunpack.c.h.b16 %v691
    %v758 = vpack.c.b16 %v726, %v726
    %v759 = vpack.c.b16 %v727, %v727
    %v760 = vpack.c.b16 %v728, %v728
    %v761 = vpack.c.b16 %v729, %v729
    %v762 = vpack.c.b16 %v730, %v730
    %v763 = vpack.c.b16 %v731, %v731
    %v764 = vpack.c.b16 %v732, %v732
    %v765 = vpack.c.b16 %v733, %v733
    %v766 = vpack.c.b16 %v734, %v734
    %v767 = vpack.c.b16 %v735, %v735
    %v768 = vpack.c.b16 %v736, %v736
    %v769 = vpack.c.b16 %v737, %v737
    %v770 = vpack.c.b16 %v738, %v738
    %v771 = vpack.c.b16 %v739, %v739
    %v772 = vpack.c.b16 %v740, %v740
    %v773 = vpack.c.b16 %v741, %v741
    %v774 = vpack.c.b16 %v742, %v742
    %v775 = vpack.c.b16 %v743, %v743
    %v776 = vpack.c.b16 %v744, %v744
    %v777 = vpack.c.b16 %v745, %v745
    %v778 = vpack.c.b16 %v746, %v746
    %v779 = vpack.c.b16 %v747, %v747
    %v780 = vpack.c.b16 %v748, %v748
    %v781 = vpack.c.b16 %v749, %v749
    %v782 = vpack.c.b16 %v750, %v750
    %v783 = vpack.c.b16 %v751, %v751
    %v784 = vpack.c.b16 %v752, %v752
    %v785 = vpack.c.b16 %v753, %v753
    %v786 = vpack.c.b16 %v754, %v754
    %v787 = vpack.c.b16 %v755, %v755
    %v788 = vpack.c.b16 %v756, %v756
    %v789 = vpack.c.b16 %v757, %v757
    %vm790 = vsmask.f32 3328
    %vm791 = vsmask.f32 7440
    %vm792 = vmor %vm790, %vm791
    %v794 = vshrl.u32 %v758, 16
    %v796 = vrot.slane %v794, 4
    %v797 = vshll.u32 %v758, 16
    %v799 = vrot.slane %v797, 5
    %v800 = vor.u32 %v796, %v799
    %v801 = vrot.slane %v800, 4
    %v803 = vshll.u32 %v759, 16
    %v805 = vrot.slane %v803, 5
    %v806 = vsel %vm792, %v801, %v805
    %v808 = vshrl.u32 %v760, 16
    %v810 = vrot.slane %v808, 4
    %v811 = vshll.u32 %v760, 16
    %v813 = vrot.slane %v811, 5
    %v814 = vor.u32 %v810, %v813
    %v815 = vrot.slane %v814, 4
    %v817 = vshll.u32 %v761, 16
    %v819 = vrot.slane %v817, 5
    %v820 = vsel %vm792, %v815, %v819
    %v822 = vshrl.u32 %v762, 16
    %v824 = vrot.slane %v822, 4
    %v825 = vshll.u32 %v762, 16
    %v827 = vrot.slane %v825, 5
    %v828 = vor.u32 %v824, %v827
    %v829 = vrot.slane %v828, 4
    %v831 = vshll.u32 %v763, 16
    %v833 = vrot.slane %v831, 5
    %v834 = vsel %vm792, %v829, %v833
    %v836 = vshrl.u32 %v764, 16
    %v838 = vrot.slane %v836, 4
    %v839 = vshll.u32 %v764, 16
    %v841 = vrot.slane %v839, 5
    %v842 = vor.u32 %v838, %v841
    %v843 = vrot.slane %v842, 4
    %v845 = vshll.u32 %v765, 16
    %v847 = vrot.slane %v845, 5
    %v848 = vsel %vm792, %v843, %v847
    %v850 = vshrl.u32 %v766, 16
    %v852 = vrot.slane %v850, 4
    %v853 = vshll.u32 %v766, 16
    %v855 = vrot.slane %v853, 5
    %v856 = vor.u32 %v852, %v855
    %v857 = vrot.slane %v856, 4
    %v859 = vshll.u32 %v767, 16
    %v861 = vrot.slane %v859, 5
    %v862 = vsel %vm792, %v857, %v861
    %v864 = vshrl.u32 %v768, 16
    %v866 = vrot.slane %v864, 4
    %v867 = vshll.u32 %v768, 16
    %v869 = vrot.slane %v867, 5
    %v870 = vor.u32 %v866, %v869
    %v871 = vrot.slane %v870, 4
    %v873 = vshll.u32 %v769, 16
    %v875 = vrot.slane %v873, 5
    %v876 = vsel %vm792, %v871, %v875
    %v878 = vshrl.u32 %v770, 16
    %v880 = vrot.slane %v878, 4
    %v881 = vshll.u32 %v770, 16
    %v883 = vrot.slane %v881, 5
    %v884 = vor.u32 %v880, %v883
    %v885 = vrot.slane %v884, 4
    %v887 = vshll.u32 %v771, 16
    %v889 = vrot.slane %v887, 5
    %v890 = vsel %vm792, %v885, %v889
    %v892 = vshrl.u32 %v772, 16
    %v894 = vrot.slane %v892, 4
    %v895 = vshll.u32 %v772, 16
    %v897 = vrot.slane %v895, 5
    %v898 = vor.u32 %v894, %v897
    %v899 = vrot.slane %v898, 4
    %v901 = vshll.u32 %v773, 16
    %v903 = vrot.slane %v901, 5
    %v904 = vsel %vm792, %v899, %v903
    %v906 = vshrl.u32 %v774, 16
    %v908 = vrot.slane %v906, 4
    %v909 = vshll.u32 %v774, 16
    %v911 = vrot.slane %v909, 5
    %v912 = vor.u32 %v908, %v911
    %v913 = vrot.slane %v912, 4
    %v915 = vshll.u32 %v775, 16
    %v917 = vrot.slane %v915, 5
    %v918 = vsel %vm792, %v913, %v917
    %v920 = vshrl.u32 %v776, 16
    %v922 = vrot.slane %v920, 4
    %v923 = vshll.u32 %v776, 16
    %v925 = vrot.slane %v923, 5
    %v926 = vor.u32 %v922, %v925
    %v927 = vrot.slane %v926, 4
    %v929 = vshll.u32 %v777, 16
    %v931 = vrot.slane %v929, 5
    %v932 = vsel %vm792, %v927, %v931
    %v934 = vshrl.u32 %v778, 16
    %v936 = vrot.slane %v934, 4
    %v937 = vshll.u32 %v778, 16
    %v939 = vrot.slane %v937, 5
    %v940 = vor.u32 %v936, %v939
    %v941 = vrot.slane %v940, 4
    %v943 = vshll.u32 %v779, 16
    %v945 = vrot.slane %v943, 5
    %v946 = vsel %vm792, %v941, %v945
    %v948 = vshrl.u32 %v780, 16
    %v950 = vrot.slane %v948, 4
    %v951 = vshll.u32 %v780, 16
    %v953 = vrot.slane %v951, 5
    %v954 = vor.u32 %v950, %v953
    %v955 = vrot.slane %v954, 4
    %v957 = vshll.u32 %v781, 16
    %v959 = vrot.slane %v957, 5
    %v960 = vsel %vm792, %v955, %v959
    %v962 = vshrl.u32 %v782, 16
    %v964 = vrot.slane %v962, 4
    %v965 = vshll.u32 %v782, 16
    %v967 = vrot.slane %v965, 5
    %v968 = vor.u32 %v964, %v967
    %v969 = vrot.slane %v968, 4
    %v971 = vshll.u32 %v783, 16
    %v973 = vrot.slane %v971, 5
    %v974 = vsel %vm792, %v969, %v973
    %v976 = vshrl.u32 %v784, 16
    %v978 = vrot.slane %v976, 4
    %v979 = vshll.u32 %v784, 16
    %v981 = vrot.slane %v979, 5
    %v982 = vor.u32 %v978, %v981
    %v983 = vrot.slane %v982, 4
    %v985 = vshll.u32 %v785, 16
    %v987 = vrot.slane %v985, 5
    %v988 = vsel %vm792, %v983, %v987
    %v990 = vshrl.u32 %v786, 16
    %v992 = vrot.slane %v990, 4
    %v993 = vshll.u32 %v786, 16
    %v995 = vrot.slane %v993, 5
    %v996 = vor.u32 %v992, %v995
    %v997 = vrot.slane %v996, 4
    %v999 = vshll.u32 %v787, 16
    %v1001 = vrot.slane %v999, 5
    %v1002 = vsel %vm792, %v997, %v1001
    %v1004 = vshrl.u32 %v788, 16
    %v1006 = vrot.slane %v1004, 4
    %v1007 = vshll.u32 %v788, 16
    %v1009 = vrot.slane %v1007, 5
    %v1010 = vor.u32 %v1006, %v1009
    %v1011 = vrot.slane %v1010, 4
    %v1013 = vshll.u32 %v789, 16
    %v1015 = vrot.slane %v1013, 5
    %v1016 = vsel %vm792, %v1011, %v1015
    %s1017 = scalar_lea.vmem [#allocation7], 64
    %v1018 = vld [vmem:[%s1017] sm:$0xf]
    %v1019 = vld [vmem:[%s1017 + $0x4] sm:$0xf]
    %v1020 = vld [vmem:[%s1017 + $0x8] sm:$0xf]
    %v1021 = vld [vmem:[%s1017 + $0xc] sm:$0xf]
    %v1022 = vld [vmem:[%s1017 + $0x10] sm:$0xf]
    %v1023 = vld [vmem:[%s1017 + $0x14] sm:$0xf]
    %v1024 = vld [vmem:[%s1017 + $0x18] sm:$0xf]
    %v1025 = vld [vmem:[%s1017 + $0x1c] sm:$0xf]
    %v1026 = vld [vmem:[%s1017 + $0x20] sm:$0xf]
    %v1027 = vld [vmem:[%s1017 + $0x24] sm:$0xf]
    %v1028 = vld [vmem:[%s1017 + $0x28] sm:$0xf]
    %v1029 = vld [vmem:[%s1017 + $0x2c] sm:$0xf]
    %v1030 = vld [vmem:[%s1017 + $0x30] sm:$0xf]
    %v1031 = vld [vmem:[%s1017 + $0x34] sm:$0xf]
    %v1032 = vld [vmem:[%s1017 + $0x38] sm:$0xf]
    %v1033 = vld [vmem:[%s1017 + $0x3c] sm:$0xf]
    %v1034 = vunpack.c.l.b16 %v806
    %v1035 = vunpack.c.l.b16 %v820
    %v1036 = vunpack.c.l.b16 %v834
    %v1037 = vunpack.c.l.b16 %v848
    %v1038 = vunpack.c.l.b16 %v862
    %v1039 = vunpack.c.l.b16 %v876
    %v1040 = vunpack.c.l.b16 %v890
    %v1041 = vunpack.c.l.b16 %v904
    %v1042 = vunpack.c.l.b16 %v918
    %v1043 = vunpack.c.l.b16 %v932
    %v1044 = vunpack.c.l.b16 %v946
    %v1045 = vunpack.c.l.b16 %v960
    %v1046 = vunpack.c.l.b16 %v974
    %v1047 = vunpack.c.l.b16 %v988
    %v1048 = vunpack.c.l.b16 %v1002
    %v1049 = vunpack.c.l.b16 %v1016
    %v1050 = vpack.c.b16 %v1035, %v1034
    %v1051 = vpack.c.b16 %v1037, %v1036
    %v1052 = vpack.c.b16 %v1039, %v1038
    %v1053 = vpack.c.b16 %v1041, %v1040
    %v1054 = vpack.c.b16 %v1043, %v1042
    %v1055 = vpack.c.b16 %v1045, %v1044
    %v1056 = vpack.c.b16 %v1047, %v1046
    %v1057 = vpack.c.b16 %v1049, %v1048
    %v1082 = vunpack.c.l.b16 %v1018
    %v1083 = vunpack.c.l.b16 %v1019
    %v1084 = vunpack.c.l.b16 %v1020
    %v1085 = vunpack.c.l.b16 %v1021
    %v1086 = vunpack.c.l.b16 %v1022
    %v1087 = vunpack.c.l.b16 %v1023
    %v1088 = vunpack.c.l.b16 %v1024
    %v1089 = vunpack.c.l.b16 %v1025
    %v1090 = vunpack.c.l.b16 %v1026
    %v1091 = vunpack.c.l.b16 %v1027
    %v1092 = vunpack.c.l.b16 %v1028
    %v1093 = vunpack.c.l.b16 %v1029
    %v1094 = vunpack.c.l.b16 %v1030
    %v1095 = vunpack.c.l.b16 %v1031
    %v1096 = vunpack.c.l.b16 %v1032
    %v1097 = vunpack.c.l.b16 %v1033
    %v1098 = vpack.c.b16 %v1083, %v1082
    %v1099 = vpack.c.b16 %v1085, %v1084
    %v1100 = vpack.c.b16 %v1087, %v1086
    %v1101 = vpack.c.b16 %v1089, %v1088
    %v1102 = vpack.c.b16 %v1091, %v1090
    %v1103 = vpack.c.b16 %v1093, %v1092
    %v1104 = vpack.c.b16 %v1095, %v1094
    %v1105 = vpack.c.b16 %v1097, %v1096
    %1114 = vmatprep.subr.bf16.mxu0 0
    %1115 = vmatpush1.bf16.msra.mxu0 %v1098
    %1116 = vmatprep.subr.bf16.mxu0 0
    %1117 = vmatpush1.bf16.msra.mxu0 %v1099
    %1118 = vmatprep.subr.bf16.mxu0 0
    %1119 = vmatpush1.bf16.msra.mxu0 %v1100
    %1120 = vmatprep.subr.bf16.mxu0 0
    %1121 = vmatpush1.bf16.msra.mxu0 %v1101
    %1122 = vmatprep.subr.bf16.mxu0 0
    %1123 = vmatpush1.bf16.msra.mxu0 %v1102
    %1124 = vmatprep.subr.bf16.mxu0 0
    %1125 = vmatpush1.bf16.msra.mxu0 %v1103
    %1126 = vmatprep.subr.bf16.mxu0 0
    %1127 = vmatpush1.bf16.msra.mxu0 %v1104
    %1128 = vmatprep.subr.bf16.mxu0 0
    %1129 = vmatpush1.bf16.msra.mxu0 %v1105
    %1130 = vmatprep.subr.bf16.mxu0 0
    %1131 = vmatpush1.bf16.msra.mxu0 0
    %1132 = vmatprep.subr.bf16.mxu0 0
    %1133 = vmatpush1.bf16.msra.mxu0 0
    %1134 = vmatprep.subr.bf16.mxu0 0
    %1135 = vmatpush1.bf16.msra.mxu0 0
    %1136 = vmatprep.subr.bf16.mxu0 0
    %1137 = vmatpush1.bf16.msra.mxu0 0
    %1138 = vmatprep.subr.bf16.mxu0 0
    %1139 = vmatpush1.bf16.msra.mxu0 0
    %1140 = vmatprep.subr.bf16.mxu0 0
    %1141 = vmatpush1.bf16.msra.mxu0 0
    %1142 = vmatprep.subr.bf16.mxu0 0
    %1143 = vmatpush1.bf16.msra.mxu0 0
    %1144 = vmatprep.subr.bf16.mxu0 0
    %1145 = vmatpush1.bf16.msra.mxu0 0
    %1146 = vmatprep.mubr.bf16.mxu0 0
    %1147 = vmatmul.mubr.bf16.gmra.mrb[0].mxu0 %v1050
    %v1148 = vpop.f32.mrb[0].mxu0
    %v1149 = vadd.f32 0.0, %v1148
    %v1150 = vpop.f32.mrb[0].mxu0
    %v1151 = vpop.f32.mrb[0].mxu0
    %v1152 = vadd.f32 0.0, %v1151
    %v1153 = vpop.f32.mrb[0].mxu0
    %1154 = vmatprep.mubr.bf16.mxu0 0
    %1155 = vmatmul.mubr.bf16.gmra.mrb[0].mxu0 %v1051
    %v1156 = vpop.f32.mrb[0].mxu0
    %v1157 = vadd.f32 0.0, %v1156
    %v1158 = vpop.f32.mrb[0].mxu0
    %v1159 = vpop.f32.mrb[0].mxu0
    %v1160 = vadd.f32 0.0, %v1159
    %v1161 = vpop.f32.mrb[0].mxu0
    %1162 = vmatprep.mubr.bf16.mxu0 0
    %1163 = vmatmul.mubr.bf16.gmra.mrb[0].mxu0 %v1052
    %v1164 = vpop.f32.mrb[0].mxu0
    %v1165 = vadd.f32 0.0, %v1164
    %v1166 = vpop.f32.mrb[0].mxu0
    %v1167 = vpop.f32.mrb[0].mxu0
    %v1168 = vadd.f32 0.0, %v1167
    %v1169 = vpop.f32.mrb[0].mxu0
    %1170 = vmatprep.mubr.bf16.mxu0 0
    %1171 = vmatmul.mubr.bf16.gmra.mrb[0].mxu0 %v1053
    %v1172 = vpop.f32.mrb[0].mxu0
    %v1173 = vadd.f32 0.0, %v1172
    %v1174 = vpop.f32.mrb[0].mxu0
    %v1175 = vpop.f32.mrb[0].mxu0
    %v1176 = vadd.f32 0.0, %v1175
    %v1177 = vpop.f32.mrb[0].mxu0
    %1178 = vmatprep.mubr.bf16.mxu0 0
    %1179 = vmatmul.mubr.bf16.gmra.mrb[0].mxu0 %v1054
    %v1180 = vpop.f32.mrb[0].mxu0
    %v1181 = vadd.f32 0.0, %v1180
    %v1182 = vpop.f32.mrb[0].mxu0
    %v1183 = vpop.f32.mrb[0].mxu0
    %v1184 = vadd.f32 0.0, %v1183
    %v1185 = vpop.f32.mrb[0].mxu0
    %1186 = vmatprep.mubr.bf16.mxu0 0
    %1187 = vmatmul.mubr.bf16.gmra.mrb[0].mxu0 %v1055
    %v1188 = vpop.f32.mrb[0].mxu0
    %v1189 = vadd.f32 0.0, %v1188
    %v1190 = vpop.f32.mrb[0].mxu0
    %v1191 = vpop.f32.mrb[0].mxu0
    %v1192 = vadd.f32 0.0, %v1191
    %v1193 = vpop.f32.mrb[0].mxu0
    %1194 = vmatprep.mubr.bf16.mxu0 0
    %1195 = vmatmul.mubr.bf16.gmra.mrb[0].mxu0 %v1056
    %v1196 = vpop.f32.mrb[0].mxu0
    %v1197 = vadd.f32 0.0, %v1196
    %v1198 = vpop.f32.mrb[0].mxu0
    %v1199 = vpop.f32.mrb[0].mxu0
    %v1200 = vadd.f32 0.0, %v1199
    %v1201 = vpop.f32.mrb[0].mxu0
    %1202 = vmatprep.mubr.bf16.mxu0 0
    %1203 = vmatmul.mubr.bf16.gmra.mrb[0].mxu0 %v1057
    %v1204 = vpop.f32.mrb[0].mxu0
    %v1205 = vadd.f32 0.0, %v1204
    %v1206 = vpop.f32.mrb[0].mxu0
    %v1207 = vpop.f32.mrb[0].mxu0
    %v1208 = vadd.f32 0.0, %v1207
    %v1209 = vpop.f32.mrb[0].mxu0
    %1210 = vdwg.mxu0
    %v1211 = vpack.c.b16 %v728, %v726
    %v1212 = vpack.c.b16 %v732, %v730
    %v1213 = vpack.c.b16 %v736, %v734
    %v1214 = vpack.c.b16 %v740, %v738
    %v1215 = vpack.c.b16 %v744, %v742
    %v1216 = vpack.c.b16 %v748, %v746
    %v1217 = vpack.c.b16 %v752, %v750
    %v1218 = vpack.c.b16 %v756, %v754
    %v1243 = vunpack.c.l.b16 %v694
    %v1244 = vunpack.c.l.b16 %v695
    %v1245 = vunpack.c.l.b16 %v696
    %v1246 = vunpack.c.l.b16 %v697
    %v1247 = vunpack.c.l.b16 %v698
    %v1248 = vunpack.c.l.b16 %v699
    %v1249 = vunpack.c.l.b16 %v700
    %v1250 = vunpack.c.l.b16 %v701
    %v1251 = vunpack.c.l.b16 %v702
    %v1252 = vunpack.c.l.b16 %v703
    %v1253 = vunpack.c.l.b16 %v704
    %v1254 = vunpack.c.l.b16 %v705
    %v1255 = vunpack.c.l.b16 %v706
    %v1256 = vunpack.c.l.b16 %v707
    %v1257 = vunpack.c.l.b16 %v708
    %v1258 = vunpack.c.l.b16 %v709
    %v1259 = vpack.c.b16 %v1244, %v1243
    %v1260 = vpack.c.b16 %v1246, %v1245
    %v1261 = vpack.c.b16 %v1248, %v1247
    %v1262 = vpack.c.b16 %v1250, %v1249
    %v1263 = vpack.c.b16 %v1252, %v1251
    %v1264 = vpack.c.b16 %v1254, %v1253
    %v1265 = vpack.c.b16 %v1256, %v1255
    %v1266 = vpack.c.b16 %v1258, %v1257
    %1275 = vmatprep.subr.bf16.mxu0 0
    %1276 = vmatpush1.bf16.msra.mxu0 %v1259
    %1277 = vmatprep.subr.bf16.mxu0 0
    %1278 = vmatpush1.bf16.msra.mxu0 %v1260
    %1279 = vmatprep.subr.bf16.mxu0 0
    %1280 = vmatpush1.bf16.msra.mxu0 %v1261
    %1281 = vmatprep.subr.bf16.mxu0 0
    %1282 = vmatpush1.bf16.msra.mxu0 %v1262
    %1283 = vmatprep.subr.bf16.mxu0 0
    %1284 = vmatpush1.bf16.msra.mxu0 %v1263
    %1285 = vmatprep.subr.bf16.mxu0 0
    %1286 = vmatpush1.bf16.msra.mxu0 %v1264
    %1287 = vmatprep.subr.bf16.mxu0 0
    %1288 = vmatpush1.bf16.msra.mxu0 %v1265
    %1289 = vmatprep.subr.bf16.mxu0 0
    %1290 = vmatpush1.bf16.msra.mxu0 %v1266
    %1291 = vmatprep.subr.bf16.mxu0 0
    %1292 = vmatpush1.bf16.msra.mxu0 0
    %1293 = vmatprep.subr.bf16.mxu0 0
    %1294 = vmatpush1.bf16.msra.mxu0 0
    %1295 = vmatprep.subr.bf16.mxu0 0
    %1296 = vmatpush1.bf16.msra.mxu0 0
    %1297 = vmatprep.subr.bf16.mxu0 0
    %1298 = vmatpush1.bf16.msra.mxu0 0
    %1299 = vmatprep.subr.bf16.mxu0 0
    %1300 = vmatpush1.bf16.msra.mxu0 0
    %1301 = vmatprep.subr.bf16.mxu0 0
    %1302 = vmatpush1.bf16.msra.mxu0 0
    %1303 = vmatprep.subr.bf16.mxu0 0
    %1304 = vmatpush1.bf16.msra.mxu0 0
    %1305 = vmatprep.subr.bf16.mxu0 0
    %1306 = vmatpush1.bf16.msra.mxu0 0
    %1307 = vmatprep.mubr.bf16.mxu0 0
    %1308 = vmatmul.mubr.bf16.gmra.mrb[0].mxu0 %v1211
    %v1309 = vpop.f32.mrb[0].mxu0
    %v1310 = vadd.f32 %v1149, %v1309
    %v1311 = vpop.f32.mrb[0].mxu0
    %v1312 = vpop.f32.mrb[0].mxu0
    %v1313 = vadd.f32 %v1152, %v1312
    %v1314 = vpop.f32.mrb[0].mxu0
    %1315 = vmatprep.mubr.bf16.mxu0 0
    %1316 = vmatmul.mubr.bf16.gmra.mrb[0].mxu0 %v1212
    %v1317 = vpop.f32.mrb[0].mxu0
    %v1318 = vadd.f32 %v1157, %v1317
    %v1319 = vpop.f32.mrb[0].mxu0
    %v1320 = vpop.f32.mrb[0].mxu0
    %v1321 = vadd.f32 %v1160, %v1320
    %v1322 = vpop.f32.mrb[0].mxu0
    %1323 = vmatprep.mubr.bf16.mxu0 0
    %1324 = vmatmul.mubr.bf16.gmra.mrb[0].mxu0 %v1213
    %v1325 = vpop.f32.mrb[0].mxu0
    %v1326 = vadd.f32 %v1165, %v1325
    %v1327 = vpop.f32.mrb[0].mxu0
    %v1328 = vpop.f32.mrb[0].mxu0
    %v1329 = vadd.f32 %v1168, %v1328
    %v1330 = vpop.f32.mrb[0].mxu0
    %1331 = vmatprep.mubr.bf16.mxu0 0
    %1332 = vmatmul.mubr.bf16.gmra.mrb[0].mxu0 %v1214
    %v1333 = vpop.f32.mrb[0].mxu0
    %v1334 = vadd.f32 %v1173, %v1333
    %v1335 = vpop.f32.mrb[0].mxu0
    %v1336 = vpop.f32.mrb[0].mxu0
    %v1337 = vadd.f32 %v1176, %v1336
    %v1338 = vpop.f32.mrb[0].mxu0
    %1339 = vmatprep.mubr.bf16.mxu0 0
    %1340 = vmatmul.mubr.bf16.gmra.mrb[0].mxu0 %v1215
    %v1341 = vpop.f32.mrb[0].mxu0
    %v1342 = vadd.f32 %v1181, %v1341
    %v1343 = vpop.f32.mrb[0].mxu0
    %v1344 = vpop.f32.mrb[0].mxu0
    %v1345 = vadd.f32 %v1184, %v1344
    %v1346 = vpop.f32.mrb[0].mxu0
    %1347 = vmatprep.mubr.bf16.mxu0 0
    %1348 = vmatmul.mubr.bf16.gmra.mrb[0].mxu0 %v1216
    %v1349 = vpop.f32.mrb[0].mxu0
    %v1350 = vadd.f32 %v1189, %v1349
    %v1351 = vpop.f32.mrb[0].mxu0
    %v1352 = vpop.f32.mrb[0].mxu0
    %v1353 = vadd.f32 %v1192, %v1352
    %v1354 = vpop.f32.mrb[0].mxu0
    %1355 = vmatprep.mubr.bf16.mxu0 0
    %1356 = vmatmul.mubr.bf16.gmra.mrb[0].mxu0 %v1217
    %v1357 = vpop.f32.mrb[0].mxu0
    %v1358 = vadd.f32 %v1197, %v1357
    %v1359 = vpop.f32.mrb[0].mxu0
    %v1360 = vpop.f32.mrb[0].mxu0
    %v1361 = vadd.f32 %v1200, %v1360
    %v1362 = vpop.f32.mrb[0].mxu0
    %1363 = vmatprep.mubr.bf16.mxu0 0
    %1364 = vmatmul.mubr.bf16.gmra.mrb[0].mxu0 %v1218
    %v1365 = vpop.f32.mrb[0].mxu0
    %v1366 = vadd.f32 %v1205, %v1365
    %v1367 = vpop.f32.mrb[0].mxu0
    %v1368 = vpop.f32.mrb[0].mxu0
    %v1369 = vadd.f32 %v1208, %v1368
    %v1370 = vpop.f32.mrb[0].mxu0
    %1371 = vdwg.mxu0
    %vm1372 = vcmask 1042432
    %vm1373 = vcmask 1046532
    %vm1374 = vmor %vm1372, %vm1373
    %v1375 = vrot.slane %v758, 5
    %v1376 = vrot.slane %v1375, 4
    %v1377 = vrot.slane %v759, 5
    %v1378 = vsel %vm1374, %v1376, %v1377
    %v1379 = vrot.slane %v760, 5
    %v1380 = vrot.slane %v1379, 4
    %v1381 = vrot.slane %v761, 5
    %v1382 = vsel %vm1374, %v1380, %v1381
    %v1383 = vrot.slane %v762, 5
    %v1384 = vrot.slane %v1383, 4
    %v1385 = vrot.slane %v763, 5
    %v1386 = vsel %vm1374, %v1384, %v1385
    %v1387 = vrot.slane %v764, 5
    %v1388 = vrot.slane %v1387, 4
    %v1389 = vrot.slane %v765, 5
    %v1390 = vsel %vm1374, %v1388, %v1389
    %v1391 = vrot.slane %v766, 5
    %v1392 = vrot.slane %v1391, 4
    %v1393 = vrot.slane %v767, 5
    %v1394 = vsel %vm1374, %v1392, %v1393
    %v1395 = vrot.slane %v768, 5
    %v1396 = vrot.slane %v1395, 4
    %v1397 = vrot.slane %v769, 5
    %v1398 = vsel %vm1374, %v1396, %v1397
    %v1399 = vrot.slane %v770, 5
    %v1400 = vrot.slane %v1399, 4
    %v1401 = vrot.slane %v771, 5
    %v1402 = vsel %vm1374, %v1400, %v1401
    %v1403 = vrot.slane %v772, 5
    %v1404 = vrot.slane %v1403, 4
    %v1405 = vrot.slane %v773, 5
    %v1406 = vsel %vm1374, %v1404, %v1405
    %v1407 = vrot.slane %v774, 5
    %v1408 = vrot.slane %v1407, 4
    %v1409 = vrot.slane %v775, 5
    %v1410 = vsel %vm1374, %v1408, %v1409
    %v1411 = vrot.slane %v776, 5
    %v1412 = vrot.slane %v1411, 4
    %v1413 = vrot.slane %v777, 5
    %v1414 = vsel %vm1374, %v1412, %v1413
    %v1415 = vrot.slane %v778, 5
    %v1416 = vrot.slane %v1415, 4
    %v1417 = vrot.slane %v779, 5
    %v1418 = vsel %vm1374, %v1416, %v1417
    %v1419 = vrot.slane %v780, 5
    %v1420 = vrot.slane %v1419, 4
    %v1421 = vrot.slane %v781, 5
    %v1422 = vsel %vm1374, %v1420, %v1421
    %v1423 = vrot.slane %v782, 5
    %v1424 = vrot.slane %v1423, 4
    %v1425 = vrot.slane %v783, 5
    %v1426 = vsel %vm1374, %v1424, %v1425
    %v1427 = vrot.slane %v784, 5
    %v1428 = vrot.slane %v1427, 4
    %v1429 = vrot.slane %v785, 5
    %v1430 = vsel %vm1374, %v1428, %v1429
    %v1431 = vrot.slane %v786, 5
    %v1432 = vrot.slane %v1431, 4
    %v1433 = vrot.slane %v787, 5
    %v1434 = vsel %vm1374, %v1432, %v1433
    %v1435 = vrot.slane %v788, 5
    %v1436 = vrot.slane %v1435, 4
    %v1437 = vrot.slane %v789, 5
    %v1438 = vsel %vm1374, %v1436, %v1437
    %s1439 = scalar_lea.vmem [#allocation7], 128
    %v1440 = vld [vmem:[%s1439] sm:$0xf]
    %v1441 = vld [vmem:[%s1439 + $0x4] sm:$0xf]
    %v1442 = vld [vmem:[%s1439 + $0x8] sm:$0xf]
    %v1443 = vld [vmem:[%s1439 + $0xc] sm:$0xf]
    %v1444 = vld [vmem:[%s1439 + $0x10] sm:$0xf]
    %v1445 = vld [vmem:[%s1439 + $0x14] sm:$0xf]
    %v1446 = vld [vmem:[%s1439 + $0x18] sm:$0xf]
    %v1447 = vld [vmem:[%s1439 + $0x1c] sm:$0xf]
    %v1448 = vld [vmem:[%s1439 + $0x20] sm:$0xf]
    %v1449 = vld [vmem:[%s1439 + $0x24] sm:$0xf]
    %v1450 = vld [vmem:[%s1439 + $0x28] sm:$0xf]
    %v1451 = vld [vmem:[%s1439 + $0x2c] sm:$0xf]
    %v1452 = vld [vmem:[%s1439 + $0x30] sm:$0xf]
    %v1453 = vld [vmem:[%s1439 + $0x34] sm:$0xf]
    %v1454 = vld [vmem:[%s1439 + $0x38] sm:$0xf]
    %v1455 = vld [vmem:[%s1439 + $0x3c] sm:$0xf]
    %v1456 = vunpack.c.l.b16 %v1378
    %v1457 = vunpack.c.l.b16 %v1382
    %v1458 = vunpack.c.l.b16 %v1386
    %v1459 = vunpack.c.l.b16 %v1390
    %v1460 = vunpack.c.l.b16 %v1394
    %v1461 = vunpack.c.l.b16 %v1398
    %v1462 = vunpack.c.l.b16 %v1402
    %v1463 = vunpack.c.l.b16 %v1406
    %v1464 = vunpack.c.l.b16 %v1410
    %v1465 = vunpack.c.l.b16 %v1414
    %v1466 = vunpack.c.l.b16 %v1418
    %v1467 = vunpack.c.l.b16 %v1422
    %v1468 = vunpack.c.l.b16 %v1426
    %v1469 = vunpack.c.l.b16 %v1430
    %v1470 = vunpack.c.l.b16 %v1434
    %v1471 = vunpack.c.l.b16 %v1438
    %v1472 = vpack.c.b16 %v1457, %v1456
    %v1473 = vpack.c.b16 %v1459, %v1458
    %v1474 = vpack.c.b16 %v1461, %v1460
    %v1475 = vpack.c.b16 %v1463, %v1462
    %v1476 = vpack.c.b16 %v1465, %v1464
    %v1477 = vpack.c.b16 %v1467, %v1466
    %v1478 = vpack.c.b16 %v1469, %v1468
    %v1479 = vpack.c.b16 %v1471, %v1470
    %v1504 = vunpack.c.l.b16 %v1440
    %v1505 = vunpack.c.l.b16 %v1441
    %v1506 = vunpack.c.l.b16 %v1442
    %v1507 = vunpack.c.l.b16 %v1443
    %v1508 = vunpack.c.l.b16 %v1444
    %v1509 = vunpack.c.l.b16 %v1445
    %v1510 = vunpack.c.l.b16 %v1446
    %v1511 = vunpack.c.l.b16 %v1447
    %v1512 = vunpack.c.l.b16 %v1448
    %v1513 = vunpack.c.l.b16 %v1449
    %v1514 = vunpack.c.l.b16 %v1450
    %v1515 = vunpack.c.l.b16 %v1451
    %v1516 = vunpack.c.l.b16 %v1452
    %v1517 = vunpack.c.l.b16 %v1453
    %v1518 = vunpack.c.l.b16 %v1454
    %v1519 = vunpack.c.l.b16 %v1455
    %v1520 = vpack.c.b16 %v1505, %v1504
    %v1521 = vpack.c.b16 %v1507, %v1506
    %v1522 = vpack.c.b16 %v1509, %v1508
    %v1523 = vpack.c.b16 %v1511, %v1510
    %v1524 = vpack.c.b16 %v1513, %v1512
    %v1525 = vpack.c.b16 %v1515, %v1514
    %v1526 = vpack.c.b16 %v1517, %v1516
    %v1527 = vpack.c.b16 %v1519, %v1518
    %1536 = vmatprep.subr.bf16.mxu0 0
    %1537 = vmatpush1.bf16.msra.mxu0 %v1520
    %1538 = vmatprep.subr.bf16.mxu0 0
    %1539 = vmatpush1.bf16.msra.mxu0 %v1521
    %1540 = vmatprep.subr.bf16.mxu0 0
    %1541 = vmatpush1.bf16.msra.mxu0 %v1522
    %1542 = vmatprep.subr.bf16.mxu0 0
    %1543 = vmatpush1.bf16.msra.mxu0 %v1523
    %1544 = vmatprep.subr.bf16.mxu0 0
    %1545 = vmatpush1.bf16.msra.mxu0 %v1524
    %1546 = vmatprep.subr.bf16.mxu0 0
    %1547 = vmatpush1.bf16.msra.mxu0 %v1525
    %1548 = vmatprep.subr.bf16.mxu0 0
    %1549 = vmatpush1.bf16.msra.mxu0 %v1526
    %1550 = vmatprep.subr.bf16.mxu0 0
    %1551 = vmatpush1.bf16.msra.mxu0 %v1527
    %1552 = vmatprep.subr.bf16.mxu0 0
    %1553 = vmatpush1.bf16.msra.mxu0 0
    %1554 = vmatprep.subr.bf16.mxu0 0
    %1555 = vmatpush1.bf16.msra.mxu0 0
    %1556 = vmatprep.subr.bf16.mxu0 0
    %1557 = vmatpush1.bf16.msra.mxu0 0
    %1558 = vmatprep.subr.bf16.mxu0 0
    %1559 = vmatpush1.bf16.msra.mxu0 0
    %1560 = vmatprep.subr.bf16.mxu0 0
    %1561 = vmatpush1.bf16.msra.mxu0 0
    %1562 = vmatprep.subr.bf16.mxu0 0
    %1563 = vmatpush1.bf16.msra.mxu0 0
    %1564 = vmatprep.subr.bf16.mxu0 0
    %1565 = vmatpush1.bf16.msra.mxu0 0
    %1566 = vmatprep.subr.bf16.mxu0 0
    %1567 = vmatpush1.bf16.msra.mxu0 0
    %1568 = vmatprep.mubr.bf16.mxu0 0
    %1569 = vmatmul.mubr.bf16.gmra.mrb[0].mxu0 %v1472
    %v1570 = vpop.f32.mrb[0].mxu0
    %v1571 = vadd.f32 0.0, %v1570
    %v1572 = vpop.f32.mrb[0].mxu0
    %v1573 = vpop.f32.mrb[0].mxu0
    %v1574 = vadd.f32 0.0, %v1573
    %v1575 = vpop.f32.mrb[0].mxu0
    %1576 = vmatprep.mubr.bf16.mxu0 0
    %1577 = vmatmul.mubr.bf16.gmra.mrb[0].mxu0 %v1473
    %v1578 = vpop.f32.mrb[0].mxu0
    %v1579 = vadd.f32 0.0, %v1578
    %v1580 = vpop.f32.mrb[0].mxu0
    %v1581 = vpop.f32.mrb[0].mxu0
    %v1582 = vadd.f32 0.0, %v1581
    %v1583 = vpop.f32.mrb[0].mxu0
    %1584 = vmatprep.mubr.bf16.mxu0 0
    %1585 = vmatmul.mubr.bf16.gmra.mrb[0].mxu0 %v1474
    %v1586 = vpop.f32.mrb[0].mxu0
    %v1587 = vadd.f32 0.0, %v1586
    %v1588 = vpop.f32.mrb[0].mxu0
    %v1589 = vpop.f32.mrb[0].mxu0
    %v1590 = vadd.f32 0.0, %v1589
    %v1591 = vpop.f32.mrb[0].mxu0
    %1592 = vmatprep.mubr.bf16.mxu0 0
    %1593 = vmatmul.mubr.bf16.gmra.mrb[0].mxu0 %v1475
    %v1594 = vpop.f32.mrb[0].mxu0
    %v1595 = vadd.f32 0.0, %v1594
    %v1596 = vpop.f32.mrb[0].mxu0
    %v1597 = vpop.f32.mrb[0].mxu0
    %v1598 = vadd.f32 0.0, %v1597
    %v1599 = vpop.f32.mrb[0].mxu0
    %1600 = vmatprep.mubr.bf16.mxu0 0
    %1601 = vmatmul.mubr.bf16.gmra.mrb[0].mxu0 %v1476
    %v1602 = vpop.f32.mrb[0].mxu0
    %v1603 = vadd.f32 0.0, %v1602
    %v1604 = vpop.f32.mrb[0].mxu0
    %v1605 = vpop.f32.mrb[0].mxu0
    %v1606 = vadd.f32 0.0, %v1605
    %v1607 = vpop.f32.mrb[0].mxu0
    %1608 = vmatprep.mubr.bf16.mxu0 0
    %1609 = vmatmul.mubr.bf16.gmra.mrb[0].mxu0 %v1477
    %v1610 = vpop.f32.mrb[0].mxu0
    %v1611 = vadd.f32 0.0, %v1610
    %v1612 = vpop.f32.mrb[0].mxu0
    %v1613 = vpop.f32.mrb[0].mxu0
    %v1614 = vadd.f32 0.0, %v1613
    %v1615 = vpop.f32.mrb[0].mxu0
    %1616 = vmatprep.mubr.bf16.mxu0 0
    %1617 = vmatmul.mubr.bf16.gmra.mrb[0].mxu0 %v1478
    %v1618 = vpop.f32.mrb[0].mxu0
    %v1619 = vadd.f32 0.0, %v1618
    %v1620 = vpop.f32.mrb[0].mxu0
    %v1621 = vpop.f32.mrb[0].mxu0
    %v1622 = vadd.f32 0.0, %v1621
    %v1623 = vpop.f32.mrb[0].mxu0
    %1624 = vmatprep.mubr.bf16.mxu0 0
    %1625 = vmatmul.mubr.bf16.gmra.mrb[0].mxu0 %v1479
    %v1626 = vpop.f32.mrb[0].mxu0
    %v1627 = vadd.f32 0.0, %v1626
    %v1628 = vpop.f32.mrb[0].mxu0
    %v1629 = vpop.f32.mrb[0].mxu0
    %v1630 = vadd.f32 0.0, %v1629
    %v1631 = vpop.f32.mrb[0].mxu0
    %1632 = vdwg.mxu0
    %v1633 = vadd.f32 %v1310, %v1571
    %v1634 = vadd.f32 %v1313, %v1574
    %v1635 = vadd.f32 %v1318, %v1579
    %v1636 = vadd.f32 %v1321, %v1582
    %v1637 = vadd.f32 %v1326, %v1587
    %v1638 = vadd.f32 %v1329, %v1590
    %v1639 = vadd.f32 %v1334, %v1595
    %v1640 = vadd.f32 %v1337, %v1598
    %v1641 = vadd.f32 %v1342, %v1603
    %v1642 = vadd.f32 %v1345, %v1606
    %v1643 = vadd.f32 %v1350, %v1611
    %v1644 = vadd.f32 %v1353, %v1614
    %v1645 = vadd.f32 %v1358, %v1619
    %v1646 = vadd.f32 %v1361, %v1622
    %v1647 = vadd.f32 %v1366, %v1627
    %v1648 = vadd.f32 %v1369, %v1630
    %s1649 = scalar_lea.vmem [#allocation7], 192
    %v1650 = vld [vmem:[%s1649] sm:$0xf]
    %v1651 = vld [vmem:[%s1649 + $0x4] sm:$0xf]
    %v1652 = vld [vmem:[%s1649 + $0x8] sm:$0xf]
    %v1653 = vld [vmem:[%s1649 + $0xc] sm:$0xf]
    %v1654 = vld [vmem:[%s1649 + $0x10] sm:$0xf]
    %v1655 = vld [vmem:[%s1649 + $0x14] sm:$0xf]
    %v1656 = vld [vmem:[%s1649 + $0x18] sm:$0xf]
    %v1657 = vld [vmem:[%s1649 + $0x1c] sm:$0xf]
    %v1658 = vld [vmem:[%s1649 + $0x20] sm:$0xf]
    %v1659 = vld [vmem:[%s1649 + $0x24] sm:$0xf]
    %v1660 = vld [vmem:[%s1649 + $0x28] sm:$0xf]
    %v1661 = vld [vmem:[%s1649 + $0x2c] sm:$0xf]
    %v1662 = vld [vmem:[%s1649 + $0x30] sm:$0xf]
    %v1663 = vld [vmem:[%s1649 + $0x34] sm:$0xf]
    %v1664 = vld [vmem:[%s1649 + $0x38] sm:$0xf]
    %v1665 = vld [vmem:[%s1649 + $0x3c] sm:$0xf]
    %v1668 = vunpack.c.l.b16 %v682
    %v1669 = vunpack.c.l.b16 %v692
    %v1670 = vpack.c.b16 %v730, %v728
    %v1671 = vpack.c.b16 %v734, %v732
    %v1672 = vpack.c.b16 %v738, %v736
    %v1673 = vpack.c.b16 %v1668, %v740
    %v1674 = vpack.c.b16 %v746, %v744
    %v1675 = vpack.c.b16 %v750, %v748
    %v1676 = vpack.c.b16 %v754, %v752
    %v1677 = vpack.c.b16 %v1669, %v756
    %v1702 = vunpack.c.l.b16 %v1650
    %v1703 = vunpack.c.l.b16 %v1651
    %v1704 = vunpack.c.l.b16 %v1652
    %v1705 = vunpack.c.l.b16 %v1653
    %v1706 = vunpack.c.l.b16 %v1654
    %v1707 = vunpack.c.l.b16 %v1655
    %v1708 = vunpack.c.l.b16 %v1656
    %v1709 = vunpack.c.l.b16 %v1657
    %v1710 = vunpack.c.l.b16 %v1658
    %v1711 = vunpack.c.l.b16 %v1659
    %v1712 = vunpack.c.l.b16 %v1660
    %v1713 = vunpack.c.l.b16 %v1661
    %v1714 = vunpack.c.l.b16 %v1662
    %v1715 = vunpack.c.l.b16 %v1663
    %v1716 = vunpack.c.l.b16 %v1664
    %v1717 = vunpack.c.l.b16 %v1665
    %v1718 = vpack.c.b16 %v1703, %v1702
    %v1719 = vpack.c.b16 %v1705, %v1704
    %v1720 = vpack.c.b16 %v1707, %v1706
    %v1721 = vpack.c.b16 %v1709, %v1708
    %v1722 = vpack.c.b16 %v1711, %v1710
    %v1723 = vpack.c.b16 %v1713, %v1712
    %v1724 = vpack.c.b16 %v1715, %v1714
    %v1725 = vpack.c.b16 %v1717, %v1716
    %1734 = vmatprep.subr.bf16.mxu0 0
    %1735 = vmatpush1.bf16.msra.mxu0 %v1718
    %1736 = vmatprep.subr.bf16.mxu0 0
    %1737 = vmatpush1.bf16.msra.mxu0 %v1719
    %1738 = vmatprep.subr.bf16.mxu0 0
    %1739 = vmatpush1.bf16.msra.mxu0 %v1720
    %1740 = vmatprep.subr.bf16.mxu0 0
    %1741 = vmatpush1.bf16.msra.mxu0 %v1721
    %1742 = vmatprep.subr.bf16.mxu0 0
    %1743 = vmatpush1.bf16.msra.mxu0 %v1722
    %1744 = vmatprep.subr.bf16.mxu0 0
    %1745 = vmatpush1.bf16.msra.mxu0 %v1723
    %1746 = vmatprep.subr.bf16.mxu0 0
    %1747 = vmatpush1.bf16.msra.mxu0 %v1724
    %1748 = vmatprep.subr.bf16.mxu0 0
    %1749 = vmatpush1.bf16.msra.mxu0 %v1725
    %1750 = vmatprep.subr.bf16.mxu0 0
    %1751 = vmatpush1.bf16.msra.mxu0 0
    %1752 = vmatprep.subr.bf16.mxu0 0
    %1753 = vmatpush1.bf16.msra.mxu0 0
    %1754 = vmatprep.subr.bf16.mxu0 0
    %1755 = vmatpush1.bf16.msra.mxu0 0
    %1756 = vmatprep.subr.bf16.mxu0 0
    %1757 = vmatpush1.bf16.msra.mxu0 0
    %1758 = vmatprep.subr.bf16.mxu0 0
    %1759 = vmatpush1.bf16.msra.mxu0 0
    %1760 = vmatprep.subr.bf16.mxu0 0
    %1761 = vmatpush1.bf16.msra.mxu0 0
    %1762 = vmatprep.subr.bf16.mxu0 0
    %1763 = vmatpush1.bf16.msra.mxu0 0
    %1764 = vmatprep.subr.bf16.mxu0 0
    %1765 = vmatpush1.bf16.msra.mxu0 0
    %1766 = vmatprep.mubr.bf16.mxu0 0
    %1767 = vmatmul.mubr.bf16.gmra.mrb[0].mxu0 %v1670
    %v1768 = vpop.f32.mrb[0].mxu0
    %v1769 = vadd.f32 0.0, %v1768
    %v1770 = vpop.f32.mrb[0].mxu0
    %v1771 = vpop.f32.mrb[0].mxu0
    %v1772 = vadd.f32 0.0, %v1771
    %v1773 = vpop.f32.mrb[0].mxu0
    %1774 = vmatprep.mubr.bf16.mxu0 0
    %1775 = vmatmul.mubr.bf16.gmra.mrb[0].mxu0 %v1671
    %v1776 = vpop.f32.mrb[0].mxu0
    %v1777 = vadd.f32 0.0, %v1776
    %v1778 = vpop.f32.mrb[0].mxu0
    %v1779 = vpop.f32.mrb[0].mxu0
    %v1780 = vadd.f32 0.0, %v1779
    %v1781 = vpop.f32.mrb[0].mxu0
    %1782 = vmatprep.mubr.bf16.mxu0 0
    %1783 = vmatmul.mubr.bf16.gmra.mrb[0].mxu0 %v1672
    %v1784 = vpop.f32.mrb[0].mxu0
    %v1785 = vadd.f32 0.0, %v1784
    %v1786 = vpop.f32.mrb[0].mxu0
    %v1787 = vpop.f32.mrb[0].mxu0
    %v1788 = vadd.f32 0.0, %v1787
    %v1789 = vpop.f32.mrb[0].mxu0
    %1790 = vmatprep.mubr.bf16.mxu0 0
    %1791 = vmatmul.mubr.bf16.gmra.mrb[0].mxu0 %v1673
    %v1792 = vpop.f32.mrb[0].mxu0
    %v1793 = vadd.f32 0.0, %v1792
    %v1794 = vpop.f32.mrb[0].mxu0
    %v1795 = vpop.f32.mrb[0].mxu0
    %v1796 = vadd.f32 0.0, %v1795
    %v1797 = vpop.f32.mrb[0].mxu0
    %1798 = vmatprep.mubr.bf16.mxu0 0
    %1799 = vmatmul.mubr.bf16.gmra.mrb[0].mxu0 %v1674
    %v1800 = vpop.f32.mrb[0].mxu0
    %v1801 = vadd.f32 0.0, %v1800
    %v1802 = vpop.f32.mrb[0].mxu0
    %v1803 = vpop.f32.mrb[0].mxu0
    %v1804 = vadd.f32 0.0, %v1803
    %v1805 = vpop.f32.mrb[0].mxu0
    %1806 = vmatprep.mubr.bf16.mxu0 0
    %1807 = vmatmul.mubr.bf16.gmra.mrb[0].mxu0 %v1675
    %v1808 = vpop.f32.mrb[0].mxu0
    %v1809 = vadd.f32 0.0, %v1808
    %v1810 = vpop.f32.mrb[0].mxu0
    %v1811 = vpop.f32.mrb[0].mxu0
    %v1812 = vadd.f32 0.0, %v1811
    %v1813 = vpop.f32.mrb[0].mxu0
    %1814 = vmatprep.mubr.bf16.mxu0 0
    %1815 = vmatmul.mubr.bf16.gmra.mrb[0].mxu0 %v1676
    %v1816 = vpop.f32.mrb[0].mxu0
    %v1817 = vadd.f32 0.0, %v1816
    %v1818 = vpop.f32.mrb[0].mxu0
    %v1819 = vpop.f32.mrb[0].mxu0
    %v1820 = vadd.f32 0.0, %v1819
    %v1821 = vpop.f32.mrb[0].mxu0
    %1822 = vmatprep.mubr.bf16.mxu0 0
    %1823 = vmatmul.mubr.bf16.gmra.mrb[0].mxu0 %v1677
    %v1824 = vpop.f32.mrb[0].mxu0
    %v1825 = vadd.f32 0.0, %v1824
    %v1826 = vpop.f32.mrb[0].mxu0
    %v1827 = vpop.f32.mrb[0].mxu0
    %v1828 = vadd.f32 0.0, %v1827
    %v1829 = vpop.f32.mrb[0].mxu0
    %1830 = vdwg.mxu0
    %v1831 = vadd.f32 %v1633, %v1769
    %v1832 = vadd.f32 %v1634, %v1772
    %v1833 = vadd.f32 %v1635, %v1777
    %v1834 = vadd.f32 %v1636, %v1780
    %v1835 = vadd.f32 %v1637, %v1785
    %v1836 = vadd.f32 %v1638, %v1788
    %v1837 = vadd.f32 %v1639, %v1793
    %v1838 = vadd.f32 %v1640, %v1796
    %v1839 = vadd.f32 %v1641, %v1801
    %v1840 = vadd.f32 %v1642, %v1804
    %v1841 = vadd.f32 %v1643, %v1809
    %v1842 = vadd.f32 %v1644, %v1812
    %v1843 = vadd.f32 %v1645, %v1817
    %v1844 = vadd.f32 %v1646, %v1820
    %v1845 = vadd.f32 %v1647, %v1825
    %v1846 = vadd.f32 %v1648, %v1828
    %v1847 = vunpack.c.h.b16 %v682
    %v1848 = vunpack.c.h.b16 %v692
    %v1849 = vpack.c.b16 %v1668, %v1668
    %v1850 = vpack.c.b16 %v1847, %v1847
    %v1851 = vpack.c.b16 %v1669, %v1669
    %v1852 = vpack.c.b16 %v1848, %v1848
    %v1854 = vshrl.u32 %v1849, 16
    %v1856 = vrot.slane %v1854, 4
    %v1857 = vshll.u32 %v1849, 16
    %v1859 = vrot.slane %v1857, 5
    %v1860 = vor.u32 %v1856, %v1859
    %v1861 = vrot.slane %v1860, 4
    %v1863 = vshll.u32 %v1850, 16
    %v1865 = vrot.slane %v1863, 5
    %v1866 = vsel %vm792, %v1861, %v1865
    %v1868 = vshrl.u32 %v1851, 16
    %v1870 = vrot.slane %v1868, 4
    %v1871 = vshll.u32 %v1851, 16
    %v1873 = vrot.slane %v1871, 5
    %v1874 = vor.u32 %v1870, %v1873
    %v1875 = vrot.slane %v1874, 4
    %v1877 = vshll.u32 %v1852, 16
    %v1879 = vrot.slane %v1877, 5
    %v1880 = vsel %vm792, %v1875, %v1879
    %s1881 = scalar_lea.vmem [#allocation7], 256
    %v1882 = vld [vmem:[%s1881] sm:$0xf]
    %v1883 = vld [vmem:[%s1881 + $0x4] sm:$0xf]
    %v1884 = vld [vmem:[%s1881 + $0x8] sm:$0xf]
    %v1885 = vld [vmem:[%s1881 + $0xc] sm:$0xf]
    %v1886 = vld [vmem:[%s1881 + $0x10] sm:$0xf]
    %v1887 = vld [vmem:[%s1881 + $0x14] sm:$0xf]
    %v1888 = vld [vmem:[%s1881 + $0x18] sm:$0xf]
    %v1889 = vld [vmem:[%s1881 + $0x1c] sm:$0xf]
    %v1890 = vld [vmem:[%s1881 + $0x20] sm:$0xf]
    %v1891 = vld [vmem:[%s1881 + $0x24] sm:$0xf]
    %v1892 = vld [vmem:[%s1881 + $0x28] sm:$0xf]
    %v1893 = vld [vmem:[%s1881 + $0x2c] sm:$0xf]
    %v1894 = vld [vmem:[%s1881 + $0x30] sm:$0xf]
    %v1895 = vld [vmem:[%s1881 + $0x34] sm:$0xf]
    %v1896 = vld [vmem:[%s1881 + $0x38] sm:$0xf]
    %v1897 = vld [vmem:[%s1881 + $0x3c] sm:$0xf]
    %v1898 = vunpack.c.l.b16 %v1866
    %v1899 = vunpack.c.l.b16 %v1880
    %v1900 = vpack.c.b16 %v1036, %v1035
    %v1901 = vpack.c.b16 %v1038, %v1037
    %v1902 = vpack.c.b16 %v1040, %v1039
    %v1903 = vpack.c.b16 %v1898, %v1041
    %v1904 = vpack.c.b16 %v1044, %v1043
    %v1905 = vpack.c.b16 %v1046, %v1045
    %v1906 = vpack.c.b16 %v1048, %v1047
    %v1907 = vpack.c.b16 %v1899, %v1049
    %v1932 = vunpack.c.l.b16 %v1882
    %v1933 = vunpack.c.l.b16 %v1883
    %v1934 = vunpack.c.l.b16 %v1884
    %v1935 = vunpack.c.l.b16 %v1885
    %v1936 = vunpack.c.l.b16 %v1886
    %v1937 = vunpack.c.l.b16 %v1887
    %v1938 = vunpack.c.l.b16 %v1888
    %v1939 = vunpack.c.l.b16 %v1889
    %v1940 = vunpack.c.l.b16 %v1890
    %v1941 = vunpack.c.l.b16 %v1891
    %v1942 = vunpack.c.l.b16 %v1892
    %v1943 = vunpack.c.l.b16 %v1893
    %v1944 = vunpack.c.l.b16 %v1894
    %v1945 = vunpack.c.l.b16 %v1895
    %v1946 = vunpack.c.l.b16 %v1896
    %v1947 = vunpack.c.l.b16 %v1897
    %v1948 = vpack.c.b16 %v1933, %v1932
    %v1949 = vpack.c.b16 %v1935, %v1934
    %v1950 = vpack.c.b16 %v1937, %v1936
    %v1951 = vpack.c.b16 %v1939, %v1938
    %v1952 = vpack.c.b16 %v1941, %v1940
    %v1953 = vpack.c.b16 %v1943, %v1942
    %v1954 = vpack.c.b16 %v1945, %v1944
    %v1955 = vpack.c.b16 %v1947, %v1946
    %1964 = vmatprep.subr.bf16.mxu0 0
    %1965 = vmatpush1.bf16.msra.mxu0 %v1948
    %1966 = vmatprep.subr.bf16.mxu0 0
    %1967 = vmatpush1.bf16.msra.mxu0 %v1949
    %1968 = vmatprep.subr.bf16.mxu0 0
    %1969 = vmatpush1.bf16.msra.mxu0 %v1950
    %1970 = vmatprep.subr.bf16.mxu0 0
    %1971 = vmatpush1.bf16.msra.mxu0 %v1951
    %1972 = vmatprep.subr.bf16.mxu0 0
    %1973 = vmatpush1.bf16.msra.mxu0 %v1952
    %1974 = vmatprep.subr.bf16.mxu0 0
    %1975 = vmatpush1.bf16.msra.mxu0 %v1953
    %1976 = vmatprep.subr.bf16.mxu0 0
    %1977 = vmatpush1.bf16.msra.mxu0 %v1954
    %1978 = vmatprep.subr.bf16.mxu0 0
    %1979 = vmatpush1.bf16.msra.mxu0 %v1955
    %1980 = vmatprep.subr.bf16.mxu0 0
    %1981 = vmatpush1.bf16.msra.mxu0 0
    %1982 = vmatprep.subr.bf16.mxu0 0
    %1983 = vmatpush1.bf16.msra.mxu0 0
    %1984 = vmatprep.subr.bf16.mxu0 0
    %1985 = vmatpush1.bf16.msra.mxu0 0
    %1986 = vmatprep.subr.bf16.mxu0 0
    %1987 = vmatpush1.bf16.msra.mxu0 0
    %1988 = vmatprep.subr.bf16.mxu0 0
    %1989 = vmatpush1.bf16.msra.mxu0 0
    %1990 = vmatprep.subr.bf16.mxu0 0
    %1991 = vmatpush1.bf16.msra.mxu0 0
    %1992 = vmatprep.subr.bf16.mxu0 0
    %1993 = vmatpush1.bf16.msra.mxu0 0
    %1994 = vmatprep.subr.bf16.mxu0 0
    %1995 = vmatpush1.bf16.msra.mxu0 0
    %1996 = vmatprep.mubr.bf16.mxu0 0
    %1997 = vmatmul.mubr.bf16.gmra.mrb[0].mxu0 %v1900
    %v1998 = vpop.f32.mrb[0].mxu0
    %v1999 = vadd.f32 0.0, %v1998
    %v2000 = vpop.f32.mrb[0].mxu0
    %v2001 = vpop.f32.mrb[0].mxu0
    %v2002 = vadd.f32 0.0, %v2001
    %v2003 = vpop.f32.mrb[0].mxu0
    %2004 = vmatprep.mubr.bf16.mxu0 0
    %2005 = vmatmul.mubr.bf16.gmra.mrb[0].mxu0 %v1901
    %v2006 = vpop.f32.mrb[0].mxu0
    %v2007 = vadd.f32 0.0, %v2006
    %v2008 = vpop.f32.mrb[0].mxu0
    %v2009 = vpop.f32.mrb[0].mxu0
    %v2010 = vadd.f32 0.0, %v2009
    %v2011 = vpop.f32.mrb[0].mxu0
    %2012 = vmatprep.mubr.bf16.mxu0 0
    %2013 = vmatmul.mubr.bf16.gmra.mrb[0].mxu0 %v1902
    %v2014 = vpop.f32.mrb[0].mxu0
    %v2015 = vadd.f32 0.0, %v2014
    %v2016 = vpop.f32.mrb[0].mxu0
    %v2017 = vpop.f32.mrb[0].mxu0
    %v2018 = vadd.f32 0.0, %v2017
    %v2019 = vpop.f32.mrb[0].mxu0
    %2020 = vmatprep.mubr.bf16.mxu0 0
    %2021 = vmatmul.mubr.bf16.gmra.mrb[0].mxu0 %v1903
    %v2022 = vpop.f32.mrb[0].mxu0
    %v2023 = vadd.f32 0.0, %v2022
    %v2024 = vpop.f32.mrb[0].mxu0
    %v2025 = vpop.f32.mrb[0].mxu0
    %v2026 = vadd.f32 0.0, %v2025
    %v2027 = vpop.f32.mrb[0].mxu0
    %2028 = vmatprep.mubr.bf16.mxu0 0
    %2029 = vmatmul.mubr.bf16.gmra.mrb[0].mxu0 %v1904
    %v2030 = vpop.f32.mrb[0].mxu0
    %v2031 = vadd.f32 0.0, %v2030
    %v2032 = vpop.f32.mrb[0].mxu0
    %v2033 = vpop.f32.mrb[0].mxu0
    %v2034 = vadd.f32 0.0, %v2033
    %v2035 = vpop.f32.mrb[0].mxu0
    %2036 = vmatprep.mubr.bf16.mxu0 0
    %2037 = vmatmul.mubr.bf16.gmra.mrb[0].mxu0 %v1905
    %v2038 = vpop.f32.mrb[0].mxu0
    %v2039 = vadd.f32 0.0, %v2038
    %v2040 = vpop.f32.mrb[0].mxu0
    %v2041 = vpop.f32.mrb[0].mxu0
    %v2042 = vadd.f32 0.0, %v2041
    %v2043 = vpop.f32.mrb[0].mxu0
    %2044 = vmatprep.mubr.bf16.mxu0 0
    %2045 = vmatmul.mubr.bf16.gmra.mrb[0].mxu0 %v1906
    %v2046 = vpop.f32.mrb[0].mxu0
    %v2047 = vadd.f32 0.0, %v2046
    %v2048 = vpop.f32.mrb[0].mxu0
    %v2049 = vpop.f32.mrb[0].mxu0
    %v2050 = vadd.f32 0.0, %v2049
    %v2051 = vpop.f32.mrb[0].mxu0
    %2052 = vmatprep.mubr.bf16.mxu0 0
    %2053 = vmatmul.mubr.bf16.gmra.mrb[0].mxu0 %v1907
    %v2054 = vpop.f32.mrb[0].mxu0
    %v2055 = vadd.f32 0.0, %v2054
    %v2056 = vpop.f32.mrb[0].mxu0
    %v2057 = vpop.f32.mrb[0].mxu0
    %v2058 = vadd.f32 0.0, %v2057
    %v2059 = vpop.f32.mrb[0].mxu0
    %2060 = vdwg.mxu0
    %v2061 = vadd.f32 %v1831, %v1999
    %v2062 = vadd.f32 %v1832, %v2002
    %v2063 = vadd.f32 %v1833, %v2007
    %v2064 = vadd.f32 %v1834, %v2010
    %v2065 = vadd.f32 %v1835, %v2015
    %v2066 = vadd.f32 %v1836, %v2018
    %v2067 = vadd.f32 %v1837, %v2023
    %v2068 = vadd.f32 %v1838, %v2026
    %v2069 = vadd.f32 %v1839, %v2031
    %v2070 = vadd.f32 %v1840, %v2034
    %v2071 = vadd.f32 %v1841, %v2039
    %v2072 = vadd.f32 %v1842, %v2042
    %v2073 = vadd.f32 %v1843, %v2047
    %v2074 = vadd.f32 %v1844, %v2050
    %v2075 = vadd.f32 %v1845, %v2055
    %v2076 = vadd.f32 %v1846, %v2058
    %v2077 = vrot.slane %v1849, 5
    %v2078 = vrot.slane %v2077, 4
    %v2079 = vrot.slane %v1850, 5
    %v2080 = vsel %vm1374, %v2078, %v2079
    %v2081 = vrot.slane %v1851, 5
    %v2082 = vrot.slane %v2081, 4
    %v2083 = vrot.slane %v1852, 5
    %v2084 = vsel %vm1374, %v2082, %v2083
    %s2085 = scalar_lea.vmem [#allocation7], 320
    %v2086 = vld [vmem:[%s2085] sm:$0xf]
    %v2087 = vld [vmem:[%s2085 + $0x4] sm:$0xf]
    %v2088 = vld [vmem:[%s2085 + $0x8] sm:$0xf]
    %v2089 = vld [vmem:[%s2085 + $0xc] sm:$0xf]
    %v2090 = vld [vmem:[%s2085 + $0x10] sm:$0xf]
    %v2091 = vld [vmem:[%s2085 + $0x14] sm:$0xf]
    %v2092 = vld [vmem:[%s2085 + $0x18] sm:$0xf]
    %v2093 = vld [vmem:[%s2085 + $0x1c] sm:$0xf]
    %v2094 = vld [vmem:[%s2085 + $0x20] sm:$0xf]
    %v2095 = vld [vmem:[%s2085 + $0x24] sm:$0xf]
    %v2096 = vld [vmem:[%s2085 + $0x28] sm:$0xf]
    %v2097 = vld [vmem:[%s2085 + $0x2c] sm:$0xf]
    %v2098 = vld [vmem:[%s2085 + $0x30] sm:$0xf]
    %v2099 = vld [vmem:[%s2085 + $0x34] sm:$0xf]
    %v2100 = vld [vmem:[%s2085 + $0x38] sm:$0xf]
    %v2101 = vld [vmem:[%s2085 + $0x3c] sm:$0xf]
    %v2102 = vunpack.c.l.b16 %v2080
    %v2103 = vunpack.c.l.b16 %v2084
    %v2104 = vpack.c.b16 %v1458, %v1457
    %v2105 = vpack.c.b16 %v1460, %v1459
    %v2106 = vpack.c.b16 %v1462, %v1461
    %v2107 = vpack.c.b16 %v2102, %v1463
    %v2108 = vpack.c.b16 %v1466, %v1465
    %v2109 = vpack.c.b16 %v1468, %v1467
    %v2110 = vpack.c.b16 %v1470, %v1469
    %v2111 = vpack.c.b16 %v2103, %v1471
    %v2136 = vunpack.c.l.b16 %v2086
    %v2137 = vunpack.c.l.b16 %v2087
    %v2138 = vunpack.c.l.b16 %v2088
    %v2139 = vunpack.c.l.b16 %v2089
    %v2140 = vunpack.c.l.b16 %v2090
    %v2141 = vunpack.c.l.b16 %v2091
    %v2142 = vunpack.c.l.b16 %v2092
    %v2143 = vunpack.c.l.b16 %v2093
    %v2144 = vunpack.c.l.b16 %v2094
    %v2145 = vunpack.c.l.b16 %v2095
    %v2146 = vunpack.c.l.b16 %v2096
    %v2147 = vunpack.c.l.b16 %v2097
    %v2148 = vunpack.c.l.b16 %v2098
    %v2149 = vunpack.c.l.b16 %v2099
    %v2150 = vunpack.c.l.b16 %v2100
    %v2151 = vunpack.c.l.b16 %v2101
    %v2152 = vpack.c.b16 %v2137, %v2136
    %v2153 = vpack.c.b16 %v2139, %v2138
    %v2154 = vpack.c.b16 %v2141, %v2140
    %v2155 = vpack.c.b16 %v2143, %v2142
    %v2156 = vpack.c.b16 %v2145, %v2144
    %v2157 = vpack.c.b16 %v2147, %v2146
    %v2158 = vpack.c.b16 %v2149, %v2148
    %v2159 = vpack.c.b16 %v2151, %v2150
    %2168 = vmatprep.subr.bf16.mxu0 0
    %2169 = vmatpush1.bf16.msra.mxu0 %v2152
    %2170 = vmatprep.subr.bf16.mxu0 0
    %2171 = vmatpush1.bf16.msra.mxu0 %v2153
    %2172 = vmatprep.subr.bf16.mxu0 0
    %2173 = vmatpush1.bf16.msra.mxu0 %v2154
    %2174 = vmatprep.subr.bf16.mxu0 0
    %2175 = vmatpush1.bf16.msra.mxu0 %v2155
    %2176 = vmatprep.subr.bf16.mxu0 0
    %2177 = vmatpush1.bf16.msra.mxu0 %v2156
    %2178 = vmatprep.subr.bf16.mxu0 0
    %2179 = vmatpush1.bf16.msra.mxu0 %v2157
    %2180 = vmatprep.subr.bf16.mxu0 0
    %2181 = vmatpush1.bf16.msra.mxu0 %v2158
    %2182 = vmatprep.subr.bf16.mxu0 0
    %2183 = vmatpush1.bf16.msra.mxu0 %v2159
    %2184 = vmatprep.subr.bf16.mxu0 0
    %2185 = vmatpush1.bf16.msra.mxu0 0
    %2186 = vmatprep.subr.bf16.mxu0 0
    %2187 = vmatpush1.bf16.msra.mxu0 0
    %2188 = vmatprep.subr.bf16.mxu0 0
    %2189 = vmatpush1.bf16.msra.mxu0 0
    %2190 = vmatprep.subr.bf16.mxu0 0
    %2191 = vmatpush1.bf16.msra.mxu0 0
    %2192 = vmatprep.subr.bf16.mxu0 0
    %2193 = vmatpush1.bf16.msra.mxu0 0
    %2194 = vmatprep.subr.bf16.mxu0 0
    %2195 = vmatpush1.bf16.msra.mxu0 0
    %2196 = vmatprep.subr.bf16.mxu0 0
    %2197 = vmatpush1.bf16.msra.mxu0 0
    %2198 = vmatprep.subr.bf16.mxu0 0
    %2199 = vmatpush1.bf16.msra.mxu0 0
    %2200 = vmatprep.mubr.bf16.mxu0 0
    %2201 = vmatmul.mubr.bf16.gmra.mrb[0].mxu0 %v2104
    %v2202 = vpop.f32.mrb[0].mxu0
    %v2203 = vadd.f32 0.0, %v2202
    %v2204 = vpop.f32.mrb[0].mxu0
    %v2205 = vpop.f32.mrb[0].mxu0
    %v2206 = vadd.f32 0.0, %v2205
    %v2207 = vpop.f32.mrb[0].mxu0
    %2208 = vmatprep.mubr.bf16.mxu0 0
    %2209 = vmatmul.mubr.bf16.gmra.mrb[0].mxu0 %v2105
    %v2210 = vpop.f32.mrb[0].mxu0
    %v2211 = vadd.f32 0.0, %v2210
    %v2212 = vpop.f32.mrb[0].mxu0
    %v2213 = vpop.f32.mrb[0].mxu0
    %v2214 = vadd.f32 0.0, %v2213
    %v2215 = vpop.f32.mrb[0].mxu0
    %2216 = vmatprep.mubr.bf16.mxu0 0
    %2217 = vmatmul.mubr.bf16.gmra.mrb[0].mxu0 %v2106
    %v2218 = vpop.f32.mrb[0].mxu0
    %v2219 = vadd.f32 0.0, %v2218
    %v2220 = vpop.f32.mrb[0].mxu0
    %v2221 = vpop.f32.mrb[0].mxu0
    %v2222 = vadd.f32 0.0, %v2221
    %v2223 = vpop.f32.mrb[0].mxu0
    %2224 = vmatprep.mubr.bf16.mxu0 0
    %2225 = vmatmul.mubr.bf16.gmra.mrb[0].mxu0 %v2107
    %v2226 = vpop.f32.mrb[0].mxu0
    %v2227 = vadd.f32 0.0, %v2226
    %v2228 = vpop.f32.mrb[0].mxu0
    %v2229 = vpop.f32.mrb[0].mxu0
    %v2230 = vadd.f32 0.0, %v2229
    %v2231 = vpop.f32.mrb[0].mxu0
    %2232 = vmatprep.mubr.bf16.mxu0 0
    %2233 = vmatmul.mubr.bf16.gmra.mrb[0].mxu0 %v2108
    %v2234 = vpop.f32.mrb[0].mxu0
    %v2235 = vadd.f32 0.0, %v2234
    %v2236 = vpop.f32.mrb[0].mxu0
    %v2237 = vpop.f32.mrb[0].mxu0
    %v2238 = vadd.f32 0.0, %v2237
    %v2239 = vpop.f32.mrb[0].mxu0
    %2240 = vmatprep.mubr.bf16.mxu0 0
    %2241 = vmatmul.mubr.bf16.gmra.mrb[0].mxu0 %v2109
    %v2242 = vpop.f32.mrb[0].mxu0
    %v2243 = vadd.f32 0.0, %v2242
    %v2244 = vpop.f32.mrb[0].mxu0
    %v2245 = vpop.f32.mrb[0].mxu0
    %v2246 = vadd.f32 0.0, %v2245
    %v2247 = vpop.f32.mrb[0].mxu0
    %2248 = vmatprep.mubr.bf16.mxu0 0
    %2249 = vmatmul.mubr.bf16.gmra.mrb[0].mxu0 %v2110
    %v2250 = vpop.f32.mrb[0].mxu0
    %v2251 = vadd.f32 0.0, %v2250
    %v2252 = vpop.f32.mrb[0].mxu0
    %v2253 = vpop.f32.mrb[0].mxu0
    %v2254 = vadd.f32 0.0, %v2253
    %v2255 = vpop.f32.mrb[0].mxu0
    %2256 = vmatprep.mubr.bf16.mxu0 0
    %2257 = vmatmul.mubr.bf16.gmra.mrb[0].mxu0 %v2111
    %v2258 = vpop.f32.mrb[0].mxu0
    %v2259 = vadd.f32 0.0, %v2258
    %v2260 = vpop.f32.mrb[0].mxu0
    %v2261 = vpop.f32.mrb[0].mxu0
    %v2262 = vadd.f32 0.0, %v2261
    %v2263 = vpop.f32.mrb[0].mxu0
    %2264 = vdwg.mxu0
    %v2265 = vadd.f32 %v2061, %v2203
    %v2266 = vadd.f32 %v2062, %v2206
    %v2267 = vadd.f32 %v2063, %v2211
    %v2268 = vadd.f32 %v2064, %v2214
    %v2269 = vadd.f32 %v2065, %v2219
    %v2270 = vadd.f32 %v2066, %v2222
    %v2271 = vadd.f32 %v2067, %v2227
    %v2272 = vadd.f32 %v2068, %v2230
    %v2273 = vadd.f32 %v2069, %v2235
    %v2274 = vadd.f32 %v2070, %v2238
    %v2275 = vadd.f32 %v2071, %v2243
    %v2276 = vadd.f32 %v2072, %v2246
    %v2277 = vadd.f32 %v2073, %v2251
    %v2278 = vadd.f32 %v2074, %v2254
    %v2279 = vadd.f32 %v2075, %v2259
    %v2280 = vadd.f32 %v2076, %v2262
    %s2281 = scalar_lea.vmem [#allocation7], 384
    %v2282 = vld [vmem:[%s2281] sm:$0xf]
    %v2283 = vld [vmem:[%s2281 + $0x4] sm:$0xf]
    %v2284 = vld [vmem:[%s2281 + $0x8] sm:$0xf]
    %v2285 = vld [vmem:[%s2281 + $0xc] sm:$0xf]
    %v2286 = vld [vmem:[%s2281 + $0x10] sm:$0xf]
    %v2287 = vld [vmem:[%s2281 + $0x14] sm:$0xf]
    %v2288 = vld [vmem:[%s2281 + $0x18] sm:$0xf]
    %v2289 = vld [vmem:[%s2281 + $0x1c] sm:$0xf]
    %v2290 = vld [vmem:[%s2281 + $0x20] sm:$0xf]
    %v2291 = vld [vmem:[%s2281 + $0x24] sm:$0xf]
    %v2292 = vld [vmem:[%s2281 + $0x28] sm:$0xf]
    %v2293 = vld [vmem:[%s2281 + $0x2c] sm:$0xf]
    %v2294 = vld [vmem:[%s2281 + $0x30] sm:$0xf]
    %v2295 = vld [vmem:[%s2281 + $0x34] sm:$0xf]
    %v2296 = vld [vmem:[%s2281 + $0x38] sm:$0xf]
    %v2297 = vld [vmem:[%s2281 + $0x3c] sm:$0xf]
    %v2300 = vunpack.c.l.b16 %v683
    %v2301 = vunpack.c.l.b16 %v693
    %v2302 = vpack.c.b16 %v2300, %v1668
    %v2303 = vpack.c.b16 %v2301, %v1669
    %v2322 = vunpack.c.l.b16 %v2282
    %v2323 = vunpack.c.l.b16 %v2283
    %v2324 = vunpack.c.l.b16 %v2284
    %v2325 = vunpack.c.l.b16 %v2285
    %v2326 = vunpack.c.l.b16 %v2286
    %v2327 = vunpack.c.l.b16 %v2287
    %v2328 = vunpack.c.l.b16 %v2288
    %v2329 = vunpack.c.l.b16 %v2289
    %v2330 = vunpack.c.l.b16 %v2290
    %v2331 = vunpack.c.l.b16 %v2291
    %v2332 = vunpack.c.l.b16 %v2292
    %v2333 = vunpack.c.l.b16 %v2293
    %v2334 = vunpack.c.l.b16 %v2294
    %v2335 = vunpack.c.l.b16 %v2295
    %v2336 = vunpack.c.l.b16 %v2296
    %v2337 = vunpack.c.l.b16 %v2297
    %v2338 = vpack.c.b16 %v2323, %v2322
    %v2339 = vpack.c.b16 %v2325, %v2324
    %v2340 = vpack.c.b16 %v2327, %v2326
    %v2341 = vpack.c.b16 %v2329, %v2328
    %v2342 = vpack.c.b16 %v2331, %v2330
    %v2343 = vpack.c.b16 %v2333, %v2332
    %v2344 = vpack.c.b16 %v2335, %v2334
    %v2345 = vpack.c.b16 %v2337, %v2336
    %2354 = vmatprep.subr.bf16.mxu0 0
    %2355 = vmatpush1.bf16.msra.mxu0 %v2338
    %2356 = vmatprep.subr.bf16.mxu0 0
    %2357 = vmatpush1.bf16.msra.mxu0 %v2339
    %2358 = vmatprep.subr.bf16.mxu0 0
    %2359 = vmatpush1.bf16.msra.mxu0 %v2340
    %2360 = vmatprep.subr.bf16.mxu0 0
    %2361 = vmatpush1.bf16.msra.mxu0 %v2341
    %2362 = vmatprep.subr.bf16.mxu0 0
    %2363 = vmatpush1.bf16.msra.mxu0 %v2342
    %2364 = vmatprep.subr.bf16.mxu0 0
    %2365 = vmatpush1.bf16.msra.mxu0 %v2343
    %2366 = vmatprep.subr.bf16.mxu0 0
    %2367 = vmatpush1.bf16.msra.mxu0 %v2344
    %2368 = vmatprep.subr.bf16.mxu0 0
    %2369 = vmatpush1.bf16.msra.mxu0 %v2345
    %2370 = vmatprep.subr.bf16.mxu0 0
    %2371 = vmatpush1.bf16.msra.mxu0 0
    %2372 = vmatprep.subr.bf16.mxu0 0
    %2373 = vmatpush1.bf16.msra.mxu0 0
    %2374 = vmatprep.subr.bf16.mxu0 0
    %2375 = vmatpush1.bf16.msra.mxu0 0
    %2376 = vmatprep.subr.bf16.mxu0 0
    %2377 = vmatpush1.bf16.msra.mxu0 0
    %2378 = vmatprep.subr.bf16.mxu0 0
    %2379 = vmatpush1.bf16.msra.mxu0 0
    %2380 = vmatprep.subr.bf16.mxu0 0
    %2381 = vmatpush1.bf16.msra.mxu0 0
    %2382 = vmatprep.subr.bf16.mxu0 0
    %2383 = vmatpush1.bf16.msra.mxu0 0
    %2384 = vmatprep.subr.bf16.mxu0 0
    %2385 = vmatpush1.bf16.msra.mxu0 0
    %2386 = vmatprep.mubr.bf16.mxu0 0
    %2387 = vmatmul.mubr.bf16.gmra.mrb[0].mxu0 %v1212
    %v2388 = vpop.f32.mrb[0].mxu0
    %v2389 = vadd.f32 0.0, %v2388
    %v2390 = vpop.f32.mrb[0].mxu0
    %v2391 = vpop.f32.mrb[0].mxu0
    %v2392 = vadd.f32 0.0, %v2391
    %v2393 = vpop.f32.mrb[0].mxu0
    %2394 = vmatprep.mubr.bf16.mxu0 0
    %2395 = vmatmul.mubr.bf16.gmra.mrb[0].mxu0 %v1213
    %v2396 = vpop.f32.mrb[0].mxu0
    %v2397 = vadd.f32 0.0, %v2396
    %v2398 = vpop.f32.mrb[0].mxu0
    %v2399 = vpop.f32.mrb[0].mxu0
    %v2400 = vadd.f32 0.0, %v2399
    %v2401 = vpop.f32.mrb[0].mxu0
    %2402 = vmatprep.mubr.bf16.mxu0 0
    %2403 = vmatmul.mubr.bf16.gmra.mrb[0].mxu0 %v1214
    %v2404 = vpop.f32.mrb[0].mxu0
    %v2405 = vadd.f32 0.0, %v2404
    %v2406 = vpop.f32.mrb[0].mxu0
    %v2407 = vpop.f32.mrb[0].mxu0
    %v2408 = vadd.f32 0.0, %v2407
    %v2409 = vpop.f32.mrb[0].mxu0
    %2410 = vmatprep.mubr.bf16.mxu0 0
    %2411 = vmatmul.mubr.bf16.gmra.mrb[0].mxu0 %v2302
    %v2412 = vpop.f32.mrb[0].mxu0
    %v2413 = vadd.f32 0.0, %v2412
    %v2414 = vpop.f32.mrb[0].mxu0
    %v2415 = vpop.f32.mrb[0].mxu0
    %v2416 = vadd.f32 0.0, %v2415
    %v2417 = vpop.f32.mrb[0].mxu0
    %2418 = vmatprep.mubr.bf16.mxu0 0
    %2419 = vmatmul.mubr.bf16.gmra.mrb[0].mxu0 %v1216
    %v2420 = vpop.f32.mrb[0].mxu0
    %v2421 = vadd.f32 0.0, %v2420
    %v2422 = vpop.f32.mrb[0].mxu0
    %v2423 = vpop.f32.mrb[0].mxu0
    %v2424 = vadd.f32 0.0, %v2423
    %v2425 = vpop.f32.mrb[0].mxu0
    %2426 = vmatprep.mubr.bf16.mxu0 0
    %2427 = vmatmul.mubr.bf16.gmra.mrb[0].mxu0 %v1217
    %v2428 = vpop.f32.mrb[0].mxu0
    %v2429 = vadd.f32 0.0, %v2428
    %v2430 = vpop.f32.mrb[0].mxu0
    %v2431 = vpop.f32.mrb[0].mxu0
    %v2432 = vadd.f32 0.0, %v2431
    %v2433 = vpop.f32.mrb[0].mxu0
    %2434 = vmatprep.mubr.bf16.mxu0 0
    %2435 = vmatmul.mubr.bf16.gmra.mrb[0].mxu0 %v1218
    %v2436 = vpop.f32.mrb[0].mxu0
    %v2437 = vadd.f32 0.0, %v2436
    %v2438 = vpop.f32.mrb[0].mxu0
    %v2439 = vpop.f32.mrb[0].mxu0
    %v2440 = vadd.f32 0.0, %v2439
    %v2441 = vpop.f32.mrb[0].mxu0
    %2442 = vmatprep.mubr.bf16.mxu0 0
    %2443 = vmatmul.mubr.bf16.gmra.mrb[0].mxu0 %v2303
    %v2444 = vpop.f32.mrb[0].mxu0
    %v2445 = vadd.f32 0.0, %v2444
    %v2446 = vpop.f32.mrb[0].mxu0
    %v2447 = vpop.f32.mrb[0].mxu0
    %v2448 = vadd.f32 0.0, %v2447
    %v2449 = vpop.f32.mrb[0].mxu0
    %2450 = vdwg.mxu0
    %v2451 = vadd.f32 %v2265, %v2389
    %v2452 = vadd.f32 %v2266, %v2392
    %v2453 = vadd.f32 %v2267, %v2397
    %v2454 = vadd.f32 %v2268, %v2400
    %v2455 = vadd.f32 %v2269, %v2405
    %v2456 = vadd.f32 %v2270, %v2408
    %v2457 = vadd.f32 %v2271, %v2413
    %v2458 = vadd.f32 %v2272, %v2416
    %v2459 = vadd.f32 %v2273, %v2421
    %v2460 = vadd.f32 %v2274, %v2424
    %v2461 = vadd.f32 %v2275, %v2429
    %v2462 = vadd.f32 %v2276, %v2432
    %v2463 = vadd.f32 %v2277, %v2437
    %v2464 = vadd.f32 %v2278, %v2440
    %v2465 = vadd.f32 %v2279, %v2445
    %v2466 = vadd.f32 %v2280, %v2448
    %v2467 = vunpack.c.h.b16 %v683
    %v2468 = vunpack.c.h.b16 %v693
    %v2469 = vpack.c.b16 %v2300, %v2300
    %v2470 = vpack.c.b16 %v2467, %v2467
    %v2471 = vpack.c.b16 %v2301, %v2301
    %v2472 = vpack.c.b16 %v2468, %v2468
    %v2474 = vshrl.u32 %v2469, 16
    %v2476 = vrot.slane %v2474, 4
    %v2477 = vshll.u32 %v2469, 16
    %v2479 = vrot.slane %v2477, 5
    %v2480 = vor.u32 %v2476, %v2479
    %v2481 = vrot.slane %v2480, 4
    %v2483 = vshll.u32 %v2470, 16
    %v2485 = vrot.slane %v2483, 5
    %v2486 = vsel %vm792, %v2481, %v2485
    %v2488 = vshrl.u32 %v2471, 16
    %v2490 = vrot.slane %v2488, 4
    %v2491 = vshll.u32 %v2471, 16
    %v2493 = vrot.slane %v2491, 5
    %v2494 = vor.u32 %v2490, %v2493
    %v2495 = vrot.slane %v2494, 4
    %v2497 = vshll.u32 %v2472, 16
    %v2499 = vrot.slane %v2497, 5
    %v2500 = vsel %vm792, %v2495, %v2499
    %s2501 = scalar_lea.vmem [#allocation7], 448
    %v2502 = vld [vmem:[%s2501] sm:$0xf]
    %v2503 = vld [vmem:[%s2501 + $0x4] sm:$0xf]
    %v2504 = vld [vmem:[%s2501 + $0x8] sm:$0xf]
    %v2505 = vld [vmem:[%s2501 + $0xc] sm:$0xf]
    %v2506 = vld [vmem:[%s2501 + $0x10] sm:$0xf]
    %v2507 = vld [vmem:[%s2501 + $0x14] sm:$0xf]
    %v2508 = vld [vmem:[%s2501 + $0x18] sm:$0xf]
    %v2509 = vld [vmem:[%s2501 + $0x1c] sm:$0xf]
    %v2510 = vld [vmem:[%s2501 + $0x20] sm:$0xf]
    %v2511 = vld [vmem:[%s2501 + $0x24] sm:$0xf]
    %v2512 = vld [vmem:[%s2501 + $0x28] sm:$0xf]
    %v2513 = vld [vmem:[%s2501 + $0x2c] sm:$0xf]
    %v2514 = vld [vmem:[%s2501 + $0x30] sm:$0xf]
    %v2515 = vld [vmem:[%s2501 + $0x34] sm:$0xf]
    %v2516 = vld [vmem:[%s2501 + $0x38] sm:$0xf]
    %v2517 = vld [vmem:[%s2501 + $0x3c] sm:$0xf]
    %v2518 = vunpack.c.l.b16 %v2486
    %v2519 = vunpack.c.l.b16 %v2500
    %v2520 = vpack.c.b16 %v2518, %v1898
    %v2521 = vpack.c.b16 %v2519, %v1899
    %v2540 = vunpack.c.l.b16 %v2502
    %v2541 = vunpack.c.l.b16 %v2503
    %v2542 = vunpack.c.l.b16 %v2504
    %v2543 = vunpack.c.l.b16 %v2505
    %v2544 = vunpack.c.l.b16 %v2506
    %v2545 = vunpack.c.l.b16 %v2507
    %v2546 = vunpack.c.l.b16 %v2508
    %v2547 = vunpack.c.l.b16 %v2509
    %v2548 = vunpack.c.l.b16 %v2510
    %v2549 = vunpack.c.l.b16 %v2511
    %v2550 = vunpack.c.l.b16 %v2512
    %v2551 = vunpack.c.l.b16 %v2513
    %v2552 = vunpack.c.l.b16 %v2514
    %v2553 = vunpack.c.l.b16 %v2515
    %v2554 = vunpack.c.l.b16 %v2516
    %v2555 = vunpack.c.l.b16 %v2517
    %v2556 = vpack.c.b16 %v2541, %v2540
    %v2557 = vpack.c.b16 %v2543, %v2542
    %v2558 = vpack.c.b16 %v2545, %v2544
    %v2559 = vpack.c.b16 %v2547, %v2546
    %v2560 = vpack.c.b16 %v2549, %v2548
    %v2561 = vpack.c.b16 %v2551, %v2550
    %v2562 = vpack.c.b16 %v2553, %v2552
    %v2563 = vpack.c.b16 %v2555, %v2554
    %2572 = vmatprep.subr.bf16.mxu0 0
    %2573 = vmatpush1.bf16.msra.mxu0 %v2556
    %2574 = vmatprep.subr.bf16.mxu0 0
    %2575 = vmatpush1.bf16.msra.mxu0 %v2557
    %2576 = vmatprep.subr.bf16.mxu0 0
    %2577 = vmatpush1.bf16.msra.mxu0 %v2558
    %2578 = vmatprep.subr.bf16.mxu0 0
    %2579 = vmatpush1.bf16.msra.mxu0 %v2559
    %2580 = vmatprep.subr.bf16.mxu0 0
    %2581 = vmatpush1.bf16.msra.mxu0 %v2560
    %2582 = vmatprep.subr.bf16.mxu0 0
    %2583 = vmatpush1.bf16.msra.mxu0 %v2561
    %2584 = vmatprep.subr.bf16.mxu0 0
    %2585 = vmatpush1.bf16.msra.mxu0 %v2562
    %2586 = vmatprep.subr.bf16.mxu0 0
    %2587 = vmatpush1.bf16.msra.mxu0 %v2563
    %2588 = vmatprep.subr.bf16.mxu0 0
    %2589 = vmatpush1.bf16.msra.mxu0 0
    %2590 = vmatprep.subr.bf16.mxu0 0
    %2591 = vmatpush1.bf16.msra.mxu0 0
    %2592 = vmatprep.subr.bf16.mxu0 0
    %2593 = vmatpush1.bf16.msra.mxu0 0
    %2594 = vmatprep.subr.bf16.mxu0 0
    %2595 = vmatpush1.bf16.msra.mxu0 0
    %2596 = vmatprep.subr.bf16.mxu0 0
    %2597 = vmatpush1.bf16.msra.mxu0 0
    %2598 = vmatprep.subr.bf16.mxu0 0
    %2599 = vmatpush1.bf16.msra.mxu0 0
    %2600 = vmatprep.subr.bf16.mxu0 0
    %2601 = vmatpush1.bf16.msra.mxu0 0
    %2602 = vmatprep.subr.bf16.mxu0 0
    %2603 = vmatpush1.bf16.msra.mxu0 0
    %2604 = vmatprep.mubr.bf16.mxu0 0
    %2605 = vmatmul.mubr.bf16.gmra.mrb[0].mxu0 %v1051
    %v2606 = vpop.f32.mrb[0].mxu0
    %v2607 = vadd.f32 0.0, %v2606
    %v2608 = vpop.f32.mrb[0].mxu0
    %v2609 = vpop.f32.mrb[0].mxu0
    %v2610 = vadd.f32 0.0, %v2609
    %v2611 = vpop.f32.mrb[0].mxu0
    %2612 = vmatprep.mubr.bf16.mxu0 0
    %2613 = vmatmul.mubr.bf16.gmra.mrb[0].mxu0 %v1052
    %v2614 = vpop.f32.mrb[0].mxu0
    %v2615 = vadd.f32 0.0, %v2614
    %v2616 = vpop.f32.mrb[0].mxu0
    %v2617 = vpop.f32.mrb[0].mxu0
    %v2618 = vadd.f32 0.0, %v2617
    %v2619 = vpop.f32.mrb[0].mxu0
    %2620 = vmatprep.mubr.bf16.mxu0 0
    %2621 = vmatmul.mubr.bf16.gmra.mrb[0].mxu0 %v1053
    %v2622 = vpop.f32.mrb[0].mxu0
    %v2623 = vadd.f32 0.0, %v2622
    %v2624 = vpop.f32.mrb[0].mxu0
    %v2625 = vpop.f32.mrb[0].mxu0
    %v2626 = vadd.f32 0.0, %v2625
    %v2627 = vpop.f32.mrb[0].mxu0
    %2628 = vmatprep.mubr.bf16.mxu0 0
    %2629 = vmatmul.mubr.bf16.gmra.mrb[0].mxu0 %v2520
    %v2630 = vpop.f32.mrb[0].mxu0
    %v2631 = vadd.f32 0.0, %v2630
    %v2632 = vpop.f32.mrb[0].mxu0
    %v2633 = vpop.f32.mrb[0].mxu0
    %v2634 = vadd.f32 0.0, %v2633
    %v2635 = vpop.f32.mrb[0].mxu0
    %2636 = vmatprep.mubr.bf16.mxu0 0
    %2637 = vmatmul.mubr.bf16.gmra.mrb[0].mxu0 %v1055
    %v2638 = vpop.f32.mrb[0].mxu0
    %v2639 = vadd.f32 0.0, %v2638
    %v2640 = vpop.f32.mrb[0].mxu0
    %v2641 = vpop.f32.mrb[0].mxu0
    %v2642 = vadd.f32 0.0, %v2641
    %v2643 = vpop.f32.mrb[0].mxu0
    %2644 = vmatprep.mubr.bf16.mxu0 0
    %2645 = vmatmul.mubr.bf16.gmra.mrb[0].mxu0 %v1056
    %v2646 = vpop.f32.mrb[0].mxu0
    %v2647 = vadd.f32 0.0, %v2646
    %v2648 = vpop.f32.mrb[0].mxu0
    %v2649 = vpop.f32.mrb[0].mxu0
    %v2650 = vadd.f32 0.0, %v2649
    %v2651 = vpop.f32.mrb[0].mxu0
    %2652 = vmatprep.mubr.bf16.mxu0 0
    %2653 = vmatmul.mubr.bf16.gmra.mrb[0].mxu0 %v1057
    %v2654 = vpop.f32.mrb[0].mxu0
    %v2655 = vadd.f32 0.0, %v2654
    %v2656 = vpop.f32.mrb[0].mxu0
    %v2657 = vpop.f32.mrb[0].mxu0
    %v2658 = vadd.f32 0.0, %v2657
    %v2659 = vpop.f32.mrb[0].mxu0
    %2660 = vmatprep.mubr.bf16.mxu0 0
    %2661 = vmatmul.mubr.bf16.gmra.mrb[0].mxu0 %v2521
    %v2662 = vpop.f32.mrb[0].mxu0
    %v2663 = vadd.f32 0.0, %v2662
    %v2664 = vpop.f32.mrb[0].mxu0
    %v2665 = vpop.f32.mrb[0].mxu0
    %v2666 = vadd.f32 0.0, %v2665
    %v2667 = vpop.f32.mrb[0].mxu0
    %2668 = vdwg.mxu0
    %v2669 = vadd.f32 %v2451, %v2607
    %v2670 = vadd.f32 %v2452, %v2610
    %v2671 = vadd.f32 %v2453, %v2615
    %v2672 = vadd.f32 %v2454, %v2618
    %v2673 = vadd.f32 %v2455, %v2623
    %v2674 = vadd.f32 %v2456, %v2626
    %v2675 = vadd.f32 %v2457, %v2631
    %v2676 = vadd.f32 %v2458, %v2634
    %v2677 = vadd.f32 %v2459, %v2639
    %v2678 = vadd.f32 %v2460, %v2642
    %v2679 = vadd.f32 %v2461, %v2647
    %v2680 = vadd.f32 %v2462, %v2650
    %v2681 = vadd.f32 %v2463, %v2655
    %v2682 = vadd.f32 %v2464, %v2658
    %v2683 = vadd.f32 %v2465, %v2663
    %v2684 = vadd.f32 %v2466, %v2666
    %v2685 = vrot.slane %v2469, 5
    %v2686 = vrot.slane %v2685, 4
    %v2687 = vrot.slane %v2470, 5
    %v2688 = vsel %vm1374, %v2686, %v2687
    %v2689 = vrot.slane %v2471, 5
    %v2690 = vrot.slane %v2689, 4
    %v2691 = vrot.slane %v2472, 5
    %v2692 = vsel %vm1374, %v2690, %v2691
    %s2693 = scalar_lea.vmem [#allocation7], 512
    %v2694 = vld [vmem:[%s2693] sm:$0xf]
    %v2695 = vld [vmem:[%s2693 + $0x4] sm:$0xf]
    %v2696 = vld [vmem:[%s2693 + $0x8] sm:$0xf]
    %v2697 = vld [vmem:[%s2693 + $0xc] sm:$0xf]
    %v2698 = vld [vmem:[%s2693 + $0x10] sm:$0xf]
    %v2699 = vld [vmem:[%s2693 + $0x14] sm:$0xf]
    %v2700 = vld [vmem:[%s2693 + $0x18] sm:$0xf]
    %v2701 = vld [vmem:[%s2693 + $0x1c] sm:$0xf]
    %v2702 = vld [vmem:[%s2693 + $0x20] sm:$0xf]
    %v2703 = vld [vmem:[%s2693 + $0x24] sm:$0xf]
    %v2704 = vld [vmem:[%s2693 + $0x28] sm:$0xf]
    %v2705 = vld [vmem:[%s2693 + $0x2c] sm:$0xf]
    %v2706 = vld [vmem:[%s2693 + $0x30] sm:$0xf]
    %v2707 = vld [vmem:[%s2693 + $0x34] sm:$0xf]
    %v2708 = vld [vmem:[%s2693 + $0x38] sm:$0xf]
    %v2709 = vld [vmem:[%s2693 + $0x3c] sm:$0xf]
    %v2710 = vunpack.c.l.b16 %v2688
    %v2711 = vunpack.c.l.b16 %v2692
    %v2712 = vpack.c.b16 %v2710, %v2102
    %v2713 = vpack.c.b16 %v2711, %v2103
    %v2732 = vunpack.c.l.b16 %v2694
    %v2733 = vunpack.c.l.b16 %v2695
    %v2734 = vunpack.c.l.b16 %v2696
    %v2735 = vunpack.c.l.b16 %v2697
    %v2736 = vunpack.c.l.b16 %v2698
    %v2737 = vunpack.c.l.b16 %v2699
    %v2738 = vunpack.c.l.b16 %v2700
    %v2739 = vunpack.c.l.b16 %v2701
    %v2740 = vunpack.c.l.b16 %v2702
    %v2741 = vunpack.c.l.b16 %v2703
    %v2742 = vunpack.c.l.b16 %v2704
    %v2743 = vunpack.c.l.b16 %v2705
    %v2744 = vunpack.c.l.b16 %v2706
    %v2745 = vunpack.c.l.b16 %v2707
    %v2746 = vunpack.c.l.b16 %v2708
    %v2747 = vunpack.c.l.b16 %v2709
    %v2748 = vpack.c.b16 %v2733, %v2732
    %v2749 = vpack.c.b16 %v2735, %v2734
    %v2750 = vpack.c.b16 %v2737, %v2736
    %v2751 = vpack.c.b16 %v2739, %v2738
    %v2752 = vpack.c.b16 %v2741, %v2740
    %v2753 = vpack.c.b16 %v2743, %v2742
    %v2754 = vpack.c.b16 %v2745, %v2744
    %v2755 = vpack.c.b16 %v2747, %v2746
    %2764 = vmatprep.subr.bf16.mxu0 0
    %2765 = vmatpush1.bf16.msra.mxu0 %v2748
    %2766 = vmatprep.subr.bf16.mxu0 0
    %2767 = vmatpush1.bf16.msra.mxu0 %v2749
    %2768 = vmatprep.subr.bf16.mxu0 0
    %2769 = vmatpush1.bf16.msra.mxu0 %v2750
    %2770 = vmatprep.subr.bf16.mxu0 0
    %2771 = vmatpush1.bf16.msra.mxu0 %v2751
    %2772 = vmatprep.subr.bf16.mxu0 0
    %2773 = vmatpush1.bf16.msra.mxu0 %v2752
    %2774 = vmatprep.subr.bf16.mxu0 0
    %2775 = vmatpush1.bf16.msra.mxu0 %v2753
    %2776 = vmatprep.subr.bf16.mxu0 0
    %2777 = vmatpush1.bf16.msra.mxu0 %v2754
    %2778 = vmatprep.subr.bf16.mxu0 0
    %2779 = vmatpush1.bf16.msra.mxu0 %v2755
    %2780 = vmatprep.subr.bf16.mxu0 0
    %2781 = vmatpush1.bf16.msra.mxu0 0
    %2782 = vmatprep.subr.bf16.mxu0 0
    %2783 = vmatpush1.bf16.msra.mxu0 0
    %2784 = vmatprep.subr.bf16.mxu0 0
    %2785 = vmatpush1.bf16.msra.mxu0 0
    %2786 = vmatprep.subr.bf16.mxu0 0
    %2787 = vmatpush1.bf16.msra.mxu0 0
    %2788 = vmatprep.subr.bf16.mxu0 0
    %2789 = vmatpush1.bf16.msra.mxu0 0
    %2790 = vmatprep.subr.bf16.mxu0 0
    %2791 = vmatpush1.bf16.msra.mxu0 0
    %2792 = vmatprep.subr.bf16.mxu0 0
    %2793 = vmatpush1.bf16.msra.mxu0 0
    %2794 = vmatprep.subr.bf16.mxu0 0
    %2795 = vmatpush1.bf16.msra.mxu0 0
    %2796 = vmatprep.mubr.bf16.mxu0 0
    %2797 = vmatmul.mubr.bf16.gmra.mrb[0].mxu0 %v1473
    %v2798 = vpop.f32.mrb[0].mxu0
    %v2799 = vadd.f32 0.0, %v2798
    %v2800 = vpop.f32.mrb[0].mxu0
    %v2801 = vpop.f32.mrb[0].mxu0
    %v2802 = vadd.f32 0.0, %v2801
    %v2803 = vpop.f32.mrb[0].mxu0
    %2804 = vmatprep.mubr.bf16.mxu0 0
    %2805 = vmatmul.mubr.bf16.gmra.mrb[0].mxu0 %v1474
    %v2806 = vpop.f32.mrb[0].mxu0
    %v2807 = vadd.f32 0.0, %v2806
    %v2808 = vpop.f32.mrb[0].mxu0
    %v2809 = vpop.f32.mrb[0].mxu0
    %v2810 = vadd.f32 0.0, %v2809
    %v2811 = vpop.f32.mrb[0].mxu0
    %2812 = vmatprep.mubr.bf16.mxu0 0
    %2813 = vmatmul.mubr.bf16.gmra.mrb[0].mxu0 %v1475
    %v2814 = vpop.f32.mrb[0].mxu0
    %v2815 = vadd.f32 0.0, %v2814
    %v2816 = vpop.f32.mrb[0].mxu0
    %v2817 = vpop.f32.mrb[0].mxu0
    %v2818 = vadd.f32 0.0, %v2817
    %v2819 = vpop.f32.mrb[0].mxu0
    %2820 = vmatprep.mubr.bf16.mxu0 0
    %2821 = vmatmul.mubr.bf16.gmra.mrb[0].mxu0 %v2712
    %v2822 = vpop.f32.mrb[0].mxu0
    %v2823 = vadd.f32 0.0, %v2822
    %v2824 = vpop.f32.mrb[0].mxu0
    %v2825 = vpop.f32.mrb[0].mxu0
    %v2826 = vadd.f32 0.0, %v2825
    %v2827 = vpop.f32.mrb[0].mxu0
    %2828 = vmatprep.mubr.bf16.mxu0 0
    %2829 = vmatmul.mubr.bf16.gmra.mrb[0].mxu0 %v1477
    %v2830 = vpop.f32.mrb[0].mxu0
    %v2831 = vadd.f32 0.0, %v2830
    %v2832 = vpop.f32.mrb[0].mxu0
    %v2833 = vpop.f32.mrb[0].mxu0
    %v2834 = vadd.f32 0.0, %v2833
    %v2835 = vpop.f32.mrb[0].mxu0
    %2836 = vmatprep.mubr.bf16.mxu0 0
    %2837 = vmatmul.mubr.bf16.gmra.mrb[0].mxu0 %v1478
    %v2838 = vpop.f32.mrb[0].mxu0
    %v2839 = vadd.f32 0.0, %v2838
    %v2840 = vpop.f32.mrb[0].mxu0
    %v2841 = vpop.f32.mrb[0].mxu0
    %v2842 = vadd.f32 0.0, %v2841
    %v2843 = vpop.f32.mrb[0].mxu0
    %2844 = vmatprep.mubr.bf16.mxu0 0
    %2845 = vmatmul.mubr.bf16.gmra.mrb[0].mxu0 %v1479
    %v2846 = vpop.f32.mrb[0].mxu0
    %v2847 = vadd.f32 0.0, %v2846
    %v2848 = vpop.f32.mrb[0].mxu0
    %v2849 = vpop.f32.mrb[0].mxu0
    %v2850 = vadd.f32 0.0, %v2849
    %v2851 = vpop.f32.mrb[0].mxu0
    %2852 = vmatprep.mubr.bf16.mxu0 0
    %2853 = vmatmul.mubr.bf16.gmra.mrb[0].mxu0 %v2713
    %v2854 = vpop.f32.mrb[0].mxu0
    %v2855 = vadd.f32 0.0, %v2854
    %v2856 = vpop.f32.mrb[0].mxu0
    %v2857 = vpop.f32.mrb[0].mxu0
    %v2858 = vadd.f32 0.0, %v2857
    %v2859 = vpop.f32.mrb[0].mxu0
    %2860 = vdwg.mxu0
    %v2861 = vadd.f32 %v2669, %v2799
    %v2862 = vadd.f32 %v2670, %v2802
    %v2863 = vadd.f32 %v2671, %v2807
    %v2864 = vadd.f32 %v2672, %v2810
    %v2865 = vadd.f32 %v2673, %v2815
    %v2866 = vadd.f32 %v2674, %v2818
    %v2867 = vadd.f32 %v2675, %v2823
    %v2868 = vadd.f32 %v2676, %v2826
    %v2869 = vadd.f32 %v2677, %v2831
    %v2870 = vadd.f32 %v2678, %v2834
    %v2871 = vadd.f32 %v2679, %v2839
    %v2872 = vadd.f32 %v2680, %v2842
    %v2873 = vadd.f32 %v2681, %v2847
    %v2874 = vadd.f32 %v2682, %v2850
    %v2875 = vadd.f32 %v2683, %v2855
    %v2876 = vadd.f32 %v2684, %v2858
    %v2877 = vld [vmem:[%s4] sm:$0x1]
    %v2879 = vlaneseq
    %v2880 = vshrl.u32 %v2879, 7
    %v2881 = vsub.s32 0, %v2880
    %v2882 = vrot.slane %v2877, %v2881
    %v2884 = vadd.f32 %v2861, %v2882
    %v2885 = vadd.f32 %v2862, %v2882
    %v2886 = vadd.f32 %v2863, %v2882
    %v2887 = vadd.f32 %v2864, %v2882
    %v2888 = vadd.f32 %v2865, %v2882
    %v2889 = vadd.f32 %v2866, %v2882
    %v2890 = vadd.f32 %v2867, %v2882
    %v2891 = vadd.f32 %v2868, %v2882
    %v2892 = vadd.f32 %v2869, %v2882
    %v2893 = vadd.f32 %v2870, %v2882
    %v2894 = vadd.f32 %v2871, %v2882
    %v2895 = vadd.f32 %v2872, %v2882
    %v2896 = vadd.f32 %v2873, %v2882
    %v2897 = vadd.f32 %v2874, %v2882
    %v2898 = vadd.f32 %v2875, %v2882
    %v2899 = vadd.f32 %v2876, %v2882
    %v2900 = vmax.f32 %v2884, 0.0
    %v2901 = vmax.f32 %v2885, 0.0
    %v2902 = vmax.f32 %v2886, 0.0
    %v2903 = vmax.f32 %v2887, 0.0
    %v2904 = vmax.f32 %v2888, 0.0
    %v2905 = vmax.f32 %v2889, 0.0
    %v2906 = vmax.f32 %v2890, 0.0
    %v2907 = vmax.f32 %v2891, 0.0
    %v2908 = vmax.f32 %v2892, 0.0
    %v2909 = vmax.f32 %v2893, 0.0
    %v2910 = vmax.f32 %v2894, 0.0
    %v2911 = vmax.f32 %v2895, 0.0
    %v2912 = vmax.f32 %v2896, 0.0
    %v2913 = vmax.f32 %v2897, 0.0
    %v2914 = vmax.f32 %v2898, 0.0
    %v2915 = vmax.f32 %v2899, 0.0
    %v2916 = vpack.c.bf16 %v2901, %v2900
    %v2917 = vpack.c.bf16 %v2903, %v2902
    %v2918 = vpack.c.bf16 %v2905, %v2904
    %v2919 = vpack.c.bf16 %v2907, %v2906
    %v2920 = vpack.c.bf16 %v2909, %v2908
    %v2921 = vpack.c.bf16 %v2911, %v2910
    %v2922 = vpack.c.bf16 %v2913, %v2912
    %v2923 = vpack.c.bf16 %v2915, %v2914
    %v2924 = vld [vmem:[#allocation9] sm:$0xf]
    %v2925 = vld [vmem:[#allocation9 + $0x4] sm:$0xf]
    %v2926 = vld [vmem:[#allocation9 + $0x8] sm:$0xf]
    %v2927 = vld [vmem:[#allocation9 + $0xc] sm:$0xf]
    %v2928 = vld [vmem:[#allocation9 + $0x10] sm:$0xf]
    %v2929 = vld [vmem:[#allocation9 + $0x14] sm:$0xf]
    %v2930 = vld [vmem:[#allocation9 + $0x18] sm:$0xf]
    %v2931 = vld [vmem:[#allocation9 + $0x1c] sm:$0xf]
    %v2932 = vld [vmem:[#allocation9 + $0x20] sm:$0xf]
    %v2933 = vld [vmem:[#allocation9 + $0x24] sm:$0xf]
    %v2934 = vld [vmem:[#allocation9 + $0x28] sm:$0xf]
    %v2935 = vld [vmem:[#allocation9 + $0x2c] sm:$0xf]
    %v2936 = vld [vmem:[#allocation9 + $0x30] sm:$0xf]
    %v2937 = vld [vmem:[#allocation9 + $0x34] sm:$0xf]
    %v2938 = vld [vmem:[#allocation9 + $0x38] sm:$0xf]
    %v2939 = vld [vmem:[#allocation9 + $0x3c] sm:$0xf]
    %v2940 = vld [vmem:[%s6] sm:$0x1]
    %v2942 = vlaneseq
    %v2943 = vshrl.u32 %v2942, 7
    %v2944 = vsub.s32 0, %v2943
    %v2945 = vrot.slane %v2940, %v2944
    %v2963 = vunpack.c.l.b16 %v2924
    %v2964 = vunpack.c.l.b16 %v2925
    %v2965 = vunpack.c.l.b16 %v2926
    %v2966 = vunpack.c.l.b16 %v2927
    %v2967 = vunpack.c.l.b16 %v2928
    %v2968 = vunpack.c.l.b16 %v2929
    %v2969 = vunpack.c.l.b16 %v2930
    %v2970 = vunpack.c.l.b16 %v2931
    %v2971 = vunpack.c.l.b16 %v2932
    %v2972 = vunpack.c.l.b16 %v2933
    %v2973 = vunpack.c.l.b16 %v2934
    %v2974 = vunpack.c.l.b16 %v2935
    %v2975 = vunpack.c.l.b16 %v2936
    %v2976 = vunpack.c.l.b16 %v2937
    %v2977 = vunpack.c.l.b16 %v2938
    %v2978 = vunpack.c.l.b16 %v2939
    %v2979 = vpack.c.b16 %v2964, %v2963
    %v2980 = vpack.c.b16 %v2966, %v2965
    %v2981 = vpack.c.b16 %v2968, %v2967
    %v2982 = vpack.c.b16 %v2970, %v2969
    %v2983 = vpack.c.b16 %v2972, %v2971
    %v2984 = vpack.c.b16 %v2974, %v2973
    %v2985 = vpack.c.b16 %v2976, %v2975
    %v2986 = vpack.c.b16 %v2978, %v2977
    %2995 = vmatprep.subr.bf16.mxu0 0
    %2996 = vmatpush1.bf16.msra.mxu0 %v2979
    %2997 = vmatprep.subr.bf16.mxu0 0
    %2998 = vmatpush1.bf16.msra.mxu0 %v2980
    %2999 = vmatprep.subr.bf16.mxu0 0
    %3000 = vmatpush1.bf16.msra.mxu0 %v2981
    %3001 = vmatprep.subr.bf16.mxu0 0
    %3002 = vmatpush1.bf16.msra.mxu0 %v2982
    %3003 = vmatprep.subr.bf16.mxu0 0
    %3004 = vmatpush1.bf16.msra.mxu0 %v2983
    %3005 = vmatprep.subr.bf16.mxu0 0
    %3006 = vmatpush1.bf16.msra.mxu0 %v2984
    %3007 = vmatprep.subr.bf16.mxu0 0
    %3008 = vmatpush1.bf16.msra.mxu0 %v2985
    %3009 = vmatprep.subr.bf16.mxu0 0
    %3010 = vmatpush1.bf16.msra.mxu0 %v2986
    %3011 = vmatprep.subr.bf16.mxu0 0
    %3012 = vmatpush1.bf16.msra.mxu0 0
    %3013 = vmatprep.subr.bf16.mxu0 0
    %3014 = vmatpush1.bf16.msra.mxu0 0
    %3015 = vmatprep.subr.bf16.mxu0 0
    %3016 = vmatpush1.bf16.msra.mxu0 0
    %3017 = vmatprep.subr.bf16.mxu0 0
    %3018 = vmatpush1.bf16.msra.mxu0 0
    %3019 = vmatprep.subr.bf16.mxu0 0
    %3020 = vmatpush1.bf16.msra.mxu0 0
    %3021 = vmatprep.subr.bf16.mxu0 0
    %3022 = vmatpush1.bf16.msra.mxu0 0
    %3023 = vmatprep.subr.bf16.mxu0 0
    %3024 = vmatpush1.bf16.msra.mxu0 0
    %3025 = vmatprep.subr.bf16.mxu0 0
    %3026 = vmatpush1.bf16.msra.mxu0 0
    %3027 = vmatprep.mubr.bf16.mxu0 0
    %3028 = vmatmul.mubr.bf16.gmra.mrb[0].mxu0 %v2916
    %v3029 = vpop.f32.mrb[0].mxu0
    %v3030 = vadd.f32 %v2945, %v3029
    %v3031 = vpop.f32.mrb[0].mxu0
    %v3032 = vpop.f32.mrb[0].mxu0
    %v3033 = vadd.f32 %v2945, %v3032
    %v3034 = vpop.f32.mrb[0].mxu0
    %3035 = vmatprep.mubr.bf16.mxu0 0
    %3036 = vmatmul.mubr.bf16.gmra.mrb[0].mxu0 %v2917
    %v3037 = vpop.f32.mrb[0].mxu0
    %v3038 = vadd.f32 %v2945, %v3037
    %v3039 = vpop.f32.mrb[0].mxu0
    %v3040 = vpop.f32.mrb[0].mxu0
    %v3041 = vadd.f32 %v2945, %v3040
    %v3042 = vpop.f32.mrb[0].mxu0
    %3043 = vmatprep.mubr.bf16.mxu0 0
    %3044 = vmatmul.mubr.bf16.gmra.mrb[0].mxu0 %v2918
    %v3045 = vpop.f32.mrb[0].mxu0
    %v3046 = vadd.f32 %v2945, %v3045
    %v3047 = vpop.f32.mrb[0].mxu0
    %v3048 = vpop.f32.mrb[0].mxu0
    %v3049 = vadd.f32 %v2945, %v3048
    %v3050 = vpop.f32.mrb[0].mxu0
    %3051 = vmatprep.mubr.bf16.mxu0 0
    %3052 = vmatmul.mubr.bf16.gmra.mrb[0].mxu0 %v2919
    %v3053 = vpop.f32.mrb[0].mxu0
    %v3054 = vadd.f32 %v2945, %v3053
    %v3055 = vpop.f32.mrb[0].mxu0
    %v3056 = vpop.f32.mrb[0].mxu0
    %v3057 = vadd.f32 %v2945, %v3056
    %v3058 = vpop.f32.mrb[0].mxu0
    %3059 = vmatprep.mubr.bf16.mxu0 0
    %3060 = vmatmul.mubr.bf16.gmra.mrb[0].mxu0 %v2920
    %v3061 = vpop.f32.mrb[0].mxu0
    %v3062 = vadd.f32 %v2945, %v3061
    %v3063 = vpop.f32.mrb[0].mxu0
    %v3064 = vpop.f32.mrb[0].mxu0
    %v3065 = vadd.f32 %v2945, %v3064
    %v3066 = vpop.f32.mrb[0].mxu0
    %3067 = vmatprep.mubr.bf16.mxu0 0
    %3068 = vmatmul.mubr.bf16.gmra.mrb[0].mxu0 %v2921
    %v3069 = vpop.f32.mrb[0].mxu0
    %v3070 = vadd.f32 %v2945, %v3069
    %v3071 = vpop.f32.mrb[0].mxu0
    %v3072 = vpop.f32.mrb[0].mxu0
    %v3073 = vadd.f32 %v2945, %v3072
    %v3074 = vpop.f32.mrb[0].mxu0
    %3075 = vmatprep.mubr.bf16.mxu0 0
    %3076 = vmatmul.mubr.bf16.gmra.mrb[0].mxu0 %v2922
    %v3077 = vpop.f32.mrb[0].mxu0
    %v3078 = vadd.f32 %v2945, %v3077
    %v3079 = vpop.f32.mrb[0].mxu0
    %v3080 = vpop.f32.mrb[0].mxu0
    %v3081 = vadd.f32 %v2945, %v3080
    %v3082 = vpop.f32.mrb[0].mxu0
    %3083 = vmatprep.mubr.bf16.mxu0 0
    %3084 = vmatmul.mubr.bf16.gmra.mrb[0].mxu0 %v2923
    %v3085 = vpop.f32.mrb[0].mxu0
    %v3086 = vadd.f32 %v2945, %v3085
    %v3087 = vpop.f32.mrb[0].mxu0
    %v3088 = vpop.f32.mrb[0].mxu0
    %v3089 = vadd.f32 %v2945, %v3088
    %v3090 = vpop.f32.mrb[0].mxu0
    %3091 = vdwg.mxu0
    %v3092 = vadd.f32 %v3030, %v3033
    %v3093 = vadd.f32 %v3092, %v3038
    %v3094 = vadd.f32 %v3093, %v3041
    %v3095 = vadd.f32 %v3094, %v3046
    %v3096 = vadd.f32 %v3095, %v3049
    %v3097 = vadd.f32 %v3096, %v3054
    %v3098 = vadd.f32 %v3097, %v3057
    %v3099 = vrot.slane %v3098, 4
    %v3100 = vadd.f32 %v3098, %v3099
    %v3101 = vrot.slane %v3100, 2
    %v3102 = vadd.f32 %v3100, %v3101
    %v3103 = vrot.slane %v3102, 1
    %v3104 = vadd.f32 %v3102, %v3103
    %v3105 = vadd.f32 %v3062, %v3065
    %v3106 = vadd.f32 %v3105, %v3070
    %v3107 = vadd.f32 %v3106, %v3073
    %v3108 = vadd.f32 %v3107, %v3078
    %v3109 = vadd.f32 %v3108, %v3081
    %v3110 = vadd.f32 %v3109, %v3086
    %v3111 = vadd.f32 %v3110, %v3089
    %v3112 = vrot.slane %v3111, 4
    %v3113 = vadd.f32 %v3111, %v3112
    %v3114 = vrot.slane %v3113, 2
    %v3115 = vadd.f32 %v3113, %v3114
    %v3116 = vrot.slane %v3115, 1
    %v3117 = vadd.f32 %v3115, %v3116
    %v3118 = vmul.f32 %v3104, 0.015625
    %v3119 = vmul.f32 %v3117, 0.015625
    %v3120 = vmax.f32 %v3030, %v3038
    %v3121 = vmax.f32 %v3033, %v3041
    %v3122 = vmax.f32 %v3120, %v3046
    %v3123 = vmax.f32 %v3121, %v3049
    %v3124 = vmax.f32 %v3122, %v3054
    %v3125 = vmax.f32 %v3123, %v3057
    %v3126 = vmax.f32 %v3124, %v3125
    %v3127 = vrot.slane %v3126, 4
    %v3128 = vmax.f32 %v3126, %v3127
    %v3129 = vrot.slane %v3128, 2
    %v3130 = vmax.f32 %v3128, %v3129
    %v3131 = vrot.slane %v3130, 1
    %v3132 = vmax.f32 %v3130, %v3131
    %v3133 = vmax.f32 %v3062, %v3070
    %v3134 = vmax.f32 %v3065, %v3073
    %v3135 = vmax.f32 %v3133, %v3078
    %v3136 = vmax.f32 %v3134, %v3081
    %v3137 = vmax.f32 %v3135, %v3086
    %v3138 = vmax.f32 %v3136, %v3089
    %v3139 = vmax.f32 %v3137, %v3138
    %v3140 = vrot.slane %v3139, 4
    %v3141 = vmax.f32 %v3139, %v3140
    %v3142 = vrot.slane %v3141, 2
    %v3143 = vmax.f32 %v3141, %v3142
    %v3144 = vrot.slane %v3143, 1
    %v3145 = vmax.f32 %v3143, %v3144
    %v3146 = vld [vmem:[#allocation12] sm:$0xff]
    %v3147 = vld [vmem:[#allocation12 + $0x8] sm:$0xff]
    %v3148 = vld [vmem:[#allocation12 + $0x10] sm:$0xff]
    %v3149 = vld [vmem:[#allocation12 + $0x18] sm:$0xff]
    %v3150 = vld [vmem:[#allocation12 + $0x20] sm:$0xff]
    %v3151 = vld [vmem:[#allocation12 + $0x28] sm:$0xff]
    %v3152 = vld [vmem:[#allocation12 + $0x30] sm:$0xff]
    %v3153 = vld [vmem:[#allocation12 + $0x38] sm:$0xff]
    %v3154 = vld [vmem:[#allocation12 + $0x40] sm:$0xff]
    %v3155 = vld [vmem:[#allocation12 + $0x48] sm:$0xff]
    %v3156 = vld [vmem:[#allocation12 + $0x50] sm:$0xff]
    %v3157 = vld [vmem:[#allocation12 + $0x58] sm:$0xff]
    %v3158 = vld [vmem:[#allocation12 + $0x60] sm:$0xff]
    %v3159 = vld [vmem:[#allocation12 + $0x68] sm:$0xff]
    %v3160 = vld [vmem:[#allocation12 + $0x70] sm:$0xff]
    %v3161 = vld [vmem:[#allocation12 + $0x78] sm:$0xff]
    %v3162 = vld [vmem:[%s10] sm:$0x1]
    %v3164 = vlaneseq
    %v3165 = vshrl.u32 %v3164, 7
    %v3166 = vsub.s32 0, %v3165
    %v3167 = vrot.slane %v3162, %v3166
    %vm3171 = vcmask 1041409
    %v3172 = vsel %vm3171, %v3119, %v3118
    %3174 = vmatprep.subr.mxu0 0.0
    %3175 = vmatpush1.msra.mxu0 %v3146
    %3176 = vmatprep.subr.mxu0 0.0
    %3177 = vmatpush1.msra.mxu0 %v3147
    %3178 = vmatprep.subr.mxu0 0.0
    %3179 = vmatpush1.msra.mxu0 %v3148
    %3180 = vmatprep.subr.mxu0 0.0
    %3181 = vmatpush1.msra.mxu0 %v3149
    %3182 = vmatprep.subr.mxu0 0.0
    %3183 = vmatpush1.msra.mxu0 %v3150
    %3184 = vmatprep.subr.mxu0 0.0
    %3185 = vmatpush1.msra.mxu0 %v3151
    %3186 = vmatprep.subr.mxu0 0.0
    %3187 = vmatpush1.msra.mxu0 %v3152
    %3188 = vmatprep.subr.mxu0 0.0
    %3189 = vmatpush1.msra.mxu0 %v3153
    %3190 = vmatprep.subr.mxu0 0.0
    %3191 = vmatpush1.msra.mxu0 %v3154
    %3192 = vmatprep.subr.mxu0 0.0
    %3193 = vmatpush1.msra.mxu0 %v3155
    %3194 = vmatprep.subr.mxu0 0.0
    %3195 = vmatpush1.msra.mxu0 %v3156
    %3196 = vmatprep.subr.mxu0 0.0
    %3197 = vmatpush1.msra.mxu0 %v3157
    %3198 = vmatprep.subr.mxu0 0.0
    %3199 = vmatpush1.msra.mxu0 %v3158
    %3200 = vmatprep.subr.mxu0 0.0
    %3201 = vmatpush1.msra.mxu0 %v3159
    %3202 = vmatprep.subr.mxu0 0.0
    %3203 = vmatpush1.msra.mxu0 %v3160
    %3204 = vmatprep.subr.mxu0 0.0
    %3205 = vmatpush1.msra.mxu0 %v3161
    %3206 = vmatprep.subr.mxu0 0.0
    %3207 = vmatpush1.msra.mxu0 0.0
    %3208 = vmatprep.subr.mxu0 0.0
    %3209 = vmatpush1.msra.mxu0 0.0
    %3210 = vmatprep.subr.mxu0 0.0
    %3211 = vmatpush1.msra.mxu0 0.0
    %3212 = vmatprep.subr.mxu0 0.0
    %3213 = vmatpush1.msra.mxu0 0.0
    %3214 = vmatprep.subr.mxu0 0.0
    %3215 = vmatpush1.msra.mxu0 0.0
    %3216 = vmatprep.subr.mxu0 0.0
    %3217 = vmatpush1.msra.mxu0 0.0
    %3218 = vmatprep.subr.mxu0 0.0
    %3219 = vmatpush1.msra.mxu0 0.0
    %3220 = vmatprep.subr.mxu0 0.0
    %3221 = vmatpush1.msra.mxu0 0.0
    %3222 = vmatprep.subr.mxu0 0.0
    %3223 = vmatpush1.msra.mxu0 0.0
    %3224 = vmatprep.subr.mxu0 0.0
    %3225 = vmatpush1.msra.mxu0 0.0
    %3226 = vmatprep.subr.mxu0 0.0
    %3227 = vmatpush1.msra.mxu0 0.0
    %3228 = vmatprep.subr.mxu0 0.0
    %3229 = vmatpush1.msra.mxu0 0.0
    %3230 = vmatprep.subr.mxu0 0.0
    %3231 = vmatpush1.msra.mxu0 0.0
    %3232 = vmatprep.subr.mxu0 0.0
    %3233 = vmatpush1.msra.mxu0 0.0
    %3234 = vmatprep.subr.mxu0 0.0
    %3235 = vmatpush1.msra.mxu0 0.0
    %3236 = vmatprep.subr.mxu0 0.0
    %3237 = vmatpush1.msra.mxu0 0.0
    %3238 = vmatprep.mubr.f32.mxu0 0.0
    %3239 = vmatmul.mubr.f32.gmra.mrb[0].mxu0 %v3172
    %v3240 = vpop.f32.mrb[0].mxu0
    %v3241 = vadd.f32 %v3167, %v3240
    %v3242 = vpop.f32.mrb[0].mxu0
    %3243 = vdwg.mxu0
    %v3244 = vmax.f32 %v3241, 0.0
    %v3245 = vld [vmem:[#allocation13] sm:$0xff]
    %v3246 = vld [vmem:[#allocation13 + $0x8] sm:$0xff]
    %v3247 = vld [vmem:[#allocation13 + $0x10] sm:$0xff]
    %v3248 = vld [vmem:[#allocation13 + $0x18] sm:$0xff]
    %v3249 = vld [vmem:[#allocation13 + $0x20] sm:$0xff]
    %v3250 = vld [vmem:[#allocation13 + $0x28] sm:$0xff]
    %v3251 = vld [vmem:[#allocation13 + $0x30] sm:$0xff]
    %v3252 = vld [vmem:[#allocation13 + $0x38] sm:$0xff]
    %v3253 = vld [vmem:[#allocation13 + $0x40] sm:$0xff]
    %v3254 = vld [vmem:[#allocation13 + $0x48] sm:$0xff]
    %v3255 = vld [vmem:[#allocation13 + $0x50] sm:$0xff]
    %v3256 = vld [vmem:[#allocation13 + $0x58] sm:$0xff]
    %v3257 = vld [vmem:[#allocation13 + $0x60] sm:$0xff]
    %v3258 = vld [vmem:[#allocation13 + $0x68] sm:$0xff]
    %v3259 = vld [vmem:[#allocation13 + $0x70] sm:$0xff]
    %v3260 = vld [vmem:[#allocation13 + $0x78] sm:$0xff]
    %v3261 = vld [vmem:[%s12] sm:$0x1]
    %v3263 = vlaneseq
    %v3264 = vshrl.u32 %v3263, 7
    %v3265 = vsub.s32 0, %v3264
    %v3266 = vrot.slane %v3261, %v3265
    %3268 = vmatprep.subr.mxu0 0.0
    %3269 = vmatpush1.msra.mxu0 %v3245
    %3270 = vmatprep.subr.mxu0 0.0
    %3271 = vmatpush1.msra.mxu0 %v3246
    %3272 = vmatprep.subr.mxu0 0.0
    %3273 = vmatpush1.msra.mxu0 %v3247
    %3274 = vmatprep.subr.mxu0 0.0
    %3275 = vmatpush1.msra.mxu0 %v3248
    %3276 = vmatprep.subr.mxu0 0.0
    %3277 = vmatpush1.msra.mxu0 %v3249
    %3278 = vmatprep.subr.mxu0 0.0
    %3279 = vmatpush1.msra.mxu0 %v3250
    %3280 = vmatprep.subr.mxu0 0.0
    %3281 = vmatpush1.msra.mxu0 %v3251
    %3282 = vmatprep.subr.mxu0 0.0
    %3283 = vmatpush1.msra.mxu0 %v3252
    %3284 = vmatprep.subr.mxu0 0.0
    %3285 = vmatpush1.msra.mxu0 %v3253
    %3286 = vmatprep.subr.mxu0 0.0
    %3287 = vmatpush1.msra.mxu0 %v3254
    %3288 = vmatprep.subr.mxu0 0.0
    %3289 = vmatpush1.msra.mxu0 %v3255
    %3290 = vmatprep.subr.mxu0 0.0
    %3291 = vmatpush1.msra.mxu0 %v3256
    %3292 = vmatprep.subr.mxu0 0.0
    %3293 = vmatpush1.msra.mxu0 %v3257
    %3294 = vmatprep.subr.mxu0 0.0
    %3295 = vmatpush1.msra.mxu0 %v3258
    %3296 = vmatprep.subr.mxu0 0.0
    %3297 = vmatpush1.msra.mxu0 %v3259
    %3298 = vmatprep.subr.mxu0 0.0
    %3299 = vmatpush1.msra.mxu0 %v3260
    %3300 = vmatprep.subr.mxu0 0.0
    %3301 = vmatpush1.msra.mxu0 0.0
    %3302 = vmatprep.subr.mxu0 0.0
    %3303 = vmatpush1.msra.mxu0 0.0
    %3304 = vmatprep.subr.mxu0 0.0
    %3305 = vmatpush1.msra.mxu0 0.0
    %3306 = vmatprep.subr.mxu0 0.0
    %3307 = vmatpush1.msra.mxu0 0.0
    %3308 = vmatprep.subr.mxu0 0.0
    %3309 = vmatpush1.msra.mxu0 0.0
    %3310 = vmatprep.subr.mxu0 0.0
    %3311 = vmatpush1.msra.mxu0 0.0
    %3312 = vmatprep.subr.mxu0 0.0
    %3313 = vmatpush1.msra.mxu0 0.0
    %3314 = vmatprep.subr.mxu0 0.0
    %3315 = vmatpush1.msra.mxu0 0.0
    %3316 = vmatprep.subr.mxu0 0.0
    %3317 = vmatpush1.msra.mxu0 0.0
    %3318 = vmatprep.subr.mxu0 0.0
    %3319 = vmatpush1.msra.mxu0 0.0
    %3320 = vmatprep.subr.mxu0 0.0
    %3321 = vmatpush1.msra.mxu0 0.0
    %3322 = vmatprep.subr.mxu0 0.0
    %3323 = vmatpush1.msra.mxu0 0.0
    %3324 = vmatprep.subr.mxu0 0.0
    %3325 = vmatpush1.msra.mxu0 0.0
    %3326 = vmatprep.subr.mxu0 0.0
    %3327 = vmatpush1.msra.mxu0 0.0
    %3328 = vmatprep.subr.mxu0 0.0
    %3329 = vmatpush1.msra.mxu0 0.0
    %3330 = vmatprep.subr.mxu0 0.0
    %3331 = vmatpush1.msra.mxu0 0.0
    %3332 = vmatprep.mubr.f32.mxu0 0.0
    %3333 = vmatmul.mubr.f32.gmra.mrb[0].mxu0 %v3244
    %v3334 = vpop.f32.mrb[0].mxu0
    %v3335 = vadd.f32 %v3266, %v3334
    %v3336 = vpop.f32.mrb[0].mxu0
    %3337 = vdwg.mxu0
    %v3340 = vsel %vm3171, %v3145, %v3132
    %3342 = vmatprep.subr.mxu0 0.0
    %3343 = vmatpush1.msra.mxu0 %v3146
    %3344 = vmatprep.subr.mxu0 0.0
    %3345 = vmatpush1.msra.mxu0 %v3147
    %3346 = vmatprep.subr.mxu0 0.0
    %3347 = vmatpush1.msra.mxu0 %v3148
    %3348 = vmatprep.subr.mxu0 0.0
    %3349 = vmatpush1.msra.mxu0 %v3149
    %3350 = vmatprep.subr.mxu0 0.0
    %3351 = vmatpush1.msra.mxu0 %v3150
    %3352 = vmatprep.subr.mxu0 0.0
    %3353 = vmatpush1.msra.mxu0 %v3151
    %3354 = vmatprep.subr.mxu0 0.0
    %3355 = vmatpush1.msra.mxu0 %v3152
    %3356 = vmatprep.subr.mxu0 0.0
    %3357 = vmatpush1.msra.mxu0 %v3153
    %3358 = vmatprep.subr.mxu0 0.0
    %3359 = vmatpush1.msra.mxu0 %v3154
    %3360 = vmatprep.subr.mxu0 0.0
    %3361 = vmatpush1.msra.mxu0 %v3155
    %3362 = vmatprep.subr.mxu0 0.0
    %3363 = vmatpush1.msra.mxu0 %v3156
    %3364 = vmatprep.subr.mxu0 0.0
    %3365 = vmatpush1.msra.mxu0 %v3157
    %3366 = vmatprep.subr.mxu0 0.0
    %3367 = vmatpush1.msra.mxu0 %v3158
    %3368 = vmatprep.subr.mxu0 0.0
    %3369 = vmatpush1.msra.mxu0 %v3159
    %3370 = vmatprep.subr.mxu0 0.0
    %3371 = vmatpush1.msra.mxu0 %v3160
    %3372 = vmatprep.subr.mxu0 0.0
    %3373 = vmatpush1.msra.mxu0 %v3161
    %3374 = vmatprep.subr.mxu0 0.0
    %3375 = vmatpush1.msra.mxu0 0.0
    %3376 = vmatprep.subr.mxu0 0.0
    %3377 = vmatpush1.msra.mxu0 0.0
    %3378 = vmatprep.subr.mxu0 0.0
    %3379 = vmatpush1.msra.mxu0 0.0
    %3380 = vmatprep.subr.mxu0 0.0
    %3381 = vmatpush1.msra.mxu0 0.0
    %3382 = vmatprep.subr.mxu0 0.0
    %3383 = vmatpush1.msra.mxu0 0.0
    %3384 = vmatprep.subr.mxu0 0.0
    %3385 = vmatpush1.msra.mxu0 0.0
    %3386 = vmatprep.subr.mxu0 0.0
    %3387 = vmatpush1.msra.mxu0 0.0
    %3388 = vmatprep.subr.mxu0 0.0
    %3389 = vmatpush1.msra.mxu0 0.0
    %3390 = vmatprep.subr.mxu0 0.0
    %3391 = vmatpush1.msra.mxu0 0.0
    %3392 = vmatprep.subr.mxu0 0.0
    %3393 = vmatpush1.msra.mxu0 0.0
    %3394 = vmatprep.subr.mxu0 0.0
    %3395 = vmatpush1.msra.mxu0 0.0
    %3396 = vmatprep.subr.mxu0 0.0
    %3397 = vmatpush1.msra.mxu0 0.0
    %3398 = vmatprep.subr.mxu0 0.0
    %3399 = vmatpush1.msra.mxu0 0.0
    %3400 = vmatprep.subr.mxu0 0.0
    %3401 = vmatpush1.msra.mxu0 0.0
    %3402 = vmatprep.subr.mxu0 0.0
    %3403 = vmatpush1.msra.mxu0 0.0
    %3404 = vmatprep.subr.mxu0 0.0
    %3405 = vmatpush1.msra.mxu0 0.0
    %3406 = vmatprep.mubr.f32.mxu0 0.0
    %3407 = vmatmul.mubr.f32.gmra.mrb[0].mxu0 %v3340
    %v3408 = vpop.f32.mrb[0].mxu0
    %v3409 = vadd.f32 %v3167, %v3408
    %v3410 = vpop.f32.mrb[0].mxu0
    %3411 = vdwg.mxu0
    %v3412 = vmax.f32 %v3409, 0.0
    %3413 = vmatprep.subr.mxu0 0.0
    %3414 = vmatpush1.msra.mxu0 %v3245
    %3415 = vmatprep.subr.mxu0 0.0
    %3416 = vmatpush1.msra.mxu0 %v3246
    %3417 = vmatprep.subr.mxu0 0.0
    %3418 = vmatpush1.msra.mxu0 %v3247
    %3419 = vmatprep.subr.mxu0 0.0
    %3420 = vmatpush1.msra.mxu0 %v3248
    %3421 = vmatprep.subr.mxu0 0.0
    %3422 = vmatpush1.msra.mxu0 %v3249
    %3423 = vmatprep.subr.mxu0 0.0
    %3424 = vmatpush1.msra.mxu0 %v3250
    %3425 = vmatprep.subr.mxu0 0.0
    %3426 = vmatpush1.msra.mxu0 %v3251
    %3427 = vmatprep.subr.mxu0 0.0
    %3428 = vmatpush1.msra.mxu0 %v3252
    %3429 = vmatprep.subr.mxu0 0.0
    %3430 = vmatpush1.msra.mxu0 %v3253
    %3431 = vmatprep.subr.mxu0 0.0
    %3432 = vmatpush1.msra.mxu0 %v3254
    %3433 = vmatprep.subr.mxu0 0.0
    %3434 = vmatpush1.msra.mxu0 %v3255
    %3435 = vmatprep.subr.mxu0 0.0
    %3436 = vmatpush1.msra.mxu0 %v3256
    %3437 = vmatprep.subr.mxu0 0.0
    %3438 = vmatpush1.msra.mxu0 %v3257
    %3439 = vmatprep.subr.mxu0 0.0
    %3440 = vmatpush1.msra.mxu0 %v3258
    %3441 = vmatprep.subr.mxu0 0.0
    %3442 = vmatpush1.msra.mxu0 %v3259
    %3443 = vmatprep.subr.mxu0 0.0
    %3444 = vmatpush1.msra.mxu0 %v3260
    %3445 = vmatprep.subr.mxu0 0.0
    %3446 = vmatpush1.msra.mxu0 0.0
    %3447 = vmatprep.subr.mxu0 0.0
    %3448 = vmatpush1.msra.mxu0 0.0
    %3449 = vmatprep.subr.mxu0 0.0
    %3450 = vmatpush1.msra.mxu0 0.0
    %3451 = vmatprep.subr.mxu0 0.0
    %3452 = vmatpush1.msra.mxu0 0.0
    %3453 = vmatprep.subr.mxu0 0.0
    %3454 = vmatpush1.msra.mxu0 0.0
    %3455 = vmatprep.subr.mxu0 0.0
    %3456 = vmatpush1.msra.mxu0 0.0
    %3457 = vmatprep.subr.mxu0 0.0
    %3458 = vmatpush1.msra.mxu0 0.0
    %3459 = vmatprep.subr.mxu0 0.0
    %3460 = vmatpush1.msra.mxu0 0.0
    %3461 = vmatprep.subr.mxu0 0.0
    %3462 = vmatpush1.msra.mxu0 0.0
    %3463 = vmatprep.subr.mxu0 0.0
    %3464 = vmatpush1.msra.mxu0 0.0
    %3465 = vmatprep.subr.mxu0 0.0
    %3466 = vmatpush1.msra.mxu0 0.0
    %3467 = vmatprep.subr.mxu0 0.0
    %3468 = vmatpush1.msra.mxu0 0.0
    %3469 = vmatprep.subr.mxu0 0.0
    %3470 = vmatpush1.msra.mxu0 0.0
    %3471 = vmatprep.subr.mxu0 0.0
    %3472 = vmatpush1.msra.mxu0 0.0
    %3473 = vmatprep.subr.mxu0 0.0
    %3474 = vmatpush1.msra.mxu0 0.0
    %3475 = vmatprep.subr.mxu0 0.0
    %3476 = vmatpush1.msra.mxu0 0.0
    %3477 = vmatprep.mubr.f32.mxu0 0.0
    %3478 = vmatmul.mubr.f32.gmra.mrb[0].mxu0 %v3412
    %v3479 = vpop.f32.mrb[0].mxu0
    %v3480 = vadd.f32 %v3266, %v3479
    %v3481 = vpop.f32.mrb[0].mxu0
    %3482 = vdwg.mxu0
    %v3483 = vadd.f32 %v3335, %v3480
    %v3484 = vxor.u32 %v3483, 2147483648
    %v3485 = vmul.f32 %v3484, 1.442695
    %v3486 = vpow.pop %v3485
    %v3487 = vadd.f32 %v3486, 1.0
    %v3488 = vrcp.pop %v3487
    %v3489 = vmul.f32 1.0, %v3488
    %v3492 = vunpack.c.l.s4 1966171168
    %v3493 = vunpack.c.0.s8 %v3492
    %v3494 = vlaneseq
    %v3495 = vshrl.u32 %v3494, 7
    %v3496 = vsub.s32 %v3493, %v3495
    %v3497 = vrot.slane %v3489, %v3496
    %v3498 = vcombine.high %v3497, %v3497
    %v3500 = vunpack.c.l.s4 1966171168
    %v3501 = vunpack.c.0.s8 %v3500
    %v3502 = vlaneseq
    %v3503 = vshrl.u32 %v3502, 7
    %v3504 = vsub.s32 %v3501, %v3503
    %v3505 = vrot.slane %v3497, %v3504
    %v3507 = vunpack.c.l.s4 1966171168
    %v3508 = vunpack.c.0.s8 %v3507
    %v3509 = vlaneseq
    %v3510 = vshrl.u32 %v3509, 7
    %v3511 = vsub.s32 %v3508, %v3510
    %v3512 = vrot.slane %v3498, %v3511
    %v3513 = vlaneseq
    %v3514 = vshrl.u32 %v3513, 7
    %v3515 = vsub.s32 0, %v3514
    %v3516 = vrot.slane %v3505, %v3515
    %v3517 = vlaneseq
    %v3518 = vshrl.u32 %v3517, 7
    %v3519 = vsub.s32 0, %v3518
    %v3520 = vrot.slane %v3512, %v3519
    %v3523 = vmul.f32 %v3030, %v3516
    %v3524 = vmul.f32 %v3033, %v3516
    %v3525 = vmul.f32 %v3038, %v3516
    %v3526 = vmul.f32 %v3041, %v3516
    %v3527 = vmul.f32 %v3046, %v3516
    %v3528 = vmul.f32 %v3049, %v3516
    %v3529 = vmul.f32 %v3054, %v3516
    %v3530 = vmul.f32 %v3057, %v3516
    %v3531 = vmul.f32 %v3062, %v3520
    %v3532 = vmul.f32 %v3065, %v3520
    %v3533 = vmul.f32 %v3070, %v3520
    %v3534 = vmul.f32 %v3073, %v3520
    %v3535 = vmul.f32 %v3078, %v3520
    %v3536 = vmul.f32 %v3081, %v3520
    %v3537 = vmul.f32 %v3086, %v3520
    %v3538 = vmul.f32 %v3089, %v3520
    %v3539 = vlaneseq
    %v3540 = vand.u32 %v3539, 127
    %vm3541 = vcmp.lt.s32.totalorder %v3540, 32
    %v3542 = vsel %vm3541, 0.0, -1e+30
    %v3543 = vadd.f32 %v3523, %v3542
    %v3544 = vadd.f32 %v3524, %v3542
    %v3545 = vadd.f32 %v3525, %v3542
    %v3546 = vadd.f32 %v3526, %v3542
    %v3547 = vadd.f32 %v3527, %v3542
    %v3548 = vadd.f32 %v3528, %v3542
    %v3549 = vadd.f32 %v3529, %v3542
    %v3550 = vadd.f32 %v3530, %v3542
    %v3551 = vadd.f32 %v3531, %v3542
    %v3552 = vadd.f32 %v3532, %v3542
    %v3553 = vadd.f32 %v3533, %v3542
    %v3554 = vadd.f32 %v3534, %v3542
    %v3555 = vadd.f32 %v3535, %v3542
    %v3556 = vadd.f32 %v3536, %v3542
    %v3557 = vadd.f32 %v3537, %v3542
    %v3558 = vadd.f32 %v3538, %v3542
    %3559 = vmax.xlane.f32.xlu0 %v3543
    %v3560 = vpop.xlane.xlu0 %3559
    %3561 = vmax.xlane.f32.xlu0 %v3544
    %v3562 = vpop.xlane.xlu0 %3561
    %3563 = vmax.xlane.f32.xlu0 %v3545
    %v3564 = vpop.xlane.xlu0 %3563
    %3565 = vmax.xlane.f32.xlu0 %v3546
    %v3566 = vpop.xlane.xlu0 %3565
    %3567 = vmax.xlane.f32.xlu0 %v3547
    %v3568 = vpop.xlane.xlu0 %3567
    %3569 = vmax.xlane.f32.xlu0 %v3548
    %v3570 = vpop.xlane.xlu0 %3569
    %3571 = vmax.xlane.f32.xlu0 %v3549
    %v3572 = vpop.xlane.xlu0 %3571
    %3573 = vmax.xlane.f32.xlu0 %v3550
    %v3574 = vpop.xlane.xlu0 %3573
    %3575 = vmax.xlane.f32.xlu0 %v3551
    %v3576 = vpop.xlane.xlu0 %3575
    %3577 = vmax.xlane.f32.xlu0 %v3552
    %v3578 = vpop.xlane.xlu0 %3577
    %3579 = vmax.xlane.f32.xlu0 %v3553
    %v3580 = vpop.xlane.xlu0 %3579
    %3581 = vmax.xlane.f32.xlu0 %v3554
    %v3582 = vpop.xlane.xlu0 %3581
    %3583 = vmax.xlane.f32.xlu0 %v3555
    %v3584 = vpop.xlane.xlu0 %3583
    %3585 = vmax.xlane.f32.xlu0 %v3556
    %v3586 = vpop.xlane.xlu0 %3585
    %3587 = vmax.xlane.f32.xlu0 %v3557
    %v3588 = vpop.xlane.xlu0 %3587
    %3589 = vmax.xlane.f32.xlu0 %v3558
    %v3590 = vpop.xlane.xlu0 %3589
    %3591 = vadd.xlane.f32.xlu0 %v3523
    %v3592 = vpop.xlane.xlu0 %3591
    %3593 = vadd.xlane.f32.xlu0 %v3524
    %v3594 = vpop.xlane.xlu0 %3593
    %3595 = vadd.xlane.f32.xlu0 %v3525
    %v3596 = vpop.xlane.xlu0 %3595
    %3597 = vadd.xlane.f32.xlu0 %v3526
    %v3598 = vpop.xlane.xlu0 %3597
    %3599 = vadd.xlane.f32.xlu0 %v3527
    %v3600 = vpop.xlane.xlu0 %3599
    %3601 = vadd.xlane.f32.xlu0 %v3528
    %v3602 = vpop.xlane.xlu0 %3601
    %3603 = vadd.xlane.f32.xlu0 %v3529
    %v3604 = vpop.xlane.xlu0 %3603
    %3605 = vadd.xlane.f32.xlu0 %v3530
    %v3606 = vpop.xlane.xlu0 %3605
    %3607 = vadd.xlane.f32.xlu0 %v3531
    %v3608 = vpop.xlane.xlu0 %3607
    %3609 = vadd.xlane.f32.xlu0 %v3532
    %v3610 = vpop.xlane.xlu0 %3609
    %3611 = vadd.xlane.f32.xlu0 %v3533
    %v3612 = vpop.xlane.xlu0 %3611
    %3613 = vadd.xlane.f32.xlu0 %v3534
    %v3614 = vpop.xlane.xlu0 %3613
    %3615 = vadd.xlane.f32.xlu0 %v3535
    %v3616 = vpop.xlane.xlu0 %3615
    %3617 = vadd.xlane.f32.xlu0 %v3536
    %v3618 = vpop.xlane.xlu0 %3617
    %3619 = vadd.xlane.f32.xlu0 %v3537
    %v3620 = vpop.xlane.xlu0 %3619
    %3621 = vadd.xlane.f32.xlu0 %v3538
    %v3622 = vpop.xlane.xlu0 %3621
    %v3623 = vmul.f32 %v3592, 0.03125
    %v3624 = vmul.f32 %v3594, 0.03125
    %v3625 = vmul.f32 %v3596, 0.03125
    %v3626 = vmul.f32 %v3598, 0.03125
    %v3627 = vmul.f32 %v3600, 0.03125
    %v3628 = vmul.f32 %v3602, 0.03125
    %v3629 = vmul.f32 %v3604, 0.03125
    %v3630 = vmul.f32 %v3606, 0.03125
    %v3631 = vmul.f32 %v3608, 0.03125
    %v3632 = vmul.f32 %v3610, 0.03125
    %v3633 = vmul.f32 %v3612, 0.03125
    %v3634 = vmul.f32 %v3614, 0.03125
    %v3635 = vmul.f32 %v3616, 0.03125
    %v3636 = vmul.f32 %v3618, 0.03125
    %v3637 = vmul.f32 %v3620, 0.03125
    %v3638 = vmul.f32 %v3622, 0.03125
    %vm3639 = vcmask 124928
    %3640 = vst.msk [vmem:[#allocation2] sm:$0x7] %vm3639, 0.0
    %3641 = vst.msk [vmem:[#allocation2 + $0x10] sm:$0x7] %vm3639, 0.0
    %3642 = vst.msk [vmem:[#allocation2 + $0xb] sm:$0x7] %vm3639, 0.0
    %3643 = vst.msk [vmem:[#allocation2 + $0x1b] sm:$0x7] %vm3639, 0.0
    %v3660 = vlaneseq
    %v3661 = vshrl.u32 %v3660, 7
    %v3662 = vsub.s32 %v3540, %v3661
    %v3663 = vrot.slane %v3560, %v3662
    %v3664 = vlaneseq
    %v3665 = vshrl.u32 %v3664, 7
    %v3666 = vsub.s32 %v3540, %v3665
    %v3667 = vrot.slane %v3562, %v3666
    %v3668 = vlaneseq
    %v3669 = vshrl.u32 %v3668, 7
    %v3670 = vsub.s32 %v3540, %v3669
    %v3671 = vrot.slane %v3564, %v3670
    %v3672 = vlaneseq
    %v3673 = vshrl.u32 %v3672, 7
    %v3674 = vsub.s32 %v3540, %v3673
    %v3675 = vrot.slane %v3566, %v3674
    %v3676 = vlaneseq
    %v3677 = vshrl.u32 %v3676, 7
    %v3678 = vsub.s32 %v3540, %v3677
    %v3679 = vrot.slane %v3568, %v3678
    %v3680 = vlaneseq
    %v3681 = vshrl.u32 %v3680, 7
    %v3682 = vsub.s32 %v3540, %v3681
    %v3683 = vrot.slane %v3570, %v3682
    %v3684 = vlaneseq
    %v3685 = vshrl.u32 %v3684, 7
    %v3686 = vsub.s32 %v3540, %v3685
    %v3687 = vrot.slane %v3572, %v3686
    %v3688 = vlaneseq
    %v3689 = vshrl.u32 %v3688, 7
    %v3690 = vsub.s32 %v3540, %v3689
    %v3691 = vrot.slane %v3574, %v3690
    %v3692 = vlaneseq
    %v3693 = vshrl.u32 %v3692, 7
    %v3694 = vsub.s32 %v3540, %v3693
    %v3695 = vrot.slane %v3576, %v3694
    %v3696 = vlaneseq
    %v3697 = vshrl.u32 %v3696, 7
    %v3698 = vsub.s32 %v3540, %v3697
    %v3699 = vrot.slane %v3578, %v3698
    %v3700 = vlaneseq
    %v3701 = vshrl.u32 %v3700, 7
    %v3702 = vsub.s32 %v3540, %v3701
    %v3703 = vrot.slane %v3580, %v3702
    %v3704 = vlaneseq
    %v3705 = vshrl.u32 %v3704, 7
    %v3706 = vsub.s32 %v3540, %v3705
    %v3707 = vrot.slane %v3582, %v3706
    %v3708 = vlaneseq
    %v3709 = vshrl.u32 %v3708, 7
    %v3710 = vsub.s32 %v3540, %v3709
    %v3711 = vrot.slane %v3584, %v3710
    %v3712 = vlaneseq
    %v3713 = vshrl.u32 %v3712, 7
    %v3714 = vsub.s32 %v3540, %v3713
    %v3715 = vrot.slane %v3586, %v3714
    %v3716 = vlaneseq
    %v3717 = vshrl.u32 %v3716, 7
    %v3718 = vsub.s32 %v3540, %v3717
    %v3719 = vrot.slane %v3588, %v3718
    %v3720 = vlaneseq
    %v3721 = vshrl.u32 %v3720, 7
    %v3722 = vsub.s32 %v3540, %v3721
    %v3723 = vrot.slane %v3590, %v3722
    %v3724 = vsel %vm3171, %v3667, %v3663
    %vm3725 = vcmask 1042434
    %v3726 = vsel %vm3725, %v3671, %v3724
    %vm3727 = vcmask 1043459
    %v3728 = vsel %vm3727, %v3675, %v3726
    %vm3729 = vcmask 1044484
    %v3730 = vsel %vm3729, %v3679, %v3728
    %vm3731 = vcmask 1045509
    %v3732 = vsel %vm3731, %v3683, %v3730
    %vm3733 = vcmask 1046534
    %v3734 = vsel %vm3733, %v3687, %v3732
    %vm3735 = vcmask 1047559
    %v3736 = vsel %vm3735, %v3691, %v3734
    %v3737 = vsel %vm3171, %v3699, %v3695
    %v3738 = vsel %vm3725, %v3703, %v3737
    %v3739 = vsel %vm3727, %v3707, %v3738
    %v3740 = vsel %vm3729, %v3711, %v3739
    %v3741 = vsel %vm3731, %v3715, %v3740
    %v3742 = vsel %vm3733, %v3719, %v3741
    %v3743 = vsel %vm3735, %v3723, %v3742
    %vm3746 = vcmask 64512
    %3747 = vst.msk [vmem:[#allocation2 + $0x3] sm:$0xff] %vm3746, %v3736
    %3748 = vst.msk [vmem:[#allocation2 + $0x13] sm:$0xff] %vm3746, %v3743
    %v3765 = vadd.s32 %v3540, 4294967288
    %v3766 = vlaneseq
    %v3767 = vshrl.u32 %v3766, 7
    %v3768 = vsub.s32 %v3765, %v3767
    %v3769 = vrot.slane %v3623, %v3768
    %v3770 = vlaneseq
    %v3771 = vshrl.u32 %v3770, 7
    %v3772 = vsub.s32 %v3765, %v3771
    %v3773 = vrot.slane %v3624, %v3772
    %v3774 = vlaneseq
    %v3775 = vshrl.u32 %v3774, 7
    %v3776 = vsub.s32 %v3765, %v3775
    %v3777 = vrot.slane %v3625, %v3776
    %v3778 = vlaneseq
    %v3779 = vshrl.u32 %v3778, 7
    %v3780 = vsub.s32 %v3765, %v3779
    %v3781 = vrot.slane %v3626, %v3780
    %v3782 = vlaneseq
    %v3783 = vshrl.u32 %v3782, 7
    %v3784 = vsub.s32 %v3765, %v3783
    %v3785 = vrot.slane %v3627, %v3784
    %v3786 = vlaneseq
    %v3787 = vshrl.u32 %v3786, 7
    %v3788 = vsub.s32 %v3765, %v3787
    %v3789 = vrot.slane %v3628, %v3788
    %v3790 = vlaneseq
    %v3791 = vshrl.u32 %v3790, 7
    %v3792 = vsub.s32 %v3765, %v3791
    %v3793 = vrot.slane %v3629, %v3792
    %v3794 = vlaneseq
    %v3795 = vshrl.u32 %v3794, 7
    %v3796 = vsub.s32 %v3765, %v3795
    %v3797 = vrot.slane %v3630, %v3796
    %v3798 = vlaneseq
    %v3799 = vshrl.u32 %v3798, 7
    %v3800 = vsub.s32 %v3765, %v3799
    %v3801 = vrot.slane %v3631, %v3800
    %v3802 = vlaneseq
    %v3803 = vshrl.u32 %v3802, 7
    %v3804 = vsub.s32 %v3765, %v3803
    %v3805 = vrot.slane %v3632, %v3804
    %v3806 = vlaneseq
    %v3807 = vshrl.u32 %v3806, 7
    %v3808 = vsub.s32 %v3765, %v3807
    %v3809 = vrot.slane %v3633, %v3808
    %v3810 = vlaneseq
    %v3811 = vshrl.u32 %v3810, 7
    %v3812 = vsub.s32 %v3765, %v3811
    %v3813 = vrot.slane %v3634, %v3812
    %v3814 = vlaneseq
    %v3815 = vshrl.u32 %v3814, 7
    %v3816 = vsub.s32 %v3765, %v3815
    %v3817 = vrot.slane %v3635, %v3816
    %v3818 = vlaneseq
    %v3819 = vshrl.u32 %v3818, 7
    %v3820 = vsub.s32 %v3765, %v3819
    %v3821 = vrot.slane %v3636, %v3820
    %v3822 = vlaneseq
    %v3823 = vshrl.u32 %v3822, 7
    %v3824 = vsub.s32 %v3765, %v3823
    %v3825 = vrot.slane %v3637, %v3824
    %v3826 = vlaneseq
    %v3827 = vshrl.u32 %v3826, 7
    %v3828 = vsub.s32 %v3765, %v3827
    %v3829 = vrot.slane %v3638, %v3828
    %v3830 = vsel %vm3171, %v3773, %v3769
    %v3831 = vsel %vm3725, %v3777, %v3830
    %v3832 = vsel %vm3727, %v3781, %v3831
    %v3833 = vsel %vm3729, %v3785, %v3832
    %v3834 = vsel %vm3731, %v3789, %v3833
    %v3835 = vsel %vm3733, %v3793, %v3834
    %v3836 = vsel %vm3735, %v3797, %v3835
    %v3837 = vsel %vm3171, %v3805, %v3801
    %v3838 = vsel %vm3725, %v3809, %v3837
    %v3839 = vsel %vm3727, %v3813, %v3838
    %v3840 = vsel %vm3729, %v3817, %v3839
    %v3841 = vsel %vm3731, %v3821, %v3840
    %v3842 = vsel %vm3733, %v3825, %v3841
    %v3843 = vsel %vm3735, %v3829, %v3842
    %vm3846 = vcmask 130112
    %3847 = vst.msk [vmem:[#allocation2 + $0x3] sm:$0xff] %vm3846, %v3836
    %3848 = vst.msk [vmem:[#allocation2 + $0x13] sm:$0xff] %vm3846, %v3843
    %v3849 = vld [vmem:[#allocation2] sm:$0xff]
    %v3850 = vld [vmem:[#allocation2 + $0x10] sm:$0xff]
    %v3851 = vld [vmem:[%s13] sm:$0xff]
    %v3852 = vld [vmem:[%s13 + $0x8] sm:$0xff]
    %v3853 = vld [vmem:[#allocation2 + $0x1] sm:$0xff]
    %v3854 = vld [vmem:[#allocation2 + $0x11] sm:$0xff]
    %s3855 = scalar_lea.vmem %s13, 16
    %v3856 = vld [vmem:[%s3855] sm:$0xff]
    %v3857 = vld [vmem:[%s3855 + $0x8] sm:$0xff]
    %vm3858 = vcmask 130048
    %v3860 = vsel %vm3858, %v3853, 0
    %v3863 = vsel %vm3858, %v3854, 0
    %3865 = vmatprep.subr.mxu0 0.0
    %3866 = vmatpush1.msra.mxu0 %v3856
    %3867 = vmatprep.subr.mxu0 0.0
    %3868 = vmatpush1.msra.mxu0 %v3857
    %3869 = vmatprep.subr.mxu0 0.0
    %3870 = vmatpush1.msra.mxu0 0.0
    %3871 = vmatprep.subr.mxu0 0.0
    %3872 = vmatpush1.msra.mxu0 0.0
    %3873 = vmatprep.subr.mxu0 0.0
    %3874 = vmatpush1.msra.mxu0 0.0
    %3875 = vmatprep.subr.mxu0 0.0
    %3876 = vmatpush1.msra.mxu0 0.0
    %3877 = vmatprep.subr.mxu0 0.0
    %3878 = vmatpush1.msra.mxu0 0.0
    %3879 = vmatprep.subr.mxu0 0.0
    %3880 = vmatpush1.msra.mxu0 0.0
    %3881 = vmatprep.subr.mxu0 0.0
    %3882 = vmatpush1.msra.mxu0 0.0
    %3883 = vmatprep.subr.mxu0 0.0
    %3884 = vmatpush1.msra.mxu0 0.0
    %3885 = vmatprep.subr.mxu0 0.0
    %3886 = vmatpush1.msra.mxu0 0.0
    %3887 = vmatprep.subr.mxu0 0.0
    %3888 = vmatpush1.msra.mxu0 0.0
    %3889 = vmatprep.subr.mxu0 0.0
    %3890 = vmatpush1.msra.mxu0 0.0
    %3891 = vmatprep.subr.mxu0 0.0
    %3892 = vmatpush1.msra.mxu0 0.0
    %3893 = vmatprep.subr.mxu0 0.0
    %3894 = vmatpush1.msra.mxu0 0.0
    %3895 = vmatprep.subr.mxu0 0.0
    %3896 = vmatpush1.msra.mxu0 0.0
    %3897 = vmatprep.subr.mxu0 0.0
    %3898 = vmatpush1.msra.mxu0 0.0
    %3899 = vmatprep.subr.mxu0 0.0
    %3900 = vmatpush1.msra.mxu0 0.0
    %3901 = vmatprep.subr.mxu0 0.0
    %3902 = vmatpush1.msra.mxu0 0.0
    %3903 = vmatprep.subr.mxu0 0.0
    %3904 = vmatpush1.msra.mxu0 0.0
    %3905 = vmatprep.subr.mxu0 0.0
    %3906 = vmatpush1.msra.mxu0 0.0
    %3907 = vmatprep.subr.mxu0 0.0
    %3908 = vmatpush1.msra.mxu0 0.0
    %3909 = vmatprep.subr.mxu0 0.0
    %3910 = vmatpush1.msra.mxu0 0.0
    %3911 = vmatprep.subr.mxu0 0.0
    %3912 = vmatpush1.msra.mxu0 0.0
    %3913 = vmatprep.subr.mxu0 0.0
    %3914 = vmatpush1.msra.mxu0 0.0
    %3915 = vmatprep.subr.mxu0 0.0
    %3916 = vmatpush1.msra.mxu0 0.0
    %3917 = vmatprep.subr.mxu0 0.0
    %3918 = vmatpush1.msra.mxu0 0.0
    %3919 = vmatprep.subr.mxu0 0.0
    %3920 = vmatpush1.msra.mxu0 0.0
    %3921 = vmatprep.subr.mxu0 0.0
    %3922 = vmatpush1.msra.mxu0 0.0
    %3923 = vmatprep.subr.mxu0 0.0
    %3924 = vmatpush1.msra.mxu0 0.0
    %3925 = vmatprep.subr.mxu0 0.0
    %3926 = vmatpush1.msra.mxu0 0.0
    %3927 = vmatprep.subr.mxu0 0.0
    %3928 = vmatpush1.msra.mxu0 0.0
    %3929 = vmatprep.mubr.f32.mxu0 0.0
    %3930 = vmatmul.mubr.f32.gmra.mrb[0].mxu0 %v3860
    %v3931 = vpop.f32.mrb[0].mxu0
    %v3932 = vadd.f32 0.0, %v3931
    %v3933 = vpop.f32.mrb[0].mxu0
    %3934 = vmatprep.mubr.f32.mxu0 0.0
    %3935 = vmatmul.mubr.f32.gmra.mrb[0].mxu0 %v3863
    %v3936 = vpop.f32.mrb[0].mxu0
    %v3937 = vadd.f32 0.0, %v3936
    %v3938 = vpop.f32.mrb[0].mxu0
    %3939 = vdwg.mxu0
    %v3941 = vsel %vm3858, %v3849, 0
    %v3944 = vsel %vm3858, %v3850, 0
    %3946 = vmatprep.subr.mxu0 0.0
    %3947 = vmatpush1.msra.mxu0 %v3851
    %3948 = vmatprep.subr.mxu0 0.0
    %3949 = vmatpush1.msra.mxu0 %v3852
    %3950 = vmatprep.subr.mxu0 0.0
    %3951 = vmatpush1.msra.mxu0 0.0
    %3952 = vmatprep.subr.mxu0 0.0
    %3953 = vmatpush1.msra.mxu0 0.0
    %3954 = vmatprep.subr.mxu0 0.0
    %3955 = vmatpush1.msra.mxu0 0.0
    %3956 = vmatprep.subr.mxu0 0.0
    %3957 = vmatpush1.msra.mxu0 0.0
    %3958 = vmatprep.subr.mxu0 0.0
    %3959 = vmatpush1.msra.mxu0 0.0
    %3960 = vmatprep.subr.mxu0 0.0
    %3961 = vmatpush1.msra.mxu0 0.0
    %3962 = vmatprep.subr.mxu0 0.0
    %3963 = vmatpush1.msra.mxu0 0.0
    %3964 = vmatprep.subr.mxu0 0.0
    %3965 = vmatpush1.msra.mxu0 0.0
    %3966 = vmatprep.subr.mxu0 0.0
    %3967 = vmatpush1.msra.mxu0 0.0
    %3968 = vmatprep.subr.mxu0 0.0
    %3969 = vmatpush1.msra.mxu0 0.0
    %3970 = vmatprep.subr.mxu0 0.0
    %3971 = vmatpush1.msra.mxu0 0.0
    %3972 = vmatprep.subr.mxu0 0.0
    %3973 = vmatpush1.msra.mxu0 0.0
    %3974 = vmatprep.subr.mxu0 0.0
    %3975 = vmatpush1.msra.mxu0 0.0
    %3976 = vmatprep.subr.mxu0 0.0
    %3977 = vmatpush1.msra.mxu0 0.0
    %3978 = vmatprep.subr.mxu0 0.0
    %3979 = vmatpush1.msra.mxu0 0.0
    %3980 = vmatprep.subr.mxu0 0.0
    %3981 = vmatpush1.msra.mxu0 0.0
    %3982 = vmatprep.subr.mxu0 0.0
    %3983 = vmatpush1.msra.mxu0 0.0
    %3984 = vmatprep.subr.mxu0 0.0
    %3985 = vmatpush1.msra.mxu0 0.0
    %3986 = vmatprep.subr.mxu0 0.0
    %3987 = vmatpush1.msra.mxu0 0.0
    %3988 = vmatprep.subr.mxu0 0.0
    %3989 = vmatpush1.msra.mxu0 0.0
    %3990 = vmatprep.subr.mxu0 0.0
    %3991 = vmatpush1.msra.mxu0 0.0
    %3992 = vmatprep.subr.mxu0 0.0
    %3993 = vmatpush1.msra.mxu0 0.0
    %3994 = vmatprep.subr.mxu0 0.0
    %3995 = vmatpush1.msra.mxu0 0.0
    %3996 = vmatprep.subr.mxu0 0.0
    %3997 = vmatpush1.msra.mxu0 0.0
    %3998 = vmatprep.subr.mxu0 0.0
    %3999 = vmatpush1.msra.mxu0 0.0
    %4000 = vmatprep.subr.mxu0 0.0
    %4001 = vmatpush1.msra.mxu0 0.0
    %4002 = vmatprep.subr.mxu0 0.0
    %4003 = vmatpush1.msra.mxu0 0.0
    %4004 = vmatprep.subr.mxu0 0.0
    %4005 = vmatpush1.msra.mxu0 0.0
    %4006 = vmatprep.subr.mxu0 0.0
    %4007 = vmatpush1.msra.mxu0 0.0
    %4008 = vmatprep.subr.mxu0 0.0
    %4009 = vmatpush1.msra.mxu0 0.0
    %4010 = vmatprep.mubr.f32.mxu0 0.0
    %4011 = vmatmul.mubr.f32.gmra.mrb[0].mxu0 %v3941
    %v4012 = vpop.f32.mrb[0].mxu0
    %v4013 = vadd.f32 %v3932, %v4012
    %v4014 = vpop.f32.mrb[0].mxu0
    %4015 = vmatprep.mubr.f32.mxu0 0.0
    %4016 = vmatmul.mubr.f32.gmra.mrb[0].mxu0 %v3944
    %v4017 = vpop.f32.mrb[0].mxu0
    %v4018 = vadd.f32 %v3937, %v4017
    %v4019 = vpop.f32.mrb[0].mxu0
    %4020 = vdwg.mxu0
    %v4021 = vld [vmem:[#allocation2 + $0x2] sm:$0xff]
    %v4022 = vld [vmem:[#allocation2 + $0x12] sm:$0xff]
    %s4023 = scalar_lea.vmem %s13, 32
    %v4024 = vld [vmem:[%s4023] sm:$0xff]
    %v4025 = vld [vmem:[%s4023 + $0x8] sm:$0xff]
    %v4027 = vsel %vm3858, %v4021, 0
    %v4030 = vsel %vm3858, %v4022, 0
    %4032 = vmatprep.subr.mxu0 0.0
    %4033 = vmatpush1.msra.mxu0 %v4024
    %4034 = vmatprep.subr.mxu0 0.0
    %4035 = vmatpush1.msra.mxu0 %v4025
    %4036 = vmatprep.subr.mxu0 0.0
    %4037 = vmatpush1.msra.mxu0 0.0
    %4038 = vmatprep.subr.mxu0 0.0
    %4039 = vmatpush1.msra.mxu0 0.0
    %4040 = vmatprep.subr.mxu0 0.0
    %4041 = vmatpush1.msra.mxu0 0.0
    %4042 = vmatprep.subr.mxu0 0.0
    %4043 = vmatpush1.msra.mxu0 0.0
    %4044 = vmatprep.subr.mxu0 0.0
    %4045 = vmatpush1.msra.mxu0 0.0
    %4046 = vmatprep.subr.mxu0 0.0
    %4047 = vmatpush1.msra.mxu0 0.0
    %4048 = vmatprep.subr.mxu0 0.0
    %4049 = vmatpush1.msra.mxu0 0.0
    %4050 = vmatprep.subr.mxu0 0.0
    %4051 = vmatpush1.msra.mxu0 0.0
    %4052 = vmatprep.subr.mxu0 0.0
    %4053 = vmatpush1.msra.mxu0 0.0
    %4054 = vmatprep.subr.mxu0 0.0
    %4055 = vmatpush1.msra.mxu0 0.0
    %4056 = vmatprep.subr.mxu0 0.0
    %4057 = vmatpush1.msra.mxu0 0.0
    %4058 = vmatprep.subr.mxu0 0.0
    %4059 = vmatpush1.msra.mxu0 0.0
    %4060 = vmatprep.subr.mxu0 0.0
    %4061 = vmatpush1.msra.mxu0 0.0
    %4062 = vmatprep.subr.mxu0 0.0
    %4063 = vmatpush1.msra.mxu0 0.0
    %4064 = vmatprep.subr.mxu0 0.0
    %4065 = vmatpush1.msra.mxu0 0.0
    %4066 = vmatprep.subr.mxu0 0.0
    %4067 = vmatpush1.msra.mxu0 0.0
    %4068 = vmatprep.subr.mxu0 0.0
    %4069 = vmatpush1.msra.mxu0 0.0
    %4070 = vmatprep.subr.mxu0 0.0
    %4071 = vmatpush1.msra.mxu0 0.0
    %4072 = vmatprep.subr.mxu0 0.0
    %4073 = vmatpush1.msra.mxu0 0.0
    %4074 = vmatprep.subr.mxu0 0.0
    %4075 = vmatpush1.msra.mxu0 0.0
    %4076 = vmatprep.subr.mxu0 0.0
    %4077 = vmatpush1.msra.mxu0 0.0
    %4078 = vmatprep.subr.mxu0 0.0
    %4079 = vmatpush1.msra.mxu0 0.0
    %4080 = vmatprep.subr.mxu0 0.0
    %4081 = vmatpush1.msra.mxu0 0.0
    %4082 = vmatprep.subr.mxu0 0.0
    %4083 = vmatpush1.msra.mxu0 0.0
    %4084 = vmatprep.subr.mxu0 0.0
    %4085 = vmatpush1.msra.mxu0 0.0
    %4086 = vmatprep.subr.mxu0 0.0
    %4087 = vmatpush1.msra.mxu0 0.0
    %4088 = vmatprep.subr.mxu0 0.0
    %4089 = vmatpush1.msra.mxu0 0.0
    %4090 = vmatprep.subr.mxu0 0.0
    %4091 = vmatpush1.msra.mxu0 0.0
    %4092 = vmatprep.subr.mxu0 0.0
    %4093 = vmatpush1.msra.mxu0 0.0
    %4094 = vmatprep.subr.mxu0 0.0
    %4095 = vmatpush1.msra.mxu0 0.0
    %4096 = vmatprep.mubr.f32.mxu0 0.0
    %4097 = vmatmul.mubr.f32.gmra.mrb[0].mxu0 %v4027
    %v4098 = vpop.f32.mrb[0].mxu0
    %v4099 = vadd.f32 0.0, %v4098
    %v4100 = vpop.f32.mrb[0].mxu0
    %4101 = vmatprep.mubr.f32.mxu0 0.0
    %4102 = vmatmul.mubr.f32.gmra.mrb[0].mxu0 %v4030
    %v4103 = vpop.f32.mrb[0].mxu0
    %v4104 = vadd.f32 0.0, %v4103
    %v4105 = vpop.f32.mrb[0].mxu0
    %4106 = vdwg.mxu0
    %v4107 = vadd.f32 %v4013, %v4099
    %v4108 = vadd.f32 %v4018, %v4104
    %v4109 = vld [vmem:[#allocation2 + $0x3] sm:$0xff]
    %v4110 = vld [vmem:[#allocation2 + $0x13] sm:$0xff]
    %s4111 = scalar_lea.vmem %s13, 48
    %v4112 = vld [vmem:[%s4111] sm:$0xff]
    %v4113 = vld [vmem:[%s4111 + $0x8] sm:$0xff]
    %v4115 = vsel %vm3858, %v4109, 0
    %v4118 = vsel %vm3858, %v4110, 0
    %4120 = vmatprep.subr.mxu0 0.0
    %4121 = vmatpush1.msra.mxu0 %v4112
    %4122 = vmatprep.subr.mxu0 0.0
    %4123 = vmatpush1.msra.mxu0 %v4113
    %4124 = vmatprep.subr.mxu0 0.0
    %4125 = vmatpush1.msra.mxu0 0.0
    %4126 = vmatprep.subr.mxu0 0.0
    %4127 = vmatpush1.msra.mxu0 0.0
    %4128 = vmatprep.subr.mxu0 0.0
    %4129 = vmatpush1.msra.mxu0 0.0
    %4130 = vmatprep.subr.mxu0 0.0
    %4131 = vmatpush1.msra.mxu0 0.0
    %4132 = vmatprep.subr.mxu0 0.0
    %4133 = vmatpush1.msra.mxu0 0.0
    %4134 = vmatprep.subr.mxu0 0.0
    %4135 = vmatpush1.msra.mxu0 0.0
    %4136 = vmatprep.subr.mxu0 0.0
    %4137 = vmatpush1.msra.mxu0 0.0
    %4138 = vmatprep.subr.mxu0 0.0
    %4139 = vmatpush1.msra.mxu0 0.0
    %4140 = vmatprep.subr.mxu0 0.0
    %4141 = vmatpush1.msra.mxu0 0.0
    %4142 = vmatprep.subr.mxu0 0.0
    %4143 = vmatpush1.msra.mxu0 0.0
    %4144 = vmatprep.subr.mxu0 0.0
    %4145 = vmatpush1.msra.mxu0 0.0
    %4146 = vmatprep.subr.mxu0 0.0
    %4147 = vmatpush1.msra.mxu0 0.0
    %4148 = vmatprep.subr.mxu0 0.0
    %4149 = vmatpush1.msra.mxu0 0.0
    %4150 = vmatprep.subr.mxu0 0.0
    %4151 = vmatpush1.msra.mxu0 0.0
    %4152 = vmatprep.subr.mxu0 0.0
    %4153 = vmatpush1.msra.mxu0 0.0
    %4154 = vmatprep.subr.mxu0 0.0
    %4155 = vmatpush1.msra.mxu0 0.0
    %4156 = vmatprep.subr.mxu0 0.0
    %4157 = vmatpush1.msra.mxu0 0.0
    %4158 = vmatprep.subr.mxu0 0.0
    %4159 = vmatpush1.msra.mxu0 0.0
    %4160 = vmatprep.subr.mxu0 0.0
    %4161 = vmatpush1.msra.mxu0 0.0
    %4162 = vmatprep.subr.mxu0 0.0
    %4163 = vmatpush1.msra.mxu0 0.0
    %4164 = vmatprep.subr.mxu0 0.0
    %4165 = vmatpush1.msra.mxu0 0.0
    %4166 = vmatprep.subr.mxu0 0.0
    %4167 = vmatpush1.msra.mxu0 0.0
    %4168 = vmatprep.subr.mxu0 0.0
    %4169 = vmatpush1.msra.mxu0 0.0
    %4170 = vmatprep.subr.mxu0 0.0
    %4171 = vmatpush1.msra.mxu0 0.0
    %4172 = vmatprep.subr.mxu0 0.0
    %4173 = vmatpush1.msra.mxu0 0.0
    %4174 = vmatprep.subr.mxu0 0.0
    %4175 = vmatpush1.msra.mxu0 0.0
    %4176 = vmatprep.subr.mxu0 0.0
    %4177 = vmatpush1.msra.mxu0 0.0
    %4178 = vmatprep.subr.mxu0 0.0
    %4179 = vmatpush1.msra.mxu0 0.0
    %4180 = vmatprep.subr.mxu0 0.0
    %4181 = vmatpush1.msra.mxu0 0.0
    %4182 = vmatprep.subr.mxu0 0.0
    %4183 = vmatpush1.msra.mxu0 0.0
    %4184 = vmatprep.mubr.f32.mxu0 0.0
    %4185 = vmatmul.mubr.f32.gmra.mrb[0].mxu0 %v4115
    %v4186 = vpop.f32.mrb[0].mxu0
    %v4187 = vadd.f32 0.0, %v4186
    %v4188 = vpop.f32.mrb[0].mxu0
    %4189 = vmatprep.mubr.f32.mxu0 0.0
    %4190 = vmatmul.mubr.f32.gmra.mrb[0].mxu0 %v4118
    %v4191 = vpop.f32.mrb[0].mxu0
    %v4192 = vadd.f32 0.0, %v4191
    %v4193 = vpop.f32.mrb[0].mxu0
    %4194 = vdwg.mxu0
    %v4195 = vadd.f32 %v4107, %v4187
    %v4196 = vadd.f32 %v4108, %v4192
    %v4197 = vld [vmem:[#allocation2 + $0x4] sm:$0xff]
    %v4198 = vld [vmem:[#allocation2 + $0x14] sm:$0xff]
    %s4199 = scalar_lea.vmem %s13, 64
    %v4200 = vld [vmem:[%s4199] sm:$0xff]
    %v4201 = vld [vmem:[%s4199 + $0x8] sm:$0xff]
    %v4203 = vsel %vm3858, %v4197, 0
    %v4206 = vsel %vm3858, %v4198, 0
    %4208 = vmatprep.subr.mxu0 0.0
    %4209 = vmatpush1.msra.mxu0 %v4200
    %4210 = vmatprep.subr.mxu0 0.0
    %4211 = vmatpush1.msra.mxu0 %v4201
    %4212 = vmatprep.subr.mxu0 0.0
    %4213 = vmatpush1.msra.mxu0 0.0
    %4214 = vmatprep.subr.mxu0 0.0
    %4215 = vmatpush1.msra.mxu0 0.0
    %4216 = vmatprep.subr.mxu0 0.0
    %4217 = vmatpush1.msra.mxu0 0.0
    %4218 = vmatprep.subr.mxu0 0.0
    %4219 = vmatpush1.msra.mxu0 0.0
    %4220 = vmatprep.subr.mxu0 0.0
    %4221 = vmatpush1.msra.mxu0 0.0
    %4222 = vmatprep.subr.mxu0 0.0
    %4223 = vmatpush1.msra.mxu0 0.0
    %4224 = vmatprep.subr.mxu0 0.0
    %4225 = vmatpush1.msra.mxu0 0.0
    %4226 = vmatprep.subr.mxu0 0.0
    %4227 = vmatpush1.msra.mxu0 0.0
    %4228 = vmatprep.subr.mxu0 0.0
    %4229 = vmatpush1.msra.mxu0 0.0
    %4230 = vmatprep.subr.mxu0 0.0
    %4231 = vmatpush1.msra.mxu0 0.0
    %4232 = vmatprep.subr.mxu0 0.0
    %4233 = vmatpush1.msra.mxu0 0.0
    %4234 = vmatprep.subr.mxu0 0.0
    %4235 = vmatpush1.msra.mxu0 0.0
    %4236 = vmatprep.subr.mxu0 0.0
    %4237 = vmatpush1.msra.mxu0 0.0
    %4238 = vmatprep.subr.mxu0 0.0
    %4239 = vmatpush1.msra.mxu0 0.0
    %4240 = vmatprep.subr.mxu0 0.0
    %4241 = vmatpush1.msra.mxu0 0.0
    %4242 = vmatprep.subr.mxu0 0.0
    %4243 = vmatpush1.msra.mxu0 0.0
    %4244 = vmatprep.subr.mxu0 0.0
    %4245 = vmatpush1.msra.mxu0 0.0
    %4246 = vmatprep.subr.mxu0 0.0
    %4247 = vmatpush1.msra.mxu0 0.0
    %4248 = vmatprep.subr.mxu0 0.0
    %4249 = vmatpush1.msra.mxu0 0.0
    %4250 = vmatprep.subr.mxu0 0.0
    %4251 = vmatpush1.msra.mxu0 0.0
    %4252 = vmatprep.subr.mxu0 0.0
    %4253 = vmatpush1.msra.mxu0 0.0
    %4254 = vmatprep.subr.mxu0 0.0
    %4255 = vmatpush1.msra.mxu0 0.0
    %4256 = vmatprep.subr.mxu0 0.0
    %4257 = vmatpush1.msra.mxu0 0.0
    %4258 = vmatprep.subr.mxu0 0.0
    %4259 = vmatpush1.msra.mxu0 0.0
    %4260 = vmatprep.subr.mxu0 0.0
    %4261 = vmatpush1.msra.mxu0 0.0
    %4262 = vmatprep.subr.mxu0 0.0
    %4263 = vmatpush1.msra.mxu0 0.0
    %4264 = vmatprep.subr.mxu0 0.0
    %4265 = vmatpush1.msra.mxu0 0.0
    %4266 = vmatprep.subr.mxu0 0.0
    %4267 = vmatpush1.msra.mxu0 0.0
    %4268 = vmatprep.subr.mxu0 0.0
    %4269 = vmatpush1.msra.mxu0 0.0
    %4270 = vmatprep.subr.mxu0 0.0
    %4271 = vmatpush1.msra.mxu0 0.0
    %4272 = vmatprep.mubr.f32.mxu0 0.0
    %4273 = vmatmul.mubr.f32.gmra.mrb[0].mxu0 %v4203
    %v4274 = vpop.f32.mrb[0].mxu0
    %v4275 = vadd.f32 0.0, %v4274
    %v4276 = vpop.f32.mrb[0].mxu0
    %4277 = vmatprep.mubr.f32.mxu0 0.0
    %4278 = vmatmul.mubr.f32.gmra.mrb[0].mxu0 %v4206
    %v4279 = vpop.f32.mrb[0].mxu0
    %v4280 = vadd.f32 0.0, %v4279
    %v4281 = vpop.f32.mrb[0].mxu0
    %4282 = vdwg.mxu0
    %v4283 = vadd.f32 %v4195, %v4275
    %v4284 = vadd.f32 %v4196, %v4280
    %v4285 = vld [vmem:[#allocation2 + $0x5] sm:$0xff]
    %v4286 = vld [vmem:[#allocation2 + $0x15] sm:$0xff]
    %s4287 = scalar_lea.vmem %s13, 80
    %v4288 = vld [vmem:[%s4287] sm:$0xff]
    %v4289 = vld [vmem:[%s4287 + $0x8] sm:$0xff]
    %v4291 = vsel %vm3858, %v4285, 0
    %v4294 = vsel %vm3858, %v4286, 0
    %4296 = vmatprep.subr.mxu0 0.0
    %4297 = vmatpush1.msra.mxu0 %v4288
    %4298 = vmatprep.subr.mxu0 0.0
    %4299 = vmatpush1.msra.mxu0 %v4289
    %4300 = vmatprep.subr.mxu0 0.0
    %4301 = vmatpush1.msra.mxu0 0.0
    %4302 = vmatprep.subr.mxu0 0.0
    %4303 = vmatpush1.msra.mxu0 0.0
    %4304 = vmatprep.subr.mxu0 0.0
    %4305 = vmatpush1.msra.mxu0 0.0
    %4306 = vmatprep.subr.mxu0 0.0
    %4307 = vmatpush1.msra.mxu0 0.0
    %4308 = vmatprep.subr.mxu0 0.0
    %4309 = vmatpush1.msra.mxu0 0.0
    %4310 = vmatprep.subr.mxu0 0.0
    %4311 = vmatpush1.msra.mxu0 0.0
    %4312 = vmatprep.subr.mxu0 0.0
    %4313 = vmatpush1.msra.mxu0 0.0
    %4314 = vmatprep.subr.mxu0 0.0
    %4315 = vmatpush1.msra.mxu0 0.0
    %4316 = vmatprep.subr.mxu0 0.0
    %4317 = vmatpush1.msra.mxu0 0.0
    %4318 = vmatprep.subr.mxu0 0.0
    %4319 = vmatpush1.msra.mxu0 0.0
    %4320 = vmatprep.subr.mxu0 0.0
    %4321 = vmatpush1.msra.mxu0 0.0
    %4322 = vmatprep.subr.mxu0 0.0
    %4323 = vmatpush1.msra.mxu0 0.0
    %4324 = vmatprep.subr.mxu0 0.0
    %4325 = vmatpush1.msra.mxu0 0.0
    %4326 = vmatprep.subr.mxu0 0.0
    %4327 = vmatpush1.msra.mxu0 0.0
    %4328 = vmatprep.subr.mxu0 0.0
    %4329 = vmatpush1.msra.mxu0 0.0
    %4330 = vmatprep.subr.mxu0 0.0
    %4331 = vmatpush1.msra.mxu0 0.0
    %4332 = vmatprep.subr.mxu0 0.0
    %4333 = vmatpush1.msra.mxu0 0.0
    %4334 = vmatprep.subr.mxu0 0.0
    %4335 = vmatpush1.msra.mxu0 0.0
    %4336 = vmatprep.subr.mxu0 0.0
    %4337 = vmatpush1.msra.mxu0 0.0
    %4338 = vmatprep.subr.mxu0 0.0
    %4339 = vmatpush1.msra.mxu0 0.0
    %4340 = vmatprep.subr.mxu0 0.0
    %4341 = vmatpush1.msra.mxu0 0.0
    %4342 = vmatprep.subr.mxu0 0.0
    %4343 = vmatpush1.msra.mxu0 0.0
    %4344 = vmatprep.subr.mxu0 0.0
    %4345 = vmatpush1.msra.mxu0 0.0
    %4346 = vmatprep.subr.mxu0 0.0
    %4347 = vmatpush1.msra.mxu0 0.0
    %4348 = vmatprep.subr.mxu0 0.0
    %4349 = vmatpush1.msra.mxu0 0.0
    %4350 = vmatprep.subr.mxu0 0.0
    %4351 = vmatpush1.msra.mxu0 0.0
    %4352 = vmatprep.subr.mxu0 0.0
    %4353 = vmatpush1.msra.mxu0 0.0
    %4354 = vmatprep.subr.mxu0 0.0
    %4355 = vmatpush1.msra.mxu0 0.0
    %4356 = vmatprep.subr.mxu0 0.0
    %4357 = vmatpush1.msra.mxu0 0.0
    %4358 = vmatprep.subr.mxu0 0.0
    %4359 = vmatpush1.msra.mxu0 0.0
    %4360 = vmatprep.mubr.f32.mxu0 0.0
    %4361 = vmatmul.mubr.f32.gmra.mrb[0].mxu0 %v4291
    %v4362 = vpop.f32.mrb[0].mxu0
    %v4363 = vadd.f32 0.0, %v4362
    %v4364 = vpop.f32.mrb[0].mxu0
    %4365 = vmatprep.mubr.f32.mxu0 0.0
    %4366 = vmatmul.mubr.f32.gmra.mrb[0].mxu0 %v4294
    %v4367 = vpop.f32.mrb[0].mxu0
    %v4368 = vadd.f32 0.0, %v4367
    %v4369 = vpop.f32.mrb[0].mxu0
    %4370 = vdwg.mxu0
    %v4371 = vadd.f32 %v4283, %v4363
    %v4372 = vadd.f32 %v4284, %v4368
    %v4373 = vld [vmem:[#allocation2 + $0x6] sm:$0xff]
    %v4374 = vld [vmem:[#allocation2 + $0x16] sm:$0xff]
    %s4375 = scalar_lea.vmem %s13, 96
    %v4376 = vld [vmem:[%s4375] sm:$0xff]
    %v4377 = vld [vmem:[%s4375 + $0x8] sm:$0xff]
    %v4379 = vsel %vm3858, %v4373, 0
    %v4382 = vsel %vm3858, %v4374, 0
    %4384 = vmatprep.subr.mxu0 0.0
    %4385 = vmatpush1.msra.mxu0 %v4376
    %4386 = vmatprep.subr.mxu0 0.0
    %4387 = vmatpush1.msra.mxu0 %v4377
    %4388 = vmatprep.subr.mxu0 0.0
    %4389 = vmatpush1.msra.mxu0 0.0
    %4390 = vmatprep.subr.mxu0 0.0
    %4391 = vmatpush1.msra.mxu0 0.0
    %4392 = vmatprep.subr.mxu0 0.0
    %4393 = vmatpush1.msra.mxu0 0.0
    %4394 = vmatprep.subr.mxu0 0.0
    %4395 = vmatpush1.msra.mxu0 0.0
    %4396 = vmatprep.subr.mxu0 0.0
    %4397 = vmatpush1.msra.mxu0 0.0
    %4398 = vmatprep.subr.mxu0 0.0
    %4399 = vmatpush1.msra.mxu0 0.0
    %4400 = vmatprep.subr.mxu0 0.0
    %4401 = vmatpush1.msra.mxu0 0.0
    %4402 = vmatprep.subr.mxu0 0.0
    %4403 = vmatpush1.msra.mxu0 0.0
    %4404 = vmatprep.subr.mxu0 0.0
    %4405 = vmatpush1.msra.mxu0 0.0
    %4406 = vmatprep.subr.mxu0 0.0
    %4407 = vmatpush1.msra.mxu0 0.0
    %4408 = vmatprep.subr.mxu0 0.0
    %4409 = vmatpush1.msra.mxu0 0.0
    %4410 = vmatprep.subr.mxu0 0.0
    %4411 = vmatpush1.msra.mxu0 0.0
    %4412 = vmatprep.subr.mxu0 0.0
    %4413 = vmatpush1.msra.mxu0 0.0
    %4414 = vmatprep.subr.mxu0 0.0
    %4415 = vmatpush1.msra.mxu0 0.0
    %4416 = vmatprep.subr.mxu0 0.0
    %4417 = vmatpush1.msra.mxu0 0.0
    %4418 = vmatprep.subr.mxu0 0.0
    %4419 = vmatpush1.msra.mxu0 0.0
    %4420 = vmatprep.subr.mxu0 0.0
    %4421 = vmatpush1.msra.mxu0 0.0
    %4422 = vmatprep.subr.mxu0 0.0
    %4423 = vmatpush1.msra.mxu0 0.0
    %4424 = vmatprep.subr.mxu0 0.0
    %4425 = vmatpush1.msra.mxu0 0.0
    %4426 = vmatprep.subr.mxu0 0.0
    %4427 = vmatpush1.msra.mxu0 0.0
    %4428 = vmatprep.subr.mxu0 0.0
    %4429 = vmatpush1.msra.mxu0 0.0
    %4430 = vmatprep.subr.mxu0 0.0
    %4431 = vmatpush1.msra.mxu0 0.0
    %4432 = vmatprep.subr.mxu0 0.0
    %4433 = vmatpush1.msra.mxu0 0.0
    %4434 = vmatprep.subr.mxu0 0.0
    %4435 = vmatpush1.msra.mxu0 0.0
    %4436 = vmatprep.subr.mxu0 0.0
    %4437 = vmatpush1.msra.mxu0 0.0
    %4438 = vmatprep.subr.mxu0 0.0
    %4439 = vmatpush1.msra.mxu0 0.0
    %4440 = vmatprep.subr.mxu0 0.0
    %4441 = vmatpush1.msra.mxu0 0.0
    %4442 = vmatprep.subr.mxu0 0.0
    %4443 = vmatpush1.msra.mxu0 0.0
    %4444 = vmatprep.subr.mxu0 0.0
    %4445 = vmatpush1.msra.mxu0 0.0
    %4446 = vmatprep.subr.mxu0 0.0
    %4447 = vmatpush1.msra.mxu0 0.0
    %4448 = vmatprep.mubr.f32.mxu0 0.0
    %4449 = vmatmul.mubr.f32.gmra.mrb[0].mxu0 %v4379
    %v4450 = vpop.f32.mrb[0].mxu0
    %v4451 = vadd.f32 0.0, %v4450
    %v4452 = vpop.f32.mrb[0].mxu0
    %4453 = vmatprep.mubr.f32.mxu0 0.0
    %4454 = vmatmul.mubr.f32.gmra.mrb[0].mxu0 %v4382
    %v4455 = vpop.f32.mrb[0].mxu0
    %v4456 = vadd.f32 0.0, %v4455
    %v4457 = vpop.f32.mrb[0].mxu0
    %4458 = vdwg.mxu0
    %v4459 = vadd.f32 %v4371, %v4451
    %v4460 = vadd.f32 %v4372, %v4456
    %s4461 = sld [smem:[#allocation15]]
    %v4462 = vstv %s4461
    %v4463 = vmul.f32 %v4459, %v4462
    %v4464 = vmul.f32 %v4460, %v4462
    %s4465 = sld [smem:[#allocation15 + $0x1]]
    %v4466 = vstv %s4465
    %v4467 = vadd.f32 %v4463, %v4466
    %v4468 = vadd.f32 %v4464, %v4466
    %v4469 = vxor.u32 %v4467, 2147483648
    %v4470 = vxor.u32 %v4468, 2147483648
    %v4471 = vmul.f32 %v4469, 1.442695
    %v4472 = vpow.pop %v4471
    %v4473 = vmul.f32 %v4470, 1.442695
    %v4474 = vpow.pop %v4473
    %v4475 = vadd.f32 %v4472, 1.0
    %v4476 = vadd.f32 %v4474, 1.0
    %v4477 = vrcp.pop %v4475
    %v4478 = vmul.f32 1.0, %v4477
    %v4479 = vrcp.pop %v4476
    %v4480 = vmul.f32 1.0, %v4479
    %v4482 = vshrl.u32 %v149, 16
    %v4484 = vrot.slane %v4482, 4
    %v4485 = vshll.u32 %v149, 16
    %v4487 = vrot.slane %v4485, 5
    %v4488 = vor.u32 %v4484, %v4487
    %v4489 = vrot.slane %v4488, 4
    %v4491 = vshll.u32 %v150, 16
    %v4493 = vrot.slane %v4491, 5
    %v4494 = vsel %vm792, %v4489, %v4493
    %v4496 = vshrl.u32 %v151, 16
    %v4498 = vrot.slane %v4496, 4
    %v4499 = vshll.u32 %v151, 16
    %v4501 = vrot.slane %v4499, 5
    %v4502 = vor.u32 %v4498, %v4501
    %v4503 = vrot.slane %v4502, 4
    %v4505 = vshll.u32 %v152, 16
    %v4507 = vrot.slane %v4505, 5
    %v4508 = vsel %vm792, %v4503, %v4507
    %v4510 = vshrl.u32 %v153, 16
    %v4512 = vrot.slane %v4510, 4
    %v4513 = vshll.u32 %v153, 16
    %v4515 = vrot.slane %v4513, 5
    %v4516 = vor.u32 %v4512, %v4515
    %v4517 = vrot.slane %v4516, 4
    %v4519 = vshll.u32 %v154, 16
    %v4521 = vrot.slane %v4519, 5
    %v4522 = vsel %vm792, %v4517, %v4521
    %v4524 = vshrl.u32 %v155, 16
    %v4526 = vrot.slane %v4524, 4
    %v4527 = vshll.u32 %v155, 16
    %v4529 = vrot.slane %v4527, 5
    %v4530 = vor.u32 %v4526, %v4529
    %v4531 = vrot.slane %v4530, 4
    %v4533 = vshll.u32 %v156, 16
    %v4535 = vrot.slane %v4533, 5
    %v4536 = vsel %vm792, %v4531, %v4535
    %v4538 = vshrl.u32 %v157, 16
    %v4540 = vrot.slane %v4538, 4
    %v4541 = vshll.u32 %v157, 16
    %v4543 = vrot.slane %v4541, 5
    %v4544 = vor.u32 %v4540, %v4543
    %v4545 = vrot.slane %v4544, 4
    %v4547 = vshll.u32 %v158, 16
    %v4549 = vrot.slane %v4547, 5
    %v4550 = vsel %vm792, %v4545, %v4549
    %v4552 = vshrl.u32 %v159, 16
    %v4554 = vrot.slane %v4552, 4
    %v4555 = vshll.u32 %v159, 16
    %v4557 = vrot.slane %v4555, 5
    %v4558 = vor.u32 %v4554, %v4557
    %v4559 = vrot.slane %v4558, 4
    %v4561 = vshll.u32 %v160, 16
    %v4563 = vrot.slane %v4561, 5
    %v4564 = vsel %vm792, %v4559, %v4563
    %v4566 = vshrl.u32 %v161, 16
    %v4568 = vrot.slane %v4566, 4
    %v4569 = vshll.u32 %v161, 16
    %v4571 = vrot.slane %v4569, 5
    %v4572 = vor.u32 %v4568, %v4571
    %v4573 = vrot.slane %v4572, 4
    %v4575 = vshll.u32 %v162, 16
    %v4577 = vrot.slane %v4575, 5
    %v4578 = vsel %vm792, %v4573, %v4577
    %v4580 = vshrl.u32 %v163, 16
    %v4582 = vrot.slane %v4580, 4
    %v4583 = vshll.u32 %v163, 16
    %v4585 = vrot.slane %v4583, 5
    %v4586 = vor.u32 %v4582, %v4585
    %v4587 = vrot.slane %v4586, 4
    %v4589 = vshll.u32 %v164, 16
    %v4591 = vrot.slane %v4589, 5
    %v4592 = vsel %vm792, %v4587, %v4591
    %v4594 = vshrl.u32 %v169, 16
    %v4596 = vrot.slane %v4594, 4
    %v4597 = vshll.u32 %v169, 16
    %v4599 = vrot.slane %v4597, 5
    %v4600 = vor.u32 %v4596, %v4599
    %v4601 = vrot.slane %v4600, 4
    %v4603 = vshll.u32 %v170, 16
    %v4605 = vrot.slane %v4603, 5
    %v4606 = vsel %vm792, %v4601, %v4605
    %v4608 = vshrl.u32 %v171, 16
    %v4610 = vrot.slane %v4608, 4
    %v4611 = vshll.u32 %v171, 16
    %v4613 = vrot.slane %v4611, 5
    %v4614 = vor.u32 %v4610, %v4613
    %v4615 = vrot.slane %v4614, 4
    %v4617 = vshll.u32 %v172, 16
    %v4619 = vrot.slane %v4617, 5
    %v4620 = vsel %vm792, %v4615, %v4619
    %v4622 = vshrl.u32 %v173, 16
    %v4624 = vrot.slane %v4622, 4
    %v4625 = vshll.u32 %v173, 16
    %v4627 = vrot.slane %v4625, 5
    %v4628 = vor.u32 %v4624, %v4627
    %v4629 = vrot.slane %v4628, 4
    %v4631 = vshll.u32 %v174, 16
    %v4633 = vrot.slane %v4631, 5
    %v4634 = vsel %vm792, %v4629, %v4633
    %v4636 = vshrl.u32 %v175, 16
    %v4638 = vrot.slane %v4636, 4
    %v4639 = vshll.u32 %v175, 16
    %v4641 = vrot.slane %v4639, 5
    %v4642 = vor.u32 %v4638, %v4641
    %v4643 = vrot.slane %v4642, 4
    %v4645 = vshll.u32 %v176, 16
    %v4647 = vrot.slane %v4645, 5
    %v4648 = vsel %vm792, %v4643, %v4647
    %v4650 = vshrl.u32 %v177, 16
    %v4652 = vrot.slane %v4650, 4
    %v4653 = vshll.u32 %v177, 16
    %v4655 = vrot.slane %v4653, 5
    %v4656 = vor.u32 %v4652, %v4655
    %v4657 = vrot.slane %v4656, 4
    %v4659 = vshll.u32 %v178, 16
    %v4661 = vrot.slane %v4659, 5
    %v4662 = vsel %vm792, %v4657, %v4661
    %v4664 = vshrl.u32 %v179, 16
    %v4666 = vrot.slane %v4664, 4
    %v4667 = vshll.u32 %v179, 16
    %v4669 = vrot.slane %v4667, 5
    %v4670 = vor.u32 %v4666, %v4669
    %v4671 = vrot.slane %v4670, 4
    %v4673 = vshll.u32 %v180, 16
    %v4675 = vrot.slane %v4673, 5
    %v4676 = vsel %vm792, %v4671, %v4675
    %v4678 = vshrl.u32 %v181, 16
    %v4680 = vrot.slane %v4678, 4
    %v4681 = vshll.u32 %v181, 16
    %v4683 = vrot.slane %v4681, 5
    %v4684 = vor.u32 %v4680, %v4683
    %v4685 = vrot.slane %v4684, 4
    %v4687 = vshll.u32 %v182, 16
    %v4689 = vrot.slane %v4687, 5
    %v4690 = vsel %vm792, %v4685, %v4689
    %v4692 = vshrl.u32 %v183, 16
    %v4694 = vrot.slane %v4692, 4
    %v4695 = vshll.u32 %v183, 16
    %v4697 = vrot.slane %v4695, 5
    %v4698 = vor.u32 %v4694, %v4697
    %v4699 = vrot.slane %v4698, 4
    %v4701 = vshll.u32 %v184, 16
    %v4703 = vrot.slane %v4701, 5
    %v4704 = vsel %vm792, %v4699, %v4703
    %v4705 = vld [vmem:[#allocation10] sm:$0xf]
    %v4706 = vld [vmem:[#allocation10 + $0x4] sm:$0xf]
    %v4707 = vld [vmem:[#allocation10 + $0x8] sm:$0xf]
    %v4708 = vld [vmem:[#allocation10 + $0xc] sm:$0xf]
    %v4709 = vld [vmem:[#allocation10 + $0x10] sm:$0xf]
    %v4710 = vld [vmem:[#allocation10 + $0x14] sm:$0xf]
    %v4711 = vld [vmem:[#allocation10 + $0x18] sm:$0xf]
    %v4712 = vld [vmem:[#allocation10 + $0x1c] sm:$0xf]
    %v4713 = vld [vmem:[#allocation10 + $0x20] sm:$0xf]
    %v4714 = vld [vmem:[#allocation10 + $0x24] sm:$0xf]
    %v4715 = vld [vmem:[#allocation10 + $0x28] sm:$0xf]
    %v4716 = vld [vmem:[#allocation10 + $0x2c] sm:$0xf]
    %v4717 = vld [vmem:[#allocation10 + $0x30] sm:$0xf]
    %v4718 = vld [vmem:[#allocation10 + $0x34] sm:$0xf]
    %v4719 = vld [vmem:[#allocation10 + $0x38] sm:$0xf]
    %v4720 = vld [vmem:[#allocation10 + $0x3c] sm:$0xf]
    %v4721 = vld [vmem:[%s8] sm:$0x1]
    %v4723 = vlaneseq
    %v4724 = vshrl.u32 %v4723, 7
    %v4725 = vsub.s32 0, %v4724
    %v4726 = vrot.slane %v4721, %v4725
    %v4728 = vunpack.c.l.b16 %v4494
    %v4729 = vunpack.c.l.b16 %v4508
    %v4730 = vunpack.c.l.b16 %v4522
    %v4731 = vunpack.c.l.b16 %v4536
    %v4732 = vunpack.c.l.b16 %v4550
    %v4733 = vunpack.c.l.b16 %v4564
    %v4734 = vunpack.c.l.b16 %v4578
    %v4735 = vunpack.c.l.b16 %v4592
    %v4736 = vunpack.c.l.b16 %v4606
    %v4737 = vunpack.c.l.b16 %v4620
    %v4738 = vunpack.c.l.b16 %v4634
    %v4739 = vunpack.c.l.b16 %v4648
    %v4740 = vunpack.c.l.b16 %v4662
    %v4741 = vunpack.c.l.b16 %v4676
    %v4742 = vunpack.c.l.b16 %v4690
    %v4743 = vunpack.c.l.b16 %v4704
    %v4744 = vpack.c.b16 %v4729, %v4728
    %v4745 = vpack.c.b16 %v4731, %v4730
    %v4746 = vpack.c.b16 %v4733, %v4732
    %v4747 = vpack.c.b16 %v4735, %v4734
    %v4748 = vpack.c.b16 %v4737, %v4736
    %v4749 = vpack.c.b16 %v4739, %v4738
    %v4750 = vpack.c.b16 %v4741, %v4740
    %v4751 = vpack.c.b16 %v4743, %v4742
    %v4776 = vunpack.c.l.b16 %v4705
    %v4777 = vunpack.c.l.b16 %v4706
    %v4778 = vunpack.c.l.b16 %v4707
    %v4779 = vunpack.c.l.b16 %v4708
    %v4780 = vunpack.c.l.b16 %v4709
    %v4781 = vunpack.c.l.b16 %v4710
    %v4782 = vunpack.c.l.b16 %v4711
    %v4783 = vunpack.c.l.b16 %v4712
    %v4784 = vunpack.c.l.b16 %v4713
    %v4785 = vunpack.c.l.b16 %v4714
    %v4786 = vunpack.c.l.b16 %v4715
    %v4787 = vunpack.c.l.b16 %v4716
    %v4788 = vunpack.c.l.b16 %v4717
    %v4789 = vunpack.c.l.b16 %v4718
    %v4790 = vunpack.c.l.b16 %v4719
    %v4791 = vunpack.c.l.b16 %v4720
    %v4792 = vpack.c.b16 %v4777, %v4776
    %v4793 = vpack.c.b16 %v4779, %v4778
    %v4794 = vpack.c.b16 %v4781, %v4780
    %v4795 = vpack.c.b16 %v4783, %v4782
    %v4796 = vpack.c.b16 %v4785, %v4784
    %v4797 = vpack.c.b16 %v4787, %v4786
    %v4798 = vpack.c.b16 %v4789, %v4788
    %v4799 = vpack.c.b16 %v4791, %v4790
    %4808 = vmatprep.subr.bf16.mxu0 0
    %4809 = vmatpush1.bf16.msra.mxu0 %v4792
    %4810 = vmatprep.subr.bf16.mxu0 0
    %4811 = vmatpush1.bf16.msra.mxu0 %v4793
    %4812 = vmatprep.subr.bf16.mxu0 0
    %4813 = vmatpush1.bf16.msra.mxu0 %v4794
    %4814 = vmatprep.subr.bf16.mxu0 0
    %4815 = vmatpush1.bf16.msra.mxu0 %v4795
    %4816 = vmatprep.subr.bf16.mxu0 0
    %4817 = vmatpush1.bf16.msra.mxu0 %v4796
    %4818 = vmatprep.subr.bf16.mxu0 0
    %4819 = vmatpush1.bf16.msra.mxu0 %v4797
    %4820 = vmatprep.subr.bf16.mxu0 0
    %4821 = vmatpush1.bf16.msra.mxu0 %v4798
    %4822 = vmatprep.subr.bf16.mxu0 0
    %4823 = vmatpush1.bf16.msra.mxu0 %v4799
    %4824 = vmatprep.subr.bf16.mxu0 0
    %4825 = vmatpush1.bf16.msra.mxu0 0
    %4826 = vmatprep.subr.bf16.mxu0 0
    %4827 = vmatpush1.bf16.msra.mxu0 0
    %4828 = vmatprep.subr.bf16.mxu0 0
    %4829 = vmatpush1.bf16.msra.mxu0 0
    %4830 = vmatprep.subr.bf16.mxu0 0
    %4831 = vmatpush1.bf16.msra.mxu0 0
    %4832 = vmatprep.subr.bf16.mxu0 0
    %4833 = vmatpush1.bf16.msra.mxu0 0
    %4834 = vmatprep.subr.bf16.mxu0 0
    %4835 = vmatpush1.bf16.msra.mxu0 0
    %4836 = vmatprep.subr.bf16.mxu0 0
    %4837 = vmatpush1.bf16.msra.mxu0 0
    %4838 = vmatprep.subr.bf16.mxu0 0
    %4839 = vmatpush1.bf16.msra.mxu0 0
    %4840 = vmatprep.mubr.bf16.mxu0 0
    %4841 = vmatmul.mubr.bf16.gmra.mrb[0].mxu0 %v4744
    %v4842 = vpop.f32.mrb[0].mxu0
    %v4843 = vadd.f32 %v4726, %v4842
    %v4844 = vpop.f32.mrb[0].mxu0
    %v4845 = vpop.f32.mrb[0].mxu0
    %v4846 = vadd.f32 %v4726, %v4845
    %v4847 = vpop.f32.mrb[0].mxu0
    %4848 = vmatprep.mubr.bf16.mxu0 0
    %4849 = vmatmul.mubr.bf16.gmra.mrb[0].mxu0 %v4745
    %v4850 = vpop.f32.mrb[0].mxu0
    %v4851 = vadd.f32 %v4726, %v4850
    %v4852 = vpop.f32.mrb[0].mxu0
    %v4853 = vpop.f32.mrb[0].mxu0
    %v4854 = vadd.f32 %v4726, %v4853
    %v4855 = vpop.f32.mrb[0].mxu0
    %4856 = vmatprep.mubr.bf16.mxu0 0
    %4857 = vmatmul.mubr.bf16.gmra.mrb[0].mxu0 %v4746
    %v4858 = vpop.f32.mrb[0].mxu0
    %v4859 = vadd.f32 %v4726, %v4858
    %v4860 = vpop.f32.mrb[0].mxu0
    %v4861 = vpop.f32.mrb[0].mxu0
    %v4862 = vadd.f32 %v4726, %v4861
    %v4863 = vpop.f32.mrb[0].mxu0
    %4864 = vmatprep.mubr.bf16.mxu0 0
    %4865 = vmatmul.mubr.bf16.gmra.mrb[0].mxu0 %v4747
    %v4866 = vpop.f32.mrb[0].mxu0
    %v4867 = vadd.f32 %v4726, %v4866
    %v4868 = vpop.f32.mrb[0].mxu0
    %v4869 = vpop.f32.mrb[0].mxu0
    %v4870 = vadd.f32 %v4726, %v4869
    %v4871 = vpop.f32.mrb[0].mxu0
    %4872 = vmatprep.mubr.bf16.mxu0 0
    %4873 = vmatmul.mubr.bf16.gmra.mrb[0].mxu0 %v4748
    %v4874 = vpop.f32.mrb[0].mxu0
    %v4875 = vadd.f32 %v4726, %v4874
    %v4876 = vpop.f32.mrb[0].mxu0
    %v4877 = vpop.f32.mrb[0].mxu0
    %v4878 = vadd.f32 %v4726, %v4877
    %v4879 = vpop.f32.mrb[0].mxu0
    %4880 = vmatprep.mubr.bf16.mxu0 0
    %4881 = vmatmul.mubr.bf16.gmra.mrb[0].mxu0 %v4749
    %v4882 = vpop.f32.mrb[0].mxu0
    %v4883 = vadd.f32 %v4726, %v4882
    %v4884 = vpop.f32.mrb[0].mxu0
    %v4885 = vpop.f32.mrb[0].mxu0
    %v4886 = vadd.f32 %v4726, %v4885
    %v4887 = vpop.f32.mrb[0].mxu0
    %4888 = vmatprep.mubr.bf16.mxu0 0
    %4889 = vmatmul.mubr.bf16.gmra.mrb[0].mxu0 %v4750
    %v4890 = vpop.f32.mrb[0].mxu0
    %v4891 = vadd.f32 %v4726, %v4890
    %v4892 = vpop.f32.mrb[0].mxu0
    %v4893 = vpop.f32.mrb[0].mxu0
    %v4894 = vadd.f32 %v4726, %v4893
    %v4895 = vpop.f32.mrb[0].mxu0
    %4896 = vmatprep.mubr.bf16.mxu0 0
    %4897 = vmatmul.mubr.bf16.gmra.mrb[0].mxu0 %v4751
    %v4898 = vpop.f32.mrb[0].mxu0
    %v4899 = vadd.f32 %v4726, %v4898
    %v4900 = vpop.f32.mrb[0].mxu0
    %v4901 = vpop.f32.mrb[0].mxu0
    %v4902 = vadd.f32 %v4726, %v4901
    %v4903 = vpop.f32.mrb[0].mxu0
    %4904 = vdwg.mxu0
    %v4905 = vlaneseq
    %v4906 = vshrl.u32 %v4905, 7
    %v4907 = vsub.s32 0, %v4906
    %v4908 = vrot.slane %v4478, %v4907
    %4910 = vbcast.lane.b32.xlu0 %v4908, 256
    %v4911 = vpop.permute.xlu0 %4910
    %v4912 = vlaneseq
    %v4913 = vshrl.u32 %v4912, 7
    %v4914 = vsub.s32 1, %v4913
    %v4915 = vrot.slane %v4478, %v4914
    %4917 = vbcast.lane.b32.xlu0 %v4915, 256
    %v4918 = vpop.permute.xlu0 %4917
    %v4919 = vlaneseq
    %v4920 = vshrl.u32 %v4919, 7
    %v4921 = vsub.s32 2, %v4920
    %v4922 = vrot.slane %v4478, %v4921
    %4924 = vbcast.lane.b32.xlu0 %v4922, 256
    %v4925 = vpop.permute.xlu0 %4924
    %v4926 = vlaneseq
    %v4927 = vshrl.u32 %v4926, 7
    %v4928 = vsub.s32 3, %v4927
    %v4929 = vrot.slane %v4478, %v4928
    %4931 = vbcast.lane.b32.xlu0 %v4929, 256
    %v4932 = vpop.permute.xlu0 %4931
    %v4933 = vlaneseq
    %v4934 = vshrl.u32 %v4933, 7
    %v4935 = vsub.s32 4, %v4934
    %v4936 = vrot.slane %v4478, %v4935
    %4938 = vbcast.lane.b32.xlu0 %v4936, 256
    %v4939 = vpop.permute.xlu0 %4938
    %v4940 = vlaneseq
    %v4941 = vshrl.u32 %v4940, 7
    %v4942 = vsub.s32 5, %v4941
    %v4943 = vrot.slane %v4478, %v4942
    %4945 = vbcast.lane.b32.xlu0 %v4943, 256
    %v4946 = vpop.permute.xlu0 %4945
    %v4947 = vlaneseq
    %v4948 = vshrl.u32 %v4947, 7
    %v4949 = vsub.s32 6, %v4948
    %v4950 = vrot.slane %v4478, %v4949
    %4952 = vbcast.lane.b32.xlu0 %v4950, 256
    %v4953 = vpop.permute.xlu0 %4952
    %v4954 = vlaneseq
    %v4955 = vshrl.u32 %v4954, 7
    %v4956 = vsub.s32 7, %v4955
    %v4957 = vrot.slane %v4478, %v4956
    %4959 = vbcast.lane.b32.xlu0 %v4957, 256
    %v4960 = vpop.permute.xlu0 %4959
    %v4961 = vlaneseq
    %v4962 = vshrl.u32 %v4961, 7
    %v4963 = vsub.s32 0, %v4962
    %v4964 = vrot.slane %v4480, %v4963
    %4966 = vbcast.lane.b32.xlu0 %v4964, 256
    %v4967 = vpop.permute.xlu0 %4966
    %v4968 = vlaneseq
    %v4969 = vshrl.u32 %v4968, 7
    %v4970 = vsub.s32 1, %v4969
    %v4971 = vrot.slane %v4480, %v4970
    %4973 = vbcast.lane.b32.xlu0 %v4971, 256
    %v4974 = vpop.permute.xlu0 %4973
    %v4975 = vlaneseq
    %v4976 = vshrl.u32 %v4975, 7
    %v4977 = vsub.s32 2, %v4976
    %v4978 = vrot.slane %v4480, %v4977
    %4980 = vbcast.lane.b32.xlu0 %v4978, 256
    %v4981 = vpop.permute.xlu0 %4980
    %v4982 = vlaneseq
    %v4983 = vshrl.u32 %v4982, 7
    %v4984 = vsub.s32 3, %v4983
    %v4985 = vrot.slane %v4480, %v4984
    %4987 = vbcast.lane.b32.xlu0 %v4985, 256
    %v4988 = vpop.permute.xlu0 %4987
    %v4989 = vlaneseq
    %v4990 = vshrl.u32 %v4989, 7
    %v4991 = vsub.s32 4, %v4990
    %v4992 = vrot.slane %v4480, %v4991
    %4994 = vbcast.lane.b32.xlu0 %v4992, 256
    %v4995 = vpop.permute.xlu0 %4994
    %v4996 = vlaneseq
    %v4997 = vshrl.u32 %v4996, 7
    %v4998 = vsub.s32 5, %v4997
    %v4999 = vrot.slane %v4480, %v4998
    %5001 = vbcast.lane.b32.xlu0 %v4999, 256
    %v5002 = vpop.permute.xlu0 %5001
    %v5003 = vlaneseq
    %v5004 = vshrl.u32 %v5003, 7
    %v5005 = vsub.s32 6, %v5004
    %v5006 = vrot.slane %v4480, %v5005
    %5008 = vbcast.lane.b32.xlu0 %v5006, 256
    %v5009 = vpop.permute.xlu0 %5008
    %v5010 = vlaneseq
    %v5011 = vshrl.u32 %v5010, 7
    %v5012 = vsub.s32 7, %v5011
    %v5013 = vrot.slane %v4480, %v5012
    %5015 = vbcast.lane.b32.xlu0 %v5013, 256
    %v5016 = vpop.permute.xlu0 %5015
    %v5017 = vmul.f32 %v3523, %v4911
    %v5018 = vmul.f32 %v3524, %v4918
    %v5019 = vmul.f32 %v3525, %v4925
    %v5020 = vmul.f32 %v3526, %v4932
    %v5021 = vmul.f32 %v3527, %v4939
    %v5022 = vmul.f32 %v3528, %v4946
    %v5023 = vmul.f32 %v3529, %v4953
    %v5024 = vmul.f32 %v3530, %v4960
    %v5025 = vmul.f32 %v3531, %v4967
    %v5026 = vmul.f32 %v3532, %v4974
    %v5027 = vmul.f32 %v3533, %v4981
    %v5028 = vmul.f32 %v3534, %v4988
    %v5029 = vmul.f32 %v3535, %v4995
    %v5030 = vmul.f32 %v3536, %v5002
    %v5031 = vmul.f32 %v3537, %v5009
    %v5032 = vmul.f32 %v3538, %v5016
    %v5033 = vadd.f32 %v5017, %v4843
    %v5034 = vadd.f32 %v5018, %v4846
    %v5035 = vadd.f32 %v5019, %v4851
    %v5036 = vadd.f32 %v5020, %v4854
    %v5037 = vadd.f32 %v5021, %v4859
    %v5038 = vadd.f32 %v5022, %v4862
    %v5039 = vadd.f32 %v5023, %v4867
    %v5040 = vadd.f32 %v5024, %v4870
    %v5041 = vadd.f32 %v5025, %v4875
    %v5042 = vadd.f32 %v5026, %v4878
    %v5043 = vadd.f32 %v5027, %v4883
    %v5044 = vadd.f32 %v5028, %v4886
    %v5045 = vadd.f32 %v5029, %v4891
    %v5046 = vadd.f32 %v5030, %v4894
    %v5047 = vadd.f32 %v5031, %v4899
    %v5048 = vadd.f32 %v5032, %v4902
    %v5049 = vmax.f32 %v5033, 0.0
    %v5050 = vmax.f32 %v5034, 0.0
    %v5051 = vmax.f32 %v5035, 0.0
    %v5052 = vmax.f32 %v5036, 0.0
    %v5053 = vmax.f32 %v5037, 0.0
    %v5054 = vmax.f32 %v5038, 0.0
    %v5055 = vmax.f32 %v5039, 0.0
    %v5056 = vmax.f32 %v5040, 0.0
    %v5057 = vmax.f32 %v5041, 0.0
    %v5058 = vmax.f32 %v5042, 0.0
    %v5059 = vmax.f32 %v5043, 0.0
    %v5060 = vmax.f32 %v5044, 0.0
    %v5061 = vmax.f32 %v5045, 0.0
    %v5062 = vmax.f32 %v5046, 0.0
    %v5063 = vmax.f32 %v5047, 0.0
    %v5064 = vmax.f32 %v5048, 0.0
    %5065 = vst [vmem:[#allocation16] sm:$0xff] %v5049
    %5066 = vst [vmem:[#allocation16 + $0x8] sm:$0xff] %v5050
    %5067 = vst [vmem:[#allocation16 + $0x10] sm:$0xff] %v5051
    %5068 = vst [vmem:[#allocation16 + $0x18] sm:$0xff] %v5052
    %5069 = vst [vmem:[#allocation16 + $0x20] sm:$0xff] %v5053
    %5070 = vst [vmem:[#allocation16 + $0x28] sm:$0xff] %v5054
    %5071 = vst [vmem:[#allocation16 + $0x30] sm:$0xff] %v5055
    %5072 = vst [vmem:[#allocation16 + $0x38] sm:$0xff] %v5056
    %5073 = vst [vmem:[#allocation16 + $0x40] sm:$0xff] %v5057
    %5074 = vst [vmem:[#allocation16 + $0x48] sm:$0xff] %v5058
    %5075 = vst [vmem:[#allocation16 + $0x50] sm:$0xff] %v5059
    %5076 = vst [vmem:[#allocation16 + $0x58] sm:$0xff] %v5060
    %5077 = vst [vmem:[#allocation16 + $0x60] sm:$0xff] %v5061
    %5078 = vst [vmem:[#allocation16 + $0x68] sm:$0xff] %v5062
    %5079 = vst [vmem:[#allocation16 + $0x70] sm:$0xff] %v5063
    %5080 = vst [vmem:[#allocation16 + $0x78] sm:$0xff] %v5064
    // Predicated region
    $region90: #{tpu_custom_call.1} parent=1 // pred_check
      _
    $region91: #{tpu_custom_call.1} parent=1 // pred_check_branch
      %5082 = sbr.rel (0) target = $region93
    $region92: #{tpu_custom_call.1} parent=1 // pred_region
      %s5084 = ssub.s32 2048, 2048
      %5085 = vsyncadd [#allocation5], %s5084
      %s5086 = sshll.u32 [#allocation16], 4
      %s5087 = int_to_ptr.vmem [resolvable:$true] %s5086
      %5092 = dma.vmem_to_hbm [thread:$0]  %s5087, 2048, %s15, [#allocation5], 128, 128, 8
    $region93: #{tpu_custom_call.1} parent=1 // pred_fallthru
      _
    // Predicated region
    $region94: #{tpu_custom_call.1} parent=1 // pred_check
      _
    $region95: #{tpu_custom_call.1} parent=1 // pred_check_branch
      %5094 = sbr.rel (0) target = $region97
    $region96: #{tpu_custom_call.1} parent=1 // pred_region
      %5095 = dma.done [#allocation5], 2048
    $region97: #{tpu_custom_call.1} parent=1 // pred_fallthru
      _
    %5096 = vsyncpa [#allocation4], 1
    %5097 = vsyncpa [#allocation8], 1
    %5098 = vsyncpa [#allocation11], 1
    %5099 = vsyncpa [#allocation14], 1
    %5100 = vsyncpa [#allocation5], 1
    %5101 = vsyncpa [#allocation6], 1

</llo_original>
